<compile_context>
chip_gen: v7x
topology: tpu7x:2x2x1
jax: 0.10.0
libtpu: 0.0.40
codegen_flags: <defaults>
</compile_context>

<pallas_src>
import numpy as np
import jax
import jax.numpy as jnp
from jax.experimental import pallas as pl
from jax.experimental.pallas import tpu as pltpu


# ----------------------------------------------------------------------------
# small helpers (shared by the kernel and the pure-JAX reference)
# ----------------------------------------------------------------------------
def _round_up(x, m):
    return ((x + m - 1) // m) * m


def _elu(x):
    # F.elu with alpha=1.0 (clamp exp's argument so the unselected branch
    # never produces inf).
    return jnp.where(x > 0, x, jnp.exp(jnp.minimum(x, 0.0)) - 1.0)


def _sigmoid(x):
    return 1.0 / (1.0 + jnp.exp(-x))


def _layernorm(x, gamma, beta, eps=1e-5):
    mu = jnp.mean(x, axis=-1, keepdims=True)
    xc = x - mu
    var = jnp.mean(xc * xc, axis=-1, keepdims=True)
    return xc * jax.lax.rsqrt(var + eps) * gamma + beta


# ----------------------------------------------------------------------------
# fused VSN kernel (one row-tile per grid step)
# ----------------------------------------------------------------------------
def _make_vsn_kernel(D, H, NV, F_pad, offs):
    r_wvs, r_vsw2, r_vswg, r_inw1, r_inw2, r_inwg, r_proj = offs
    f32 = jnp.float32

    def kernel(feat_ref, mat_ref, vec_ref, out_ref):
        # ---- variable-selection GRN ------------------------------------
        # Per-variable projections are pre-composed into the packed fc1+skip
        # weight host-side, so this is a single K=F_pad matmul.
        hs = jnp.dot(feat_ref[...], mat_ref[r_wvs:r_wvs + F_pad, 0:H + NV],
                     preferred_element_type=f32) + vec_ref[0:1, 0:H + NV]
        a = _elu(hs[:, :H])                                  # [n, H]
        skip = hs[:, H:]                                     # [n, NV]
        a = jnp.dot(a, mat_ref[r_vsw2:r_vsw2 + H, 0:NV],
                    preferred_element_type=f32) + vec_ref[1:2, 0:NV]
        g = jnp.dot(a, mat_ref[r_vswg:r_vswg + NV, 0:2 * NV],
                    preferred_element_type=f32) + vec_ref[2:3, 0:2 * NV]
        gated = _sigmoid(g[:, :NV]) * g[:, NV:]              # GLU
        y = _layernorm(skip + gated, vec_ref[3:4, 0:NV], vec_ref[4:5, 0:NV])

        # softmax over the variable axis (exact division: 2e-5 tolerance)
        mx = jnp.max(y, axis=-1, keepdims=True)
        e = jnp.exp(y - mx)
        w = e / jnp.sum(e, axis=-1, keepdims=True)           # [n, NV]
        # store early and re-read per variable below -> w does not stay live
        out_ref[:, D:] = w.astype(out_ref.dtype)

        # ---- input GRN + weighted sum, one variable at a time ------------
        # (bounded live vreg set; projections recomputed from the feature
        #  matrix instead of staged through a VMEM scratch slab)
        in_w1 = mat_ref[r_inw1:r_inw1 + D, 0:H]
        in_b1 = vec_ref[5:6, 0:H]
        in_w2 = mat_ref[r_inw2:r_inw2 + H, 0:D]
        in_b2 = vec_ref[6:7, 0:D]
        in_wg = mat_ref[r_inwg:r_inwg + D, 0:2 * D]
        in_bg = vec_ref[7:8, 0:2 * D]
        in_gam = vec_ref[8:9, 0:D]
        in_bet = vec_ref[9:10, 0:D]

        out = None
        for v in range(NV):
            pv = mat_ref[r_proj + v * F_pad:r_proj + (v + 1) * F_pad, 0:D]
            vec_v = jnp.dot(feat_ref[...], pv, preferred_element_type=f32)
            a2 = _elu(jnp.dot(vec_v, in_w1, preferred_element_type=f32) + in_b1)
            a2 = jnp.dot(a2, in_w2, preferred_element_type=f32) + in_b2
            g2 = jnp.dot(a2, in_wg, preferred_element_type=f32) + in_bg
            gated2 = _sigmoid(g2[:, :D]) * g2[:, D:]          # GLU
            iw_v = _layernorm(vec_v + gated2, in_gam, in_bet)  # [n, D]
            contrib = out_ref[:, D + v:D + v + 1] * iw_v
            out = contrib if out is None else out + contrib
        out_ref[:, 0:D] = out.astype(out_ref.dtype)

    return kernel


# ----------------------------------------------------------------------------
# module wrapper
# ----------------------------------------------------------------------------
class VSNPallas:
    """Forward-pass (eval-mode) port of the PyTorch VSN module."""

    def __init__(self, n_var_cont, n_var_disc, dim_model, n_hidden=10,
                 dropout_r=0.1, *, key, tile_rows=256):
        self.n_cont = int(n_var_cont)
        self.disc_dims = tuple(int(c) for c in n_var_disc)
        self.n_disc = len(self.disc_dims)
        self.nv = self.n_cont + self.n_disc
        self.d = int(dim_model)
        self.h = int(n_hidden)
        # Row-tile size (multiple of 8); sweep 256-1024. Sized conservatively
        # so the per-tile resident set is tiny even on v7x's 64 MiB VMEM.
        self.tile_rows = _round_up(int(tile_rows), 8)
        del dropout_r  # eval mode: dropout == identity

        D, H, NV = self.d, self.h, self.nv
        F = self.n_cont + sum(self.disc_dims)
        self.f = F
        self.f_pad = max(_round_up(F, 8), 8)

        keys = iter(jax.random.split(key, 40))

        def uniform(k, fan_in, shape):
            b = 1.0 / float(fan_in) ** 0.5
            return jax.random.uniform(k, shape, jnp.float32, -b, b)

        # per-variable projection weights, stored (in, out)
        self.w_lin = (uniform(next(keys), 1, (self.n_cont, D))
                      if self.n_cont else None)
        self.w_emb = [uniform(next(keys), c, (c, D)) for c in self.disc_dims]

        # vs_grn = GRN(NV*D -> NV), with skip linear
        NVD = NV * D
        self.vs_grn = dict(
            w1=uniform(next(keys), NVD, (NVD, H)),
            b1=uniform(next(keys), NVD, (H,)),
            w2=uniform(next(keys), H, (H, NV)),
            b2=uniform(next(keys), H, (NV,)),
            wg1=uniform(next(keys), NV, (NV, NV)),
            bg1=uniform(next(keys), NV, (NV,)),
            wg2=uniform(next(keys), NV, (NV, NV)),
            bg2=uniform(next(keys), NV, (NV,)),
            wskip=uniform(next(keys), NVD, (NVD, NV)),
            bskip=uniform(next(keys), NVD, (NV,)),
            gamma=jnp.ones((NV,), jnp.float32),
            beta=jnp.zeros((NV,), jnp.float32),
        )
        # input_grn = GRN(D -> D), residual skip (no linear)
        self.in_grn = dict(
            w1=uniform(next(keys), D, (D, H)),
            b1=uniform(next(keys), D, (H,)),
            w2=uniform(next(keys), H, (H, D)),
            b2=uniform(next(keys), H, (D,)),
            wg1=uniform(next(keys), D, (D, D)),
            bg1=uniform(next(keys), D, (D,)),
            wg2=uniform(next(keys), D, (D, D)),
            bg2=uniform(next(keys), D, (D,)),
            gamma=jnp.ones((D,), jnp.float32),
            beta=jnp.zeros((D,), jnp.float32),
        )

        self._pack_weights()
        self._kernel = _make_vsn_kernel(D, H, NV, self.f_pad, self._offs)

    # one-time host-side packing into two kernel-friendly slabs
    def _pack_weights(self):
        D, H, NV, Fp = self.d, self.h, self.nv, self.f_pad
        vs, ig = self.vs_grn, self.in_grn

        # block-diagonal projection: feature columns -> flattened [NV*D] slab
        p_full = np.zeros((Fp, NV * D), np.float32)
        col = 0
        for i in range(self.n_cont):
            p_full[col, i * D:(i + 1) * D] = np.asarray(self.w_lin[i])
            col += 1
        for j, c in enumerate(self.disc_dims):
            v = self.n_cont + j
            p_full[col:col + c, v * D:(v + 1) * D] = np.asarray(self.w_emb[j])
            col += c

        # fuse projections into vs_grn's packed fc1+skip weight:
        #   feat @ (P_full @ [w1 | wskip])  ==  flatten(vec) @ [w1 | wskip]
        w1skip = np.concatenate([np.asarray(vs["w1"]), np.asarray(vs["wskip"])],
                                axis=1)                          # [NV*D, H+NV]
        w_vs_fused = p_full @ w1skip                             # [Fp, H+NV]

        lane_w = max(2 * D, H + NV, 2 * NV)
        r_wvs = 0
        r_vsw2 = r_wvs + Fp
        r_vswg = r_vsw2 + _round_up(H, 8)
        r_inw1 = r_vswg + _round_up(NV, 8)
        r_inw2 = r_inw1 + _round_up(D, 8)
        r_inwg = r_inw2 + _round_up(H, 8)
        r_proj = r_inwg + _round_up(D, 8)
        n_rows = r_proj + NV * Fp
        self._offs = (r_wvs, r_vsw2, r_vswg, r_inw1, r_inw2, r_inwg, r_proj)

        mat = np.zeros((n_rows, lane_w), np.float32)
        mat[r_wvs:r_wvs + Fp, :H + NV] = w_vs_fused
        mat[r_vsw2:r_vsw2 + H, :NV] = np.asarray(vs["w2"])
        mat[r_vswg:r_vswg + NV, :2 * NV] = np.concatenate(
            [np.asarray(vs["wg1"]), np.asarray(vs["wg2"])], axis=1)
        mat[r_inw1:r_inw1 + D, :H] = np.asarray(ig["w1"])
        mat[r_inw2:r_inw2 + H, :D] = np.asarray(ig["w2"])
        mat[r_inwg:r_inwg + D, :2 * D] = np.concatenate(
            [np.asarray(ig["wg1"]), np.asarray(ig["wg2"])], axis=1)
        for v in range(NV):
            mat[r_proj + v * Fp:r_proj + (v + 1) * Fp, :D] = \
                p_full[:, v * D:(v + 1) * D]

        vecs = np.zeros((16, lane_w), np.float32)
        vecs[0, :H + NV] = np.concatenate([np.asarray(vs["b1"]),
                                           np.asarray(vs["bskip"])])
        vecs[1, :NV] = np.asarray(vs["b2"])
        vecs[2, :2 * NV] = np.concatenate([np.asarray(vs["bg1"]),
                                           np.asarray(vs["bg2"])])
        vecs[3, :NV] = np.asarray(vs["gamma"])
        vecs[4, :NV] = np.asarray(vs["beta"])
        vecs[5, :H] = np.asarray(ig["b1"])
        vecs[6, :D] = np.asarray(ig["b2"])
        vecs[7, :2 * D] = np.concatenate([np.asarray(ig["bg1"]),
                                          np.asarray(ig["bg2"])])
        vecs[8, :D] = np.asarray(ig["gamma"])
        vecs[9, :D] = np.asarray(ig["beta"])

        self._mat_slab = jnp.asarray(mat)      # [n_rows, lane_w]
        self._vec_slab = jnp.asarray(vecs)     # [16, lane_w]

    def __call__(self, x_cont, x_disc):
        # x_cont: [B, S, n_cont, 1]; x_disc: list of [B, S, C_j] one-hot float
        B, S = x_cont.shape[0], x_cont.shape[1]
        N = B * S
        D, NV, Fp = self.d, self.nv, self.f_pad

        # one fused [N, F_pad] feature matrix (continuous values + one-hots)
        parts = []
        if self.n_cont:
            parts.append(x_cont[..., 0].reshape(N, self.n_cont))
        for xd in x_disc:
            parts.append(xd.reshape(N, xd.shape[-1]))
        feat = parts[0] if len(parts) == 1 else jnp.concatenate(parts, axis=-1)
        feat = feat.astype(jnp.float32)
        if Fp > self.f:
            feat = jnp.pad(feat, ((0, 0), (0, Fp - self.f)))

        # row tiling: keep the tile a multiple of 8 and pad N to a tile
        # multiple (zero rows produce finite garbage that is sliced off).
        tile = min(self.tile_rows, _round_up(N, 8))
        n_pad = _round_up(N, tile)
        if n_pad > N:
            feat = jnp.pad(feat, ((0, n_pad - N), (0, 0)))

        out = pl.pallas_call(
            self._kernel,
            grid=(n_pad // tile,),
            in_specs=[
                pl.BlockSpec((tile, Fp), lambda i: (i, 0)),
                # weight slabs: constant block index -> DMA'd once, resident
                pl.BlockSpec(self._mat_slab.shape, lambda i: (0, 0)),
                pl.BlockSpec(self._vec_slab.shape, lambda i: (0, 0)),
            ],
            out_specs=pl.BlockSpec((tile, D + NV), lambda i: (i, 0)),
            out_shape=jax.ShapeDtypeStruct((n_pad, D + NV), jnp.float32),
            compiler_params=pltpu.CompilerParams(
                dimension_semantics=("parallel",),   # megacore sharding on v7x
                vmem_limit_bytes=32 * 1024 * 1024),
        )(feat, self._mat_slab, self._vec_slab)

        x_out = out[:N, :D].reshape(B, S, D)
        vs_w = out[:N, D:].reshape(B, S, NV, 1)
        return x_out, vs_w


# ----------------------------------------------------------------------------
# pure-JAX reference (mirrors the PyTorch forward, eval mode)
# ----------------------------------------------------------------------------
def _reference(x_cont, x_disc, m):
    parts = []
    if m.n_cont:
        lin = [x_cont[:, :, i, :] * m.w_lin[i] for i in range(m.n_cont)]
        parts.append(jnp.stack(lin, axis=2))
    if m.n_disc:
        emb = [xd @ w for xd, w in zip(x_disc, m.w_emb)]
        parts.append(jnp.stack(emb, axis=2))
    vec = parts[0] if len(parts) == 1 else jnp.concatenate(parts, axis=2)

    def grn(x, p, has_skip):
        a = _elu(x @ p["w1"] + p["b1"])
        a = a @ p["w2"] + p["b2"]
        g = _sigmoid(a @ p["wg1"] + p["bg1"]) * (a @ p["wg2"] + p["bg2"])
        s = x @ p["wskip"] + p["bskip"] if has_skip else x
        return _layernorm(s + g, p["gamma"], p["beta"])

    B, S, NV, D = vec.shape
    vs = grn(vec.reshape(B, S, NV * D), m.vs_grn, True)      # [B, S, NV]
    w = jax.nn.softmax(vs, axis=-1)[..., None]               # [B, S, NV, 1]
    iw = grn(vec, m.in_grn, False)                           # [B, S, NV, D]
    x = jnp.sum(w * iw, axis=2)                              # [B, S, D]
    return x, w


if __name__ == "__main__":
    B, S = 2, 8
    dim_model = 32
    n_var_cont = 3
    n_var_disc = (4, 6)

    key = jax.random.PRNGKey(0)
    k_params, k_cont, k_d0, k_d1 = jax.random.split(key, 4)

    vsn = VSNPallas(n_var_cont, n_var_disc, dim_model, key=k_params)

    x_cont = jax.random.normal(k_cont, (B, S, n_var_cont, 1), dtype=jnp.float32)
    x_disc = [
        jax.nn.one_hot(jax.random.randint(k_d0, (B, S), 0, n_var_disc[0]),
                       n_var_disc[0], dtype=jnp.float32),
        jax.nn.one_hot(jax.random.randint(k_d1, (B, S), 0, n_var_disc[1]),
                       n_var_disc[1], dtype=jnp.float32),
    ]

    x_out, vs_w = vsn(x_cont, x_disc)
    x_out, vs_w = jax.block_until_ready((x_out, vs_w))

    ref_x, ref_w = _reference(x_cont, x_disc, vsn)
    nv = n_var_cont + len(n_var_disc)
    assert x_out.shape == (B, S, dim_model)
    assert vs_w.shape == (B, S, nv, 1)
    assert jnp.allclose(x_out, ref_x, atol=1e-4, rtol=1e-4), "x mismatch"
    assert jnp.allclose(vs_w, ref_w, atol=2e-5, rtol=1e-4), "weights mismatch"

    print("KERNEL_OK")
</pallas_src>

<mosaic_0001>
module attributes {stable_mosaic.version = 11 : i64} {
  func.func @kernel(%arg0: i32, %arg1: memref<16x16xf32, #tpu.memory_space<vmem>>, %arg2: memref<200x64xf32, #tpu.memory_space<vmem>>, %arg3: memref<16x64xf32, #tpu.memory_space<vmem>>, %arg4: memref<16x37xf32, #tpu.memory_space<vmem>>) attributes {dimension_semantics = [#tpu.dimension_semantics<parallel>], iteration_bounds = array<i64: 1>, scalar_prefetch = 0 : i64, scratch_operands = 0 : i64, tpu.core_type = #tpu.core_type<tc>, window_params = [{transform_indices = @transform_0, window_bounds = array<i64: 16, 16>}, {pipeline_mode = #tpu.pipeline_mode<synchronous>, transform_indices = @transform_1, window_bounds = array<i64: 200, 64>}, {pipeline_mode = #tpu.pipeline_mode<synchronous>, transform_indices = @transform_2, window_bounds = array<i64: 16, 64>}, {transform_indices = @transform_3, window_bounds = array<i64: 16, 37>}]} {
    %c0 = arith.constant 0 : index
    %c0_0 = arith.constant 0 : index
    %0 = vector.load %arg1[%c0, %c0_0] : memref<16x16xf32, #tpu.memory_space<vmem>>, vector<16x16xf32>
    %c0_1 = arith.constant 0 : index
    %c0_2 = arith.constant 0 : index
    %1 = vector.load %arg2[%c0_1, %c0_2] : memref<200x64xf32, #tpu.memory_space<vmem>>, vector<16x15xf32>
    %cst = arith.constant dense<0.000000e+00> : vector<16x15xf32>
    %2 = tpu.matmul %0, %1, %cst {dimension_numbers = #tpu.dot_dimension_numbers<[1], [0], [0], [1], [0, 0, 1, 1], [], []>} : vector<16x16xf32>, vector<16x15xf32>, vector<16x15xf32> -> vector<16x15xf32>
    %c0_3 = arith.constant 0 : index
    %c0_4 = arith.constant 0 : index
    %3 = vector.load %arg3[%c0_3, %c0_4] : memref<16x64xf32, #tpu.memory_space<vmem>>, vector<1x15xf32>
    %4 = vector.broadcast %3 : vector<1x15xf32> to vector<16x15xf32>
    %5 = arith.addf %2, %4 : vector<16x15xf32>
    %6 = vector.extract_strided_slice %5 {offsets = [0, 0], sizes = [16, 10], strides = [1, 1]} : vector<16x15xf32> to vector<16x10xf32>
    %cst_5 = arith.constant 0.000000e+00 : f32
    %7 = vector.broadcast %cst_5 : f32 to vector<16x10xf32>
    %8 = arith.cmpf ogt, %6, %7 : vector<16x10xf32>
    %cst_6 = arith.constant 0.000000e+00 : f32
    %9 = vector.broadcast %cst_6 : f32 to vector<16x10xf32>
    %10 = arith.minimumf %6, %9 : vector<16x10xf32>
    %11 = math.exp %10 : vector<16x10xf32>
    %cst_7 = arith.constant 1.000000e+00 : f32
    %12 = vector.broadcast %cst_7 : f32 to vector<16x10xf32>
    %13 = arith.subf %11, %12 : vector<16x10xf32>
    %14 = arith.select %8, %6, %13 : vector<16x10xi1>, vector<16x10xf32>
    %15 = vector.extract_strided_slice %5 {offsets = [0, 10], sizes = [16, 5], strides = [1, 1]} : vector<16x15xf32> to vector<16x5xf32>
    %c16 = arith.constant 16 : index
    %c0_8 = arith.constant 0 : index
    %16 = vector.load %arg2[%c16, %c0_8] : memref<200x64xf32, #tpu.memory_space<vmem>>, vector<10x5xf32>
    %cst_9 = arith.constant dense<0.000000e+00> : vector<16x5xf32>
    %17 = tpu.matmul %14, %16, %cst_9 {dimension_numbers = #tpu.dot_dimension_numbers<[1], [0], [0], [1], [0, 0, 1, 1], [], []>} : vector<16x10xf32>, vector<10x5xf32>, vector<16x5xf32> -> vector<16x5xf32>
    %c1 = arith.constant 1 : index
    %c0_10 = arith.constant 0 : index
    %18 = vector.load %arg3[%c1, %c0_10] : memref<16x64xf32, #tpu.memory_space<vmem>>, vector<1x5xf32>
    %19 = vector.broadcast %18 : vector<1x5xf32> to vector<16x5xf32>
    %20 = arith.addf %17, %19 : vector<16x5xf32>
    %c32 = arith.constant 32 : index
    %c0_11 = arith.constant 0 : index
    %21 = vector.load %arg2[%c32, %c0_11] : memref<200x64xf32, #tpu.memory_space<vmem>>, vector<5x10xf32>
    %cst_12 = arith.constant dense<0.000000e+00> : vector<16x10xf32>
    %22 = tpu.matmul %20, %21, %cst_12 {dimension_numbers = #tpu.dot_dimension_numbers<[1], [0], [0], [1], [0, 0, 1, 1], [], []>} : vector<16x5xf32>, vector<5x10xf32>, vector<16x10xf32> -> vector<16x10xf32>
    %c2 = arith.constant 2 : index
    %c0_13 = arith.constant 0 : index
    %23 = vector.load %arg3[%c2, %c0_13] : memref<16x64xf32, #tpu.memory_space<vmem>>, vector<1x10xf32>
    %24 = vector.broadcast %23 : vector<1x10xf32> to vector<16x10xf32>
    %25 = arith.addf %22, %24 : vector<16x10xf32>
    %26 = vector.extract_strided_slice %25 {offsets = [0, 0], sizes = [16, 5], strides = [1, 1]} : vector<16x10xf32> to vector<16x5xf32>
    %cst_14 = arith.constant 0.000000e+00 : f32
    %27 = vector.broadcast %cst_14 : f32 to vector<16x5xf32>
    %28 = arith.subf %27, %26 : vector<16x5xf32>
    %29 = math.exp %28 : vector<16x5xf32>
    %cst_15 = arith.constant 1.000000e+00 : f32
    %30 = vector.broadcast %cst_15 : f32 to vector<16x5xf32>
    %31 = arith.addf %30, %29 : vector<16x5xf32>
    %cst_16 = arith.constant 1.000000e+00 : f32
    %32 = vector.broadcast %cst_16 : f32 to vector<16x5xf32>
    %33 = arith.divf %32, %31 : vector<16x5xf32>
    %34 = vector.extract_strided_slice %25 {offsets = [0, 5], sizes = [16, 5], strides = [1, 1]} : vector<16x10xf32> to vector<16x5xf32>
    %35 = arith.mulf %33, %34 : vector<16x5xf32>
    %36 = arith.addf %15, %35 : vector<16x5xf32>
    %c3 = arith.constant 3 : index
    %c0_17 = arith.constant 0 : index
    %37 = vector.load %arg3[%c3, %c0_17] : memref<16x64xf32, #tpu.memory_space<vmem>>, vector<1x5xf32>
    %c4 = arith.constant 4 : index
    %c0_18 = arith.constant 0 : index
    %38 = vector.load %arg3[%c4, %c0_18] : memref<16x64xf32, #tpu.memory_space<vmem>>, vector<1x5xf32>
    %cst_19 = arith.constant dense<0.000000e+00> : vector<16xf32>
    %39 = vector.multi_reduction <add>, %36, %cst_19 [1] : vector<16x5xf32> to vector<16xf32>
    %40 = vector.shape_cast %39 : vector<16xf32> to vector<16x1xf32>
    %cst_20 = arith.constant 5.000000e+00 : f32
    %41 = vector.broadcast %cst_20 : f32 to vector<16x1xf32>
    %42 = arith.divf %40, %41 : vector<16x1xf32>
    %43 = vector.broadcast %42 : vector<16x1xf32> to vector<16x5xf32>
    %44 = arith.subf %36, %43 : vector<16x5xf32>
    %45 = arith.mulf %44, %44 : vector<16x5xf32>
    %cst_21 = arith.constant dense<0.000000e+00> : vector<16xf32>
    %46 = vector.multi_reduction <add>, %45, %cst_21 [1] : vector<16x5xf32> to vector<16xf32>
    %47 = vector.shape_cast %46 : vector<16xf32> to vector<16x1xf32>
    %cst_22 = arith.constant 5.000000e+00 : f32
    %48 = vector.broadcast %cst_22 : f32 to vector<16x1xf32>
    %49 = arith.divf %47, %48 : vector<16x1xf32>
    %cst_23 = arith.constant 9.99999974E-6 : f32
    %50 = vector.broadcast %cst_23 : f32 to vector<16x1xf32>
    %51 = arith.addf %49, %50 : vector<16x1xf32>
    %52 = math.rsqrt %51 : vector<16x1xf32>
    %53 = vector.broadcast %52 : vector<16x1xf32> to vector<16x5xf32>
    %54 = arith.mulf %44, %53 : vector<16x5xf32>
    %55 = vector.broadcast %37 : vector<1x5xf32> to vector<16x5xf32>
    %56 = arith.mulf %54, %55 : vector<16x5xf32>
    %57 = vector.broadcast %38 : vector<1x5xf32> to vector<16x5xf32>
    %58 = arith.addf %56, %57 : vector<16x5xf32>
    %cst_24 = arith.constant dense<0xFF800000> : vector<16xf32>
    %59 = vector.multi_reduction <maximumf>, %58, %cst_24 [1] : vector<16x5xf32> to vector<16xf32>
    %60 = vector.shape_cast %59 : vector<16xf32> to vector<16x1xf32>
    %61 = vector.broadcast %60 : vector<16x1xf32> to vector<16x5xf32>
    %62 = arith.subf %58, %61 : vector<16x5xf32>
    %63 = math.exp %62 : vector<16x5xf32>
    %cst_25 = arith.constant dense<0.000000e+00> : vector<16xf32>
    %64 = vector.multi_reduction <add>, %63, %cst_25 [1] : vector<16x5xf32> to vector<16xf32>
    %65 = vector.shape_cast %64 : vector<16xf32> to vector<16x1xf32>
    %66 = vector.broadcast %65 : vector<16x1xf32> to vector<16x5xf32>
    %67 = arith.divf %63, %66 : vector<16x5xf32>
    %c0_26 = arith.constant 0 : index
    %c32_27 = arith.constant 32 : index
    %68 = vector.load %arg4[%c0_26, %c32_27] : memref<16x37xf32, #tpu.memory_space<vmem>>, vector<16x5xf32>
    tpu.vector_store %arg4[%c0_26, %c32_27], %67 {strides = array<i32>} : memref<16x37xf32, #tpu.memory_space<vmem>>, vector<16x5xf32>,
    %c40 = arith.constant 40 : index
    %c0_28 = arith.constant 0 : index
    %69 = vector.load %arg2[%c40, %c0_28] : memref<200x64xf32, #tpu.memory_space<vmem>>, vector<32x10xf32>
    %c5 = arith.constant 5 : index
    %c0_29 = arith.constant 0 : index
    %70 = vector.load %arg3[%c5, %c0_29] : memref<16x64xf32, #tpu.memory_space<vmem>>, vector<1x10xf32>
    %c72 = arith.constant 72 : index
    %c0_30 = arith.constant 0 : index
    %71 = vector.load %arg2[%c72, %c0_30] : memref<200x64xf32, #tpu.memory_space<vmem>>, vector<10x32xf32>
    %c6 = arith.constant 6 : index
    %c0_31 = arith.constant 0 : index
    %72 = vector.load %arg3[%c6, %c0_31] : memref<16x64xf32, #tpu.memory_space<vmem>>, vector<1x32xf32>
    %c88 = arith.constant 88 : index
    %c0_32 = arith.constant 0 : index
    %73 = vector.load %arg2[%c88, %c0_32] : memref<200x64xf32, #tpu.memory_space<vmem>>, vector<32x64xf32>
    %c7 = arith.constant 7 : index
    %c0_33 = arith.constant 0 : index
    %74 = vector.load %arg3[%c7, %c0_33] : memref<16x64xf32, #tpu.memory_space<vmem>>, vector<1x64xf32>
    %c8 = arith.constant 8 : index
    %c0_34 = arith.constant 0 : index
    %75 = vector.load %arg3[%c8, %c0_34] : memref<16x64xf32, #tpu.memory_space<vmem>>, vector<1x32xf32>
    %c9 = arith.constant 9 : index
    %c0_35 = arith.constant 0 : index
    %76 = vector.load %arg3[%c9, %c0_35] : memref<16x64xf32, #tpu.memory_space<vmem>>, vector<1x32xf32>
    %c120 = arith.constant 120 : index
    %c0_36 = arith.constant 0 : index
    %77 = vector.load %arg2[%c120, %c0_36] : memref<200x64xf32, #tpu.memory_space<vmem>>, vector<16x32xf32>
    %c0_37 = arith.constant 0 : index
    %c0_38 = arith.constant 0 : index
    %78 = vector.load %arg1[%c0_37, %c0_38] : memref<16x16xf32, #tpu.memory_space<vmem>>, vector<16x16xf32>
    %cst_39 = arith.constant dense<0.000000e+00> : vector<16x32xf32>
    %79 = tpu.matmul %78, %77, %cst_39 {dimension_numbers = #tpu.dot_dimension_numbers<[1], [0], [0], [1], [0, 0, 1, 1], [], []>} : vector<16x16xf32>, vector<16x32xf32>, vector<16x32xf32> -> vector<16x32xf32>
    %cst_40 = arith.constant dense<0.000000e+00> : vector<16x10xf32>
    %80 = tpu.matmul %79, %69, %cst_40 {dimension_numbers = #tpu.dot_dimension_numbers<[1], [0], [0], [1], [0, 0, 1, 1], [], []>} : vector<16x32xf32>, vector<32x10xf32>, vector<16x10xf32> -> vector<16x10xf32>
    %81 = vector.broadcast %70 : vector<1x10xf32> to vector<16x10xf32>
    %82 = arith.addf %80, %81 : vector<16x10xf32>
    %cst_41 = arith.constant 0.000000e+00 : f32
    %83 = vector.broadcast %cst_41 : f32 to vector<16x10xf32>
    %84 = arith.cmpf ogt, %82, %83 : vector<16x10xf32>
    %cst_42 = arith.constant 0.000000e+00 : f32
    %85 = vector.broadcast %cst_42 : f32 to vector<16x10xf32>
    %86 = arith.minimumf %82, %85 : vector<16x10xf32>
    %87 = math.exp %86 : vector<16x10xf32>
    %cst_43 = arith.constant 1.000000e+00 : f32
    %88 = vector.broadcast %cst_43 : f32 to vector<16x10xf32>
    %89 = arith.subf %87, %88 : vector<16x10xf32>
    %90 = arith.select %84, %82, %89 : vector<16x10xi1>, vector<16x10xf32>
    %cst_44 = arith.constant dense<0.000000e+00> : vector<16x32xf32>
    %91 = tpu.matmul %90, %71, %cst_44 {dimension_numbers = #tpu.dot_dimension_numbers<[1], [0], [0], [1], [0, 0, 1, 1], [], []>} : vector<16x10xf32>, vector<10x32xf32>, vector<16x32xf32> -> vector<16x32xf32>
    %92 = vector.broadcast %72 : vector<1x32xf32> to vector<16x32xf32>
    %93 = arith.addf %91, %92 : vector<16x32xf32>
    %cst_45 = arith.constant dense<0.000000e+00> : vector<16x64xf32>
    %94 = tpu.matmul %93, %73, %cst_45 {dimension_numbers = #tpu.dot_dimension_numbers<[1], [0], [0], [1], [0, 0, 1, 1], [], []>} : vector<16x32xf32>, vector<32x64xf32>, vector<16x64xf32> -> vector<16x64xf32>
    %95 = vector.broadcast %74 : vector<1x64xf32> to vector<16x64xf32>
    %96 = arith.addf %94, %95 : vector<16x64xf32>
    %97 = vector.extract_strided_slice %96 {offsets = [0, 0], sizes = [16, 32], strides = [1, 1]} : vector<16x64xf32> to vector<16x32xf32>
    %cst_46 = arith.constant 0.000000e+00 : f32
    %98 = vector.broadcast %cst_46 : f32 to vector<16x32xf32>
    %99 = arith.subf %98, %97 : vector<16x32xf32>
    %100 = math.exp %99 : vector<16x32xf32>
    %cst_47 = arith.constant 1.000000e+00 : f32
    %101 = vector.broadcast %cst_47 : f32 to vector<16x32xf32>
    %102 = arith.addf %101, %100 : vector<16x32xf32>
    %cst_48 = arith.constant 1.000000e+00 : f32
    %103 = vector.broadcast %cst_48 : f32 to vector<16x32xf32>
    %104 = arith.divf %103, %102 : vector<16x32xf32>
    %105 = vector.extract_strided_slice %96 {offsets = [0, 32], sizes = [16, 32], strides = [1, 1]} : vector<16x64xf32> to vector<16x32xf32>
    %106 = arith.mulf %104, %105 : vector<16x32xf32>
    %107 = arith.addf %79, %106 : vector<16x32xf32>
    %cst_49 = arith.constant dense<0.000000e+00> : vector<16xf32>
    %108 = vector.multi_reduction <add>, %107, %cst_49 [1] : vector<16x32xf32> to vector<16xf32>
    %109 = vector.shape_cast %108 : vector<16xf32> to vector<16x1xf32>
    %cst_50 = arith.constant 3.200000e+01 : f32
    %110 = vector.broadcast %cst_50 : f32 to vector<16x1xf32>
    %111 = arith.divf %109, %110 : vector<16x1xf32>
    %112 = vector.broadcast %111 : vector<16x1xf32> to vector<16x32xf32>
    %113 = arith.subf %107, %112 : vector<16x32xf32>
    %114 = arith.mulf %113, %113 : vector<16x32xf32>
    %cst_51 = arith.constant dense<0.000000e+00> : vector<16xf32>
    %115 = vector.multi_reduction <add>, %114, %cst_51 [1] : vector<16x32xf32> to vector<16xf32>
    %116 = vector.shape_cast %115 : vector<16xf32> to vector<16x1xf32>
    %cst_52 = arith.constant 3.200000e+01 : f32
    %117 = vector.broadcast %cst_52 : f32 to vector<16x1xf32>
    %118 = arith.divf %116, %117 : vector<16x1xf32>
    %cst_53 = arith.constant 9.99999974E-6 : f32
    %119 = vector.broadcast %cst_53 : f32 to vector<16x1xf32>
    %120 = arith.addf %118, %119 : vector<16x1xf32>
    %121 = math.rsqrt %120 : vector<16x1xf32>
    %122 = vector.broadcast %121 : vector<16x1xf32> to vector<16x32xf32>
    %123 = arith.mulf %113, %122 : vector<16x32xf32>
    %124 = vector.broadcast %75 : vector<1x32xf32> to vector<16x32xf32>
    %125 = arith.mulf %123, %124 : vector<16x32xf32>
    %126 = vector.broadcast %76 : vector<1x32xf32> to vector<16x32xf32>
    %127 = arith.addf %125, %126 : vector<16x32xf32>
    %c0_54 = arith.constant 0 : index
    %c32_55 = arith.constant 32 : index
    %128 = vector.load %arg4[%c0_54, %c32_55] : memref<16x37xf32, #tpu.memory_space<vmem>>, vector<16x1xf32>
    %129 = vector.broadcast %128 : vector<16x1xf32> to vector<16x32xf32>
    %130 = arith.mulf %129, %127 : vector<16x32xf32>
    %c136 = arith.constant 136 : index
    %c0_56 = arith.constant 0 : index
    %131 = vector.load %arg2[%c136, %c0_56] : memref<200x64xf32, #tpu.memory_space<vmem>>, vector<16x32xf32>
    %c0_57 = arith.constant 0 : index
    %c0_58 = arith.constant 0 : index
    %132 = vector.load %arg1[%c0_57, %c0_58] : memref<16x16xf32, #tpu.memory_space<vmem>>, vector<16x16xf32>
    %cst_59 = arith.constant dense<0.000000e+00> : vector<16x32xf32>
    %133 = tpu.matmul %132, %131, %cst_59 {dimension_numbers = #tpu.dot_dimension_numbers<[1], [0], [0], [1], [0, 0, 1, 1], [], []>} : vector<16x16xf32>, vector<16x32xf32>, vector<16x32xf32> -> vector<16x32xf32>
    %cst_60 = arith.constant dense<0.000000e+00> : vector<16x10xf32>
    %134 = tpu.matmul %133, %69, %cst_60 {dimension_numbers = #tpu.dot_dimension_numbers<[1], [0], [0], [1], [0, 0, 1, 1], [], []>} : vector<16x32xf32>, vector<32x10xf32>, vector<16x10xf32> -> vector<16x10xf32>
    %135 = vector.broadcast %70 : vector<1x10xf32> to vector<16x10xf32>
    %136 = arith.addf %134, %135 : vector<16x10xf32>
    %cst_61 = arith.constant 0.000000e+00 : f32
    %137 = vector.broadcast %cst_61 : f32 to vector<16x10xf32>
    %138 = arith.cmpf ogt, %136, %137 : vector<16x10xf32>
    %cst_62 = arith.constant 0.000000e+00 : f32
    %139 = vector.broadcast %cst_62 : f32 to vector<16x10xf32>
    %140 = arith.minimumf %136, %139 : vector<16x10xf32>
    %141 = math.exp %140 : vector<16x10xf32>
    %cst_63 = arith.constant 1.000000e+00 : f32
    %142 = vector.broadcast %cst_63 : f32 to vector<16x10xf32>
    %143 = arith.subf %141, %142 : vector<16x10xf32>
    %144 = arith.select %138, %136, %143 : vector<16x10xi1>, vector<16x10xf32>
    %cst_64 = arith.constant dense<0.000000e+00> : vector<16x32xf32>
    %145 = tpu.matmul %144, %71, %cst_64 {dimension_numbers = #tpu.dot_dimension_numbers<[1], [0], [0], [1], [0, 0, 1, 1], [], []>} : vector<16x10xf32>, vector<10x32xf32>, vector<16x32xf32> -> vector<16x32xf32>
    %146 = vector.broadcast %72 : vector<1x32xf32> to vector<16x32xf32>
    %147 = arith.addf %145, %146 : vector<16x32xf32>
    %cst_65 = arith.constant dense<0.000000e+00> : vector<16x64xf32>
    %148 = tpu.matmul %147, %73, %cst_65 {dimension_numbers = #tpu.dot_dimension_numbers<[1], [0], [0], [1], [0, 0, 1, 1], [], []>} : vector<16x32xf32>, vector<32x64xf32>, vector<16x64xf32> -> vector<16x64xf32>
    %149 = vector.broadcast %74 : vector<1x64xf32> to vector<16x64xf32>
    %150 = arith.addf %148, %149 : vector<16x64xf32>
    %151 = vector.extract_strided_slice %150 {offsets = [0, 0], sizes = [16, 32], strides = [1, 1]} : vector<16x64xf32> to vector<16x32xf32>
    %cst_66 = arith.constant 0.000000e+00 : f32
    %152 = vector.broadcast %cst_66 : f32 to vector<16x32xf32>
    %153 = arith.subf %152, %151 : vector<16x32xf32>
    %154 = math.exp %153 : vector<16x32xf32>
    %cst_67 = arith.constant 1.000000e+00 : f32
    %155 = vector.broadcast %cst_67 : f32 to vector<16x32xf32>
    %156 = arith.addf %155, %154 : vector<16x32xf32>
    %cst_68 = arith.constant 1.000000e+00 : f32
    %157 = vector.broadcast %cst_68 : f32 to vector<16x32xf32>
    %158 = arith.divf %157, %156 : vector<16x32xf32>
    %159 = vector.extract_strided_slice %150 {offsets = [0, 32], sizes = [16, 32], strides = [1, 1]} : vector<16x64xf32> to vector<16x32xf32>
    %160 = arith.mulf %158, %159 : vector<16x32xf32>
    %161 = arith.addf %133, %160 : vector<16x32xf32>
    %cst_69 = arith.constant dense<0.000000e+00> : vector<16xf32>
    %162 = vector.multi_reduction <add>, %161, %cst_69 [1] : vector<16x32xf32> to vector<16xf32>
    %163 = vector.shape_cast %162 : vector<16xf32> to vector<16x1xf32>
    %cst_70 = arith.constant 3.200000e+01 : f32
    %164 = vector.broadcast %cst_70 : f32 to vector<16x1xf32>
    %165 = arith.divf %163, %164 : vector<16x1xf32>
    %166 = vector.broadcast %165 : vector<16x1xf32> to vector<16x32xf32>
    %167 = arith.subf %161, %166 : vector<16x32xf32>
    %168 = arith.mulf %167, %167 : vector<16x32xf32>
    %cst_71 = arith.constant dense<0.000000e+00> : vector<16xf32>
    %169 = vector.multi_reduction <add>, %168, %cst_71 [1] : vector<16x32xf32> to vector<16xf32>
    %170 = vector.shape_cast %169 : vector<16xf32> to vector<16x1xf32>
    %cst_72 = arith.constant 3.200000e+01 : f32
    %171 = vector.broadcast %cst_72 : f32 to vector<16x1xf32>
    %172 = arith.divf %170, %171 : vector<16x1xf32>
    %cst_73 = arith.constant 9.99999974E-6 : f32
    %173 = vector.broadcast %cst_73 : f32 to vector<16x1xf32>
    %174 = arith.addf %172, %173 : vector<16x1xf32>
    %175 = math.rsqrt %174 : vector<16x1xf32>
    %176 = vector.broadcast %175 : vector<16x1xf32> to vector<16x32xf32>
    %177 = arith.mulf %167, %176 : vector<16x32xf32>
    %178 = vector.broadcast %75 : vector<1x32xf32> to vector<16x32xf32>
    %179 = arith.mulf %177, %178 : vector<16x32xf32>
    %180 = vector.broadcast %76 : vector<1x32xf32> to vector<16x32xf32>
    %181 = arith.addf %179, %180 : vector<16x32xf32>
    %c0_74 = arith.constant 0 : index
    %c33 = arith.constant 33 : index
    %182 = vector.load %arg4[%c0_74, %c33] : memref<16x37xf32, #tpu.memory_space<vmem>>, vector<16x1xf32>
    %183 = vector.broadcast %182 : vector<16x1xf32> to vector<16x32xf32>
    %184 = arith.mulf %183, %181 : vector<16x32xf32>
    %185 = arith.addf %130, %184 : vector<16x32xf32>
    %c152 = arith.constant 152 : index
    %c0_75 = arith.constant 0 : index
    %186 = vector.load %arg2[%c152, %c0_75] : memref<200x64xf32, #tpu.memory_space<vmem>>, vector<16x32xf32>
    %c0_76 = arith.constant 0 : index
    %c0_77 = arith.constant 0 : index
    %187 = vector.load %arg1[%c0_76, %c0_77] : memref<16x16xf32, #tpu.memory_space<vmem>>, vector<16x16xf32>
    %cst_78 = arith.constant dense<0.000000e+00> : vector<16x32xf32>
    %188 = tpu.matmul %187, %186, %cst_78 {dimension_numbers = #tpu.dot_dimension_numbers<[1], [0], [0], [1], [0, 0, 1, 1], [], []>} : vector<16x16xf32>, vector<16x32xf32>, vector<16x32xf32> -> vector<16x32xf32>
    %cst_79 = arith.constant dense<0.000000e+00> : vector<16x10xf32>
    %189 = tpu.matmul %188, %69, %cst_79 {dimension_numbers = #tpu.dot_dimension_numbers<[1], [0], [0], [1], [0, 0, 1, 1], [], []>} : vector<16x32xf32>, vector<32x10xf32>, vector<16x10xf32> -> vector<16x10xf32>
    %190 = vector.broadcast %70 : vector<1x10xf32> to vector<16x10xf32>
    %191 = arith.addf %189, %190 : vector<16x10xf32>
    %cst_80 = arith.constant 0.000000e+00 : f32
    %192 = vector.broadcast %cst_80 : f32 to vector<16x10xf32>
    %193 = arith.cmpf ogt, %191, %192 : vector<16x10xf32>
    %cst_81 = arith.constant 0.000000e+00 : f32
    %194 = vector.broadcast %cst_81 : f32 to vector<16x10xf32>
    %195 = arith.minimumf %191, %194 : vector<16x10xf32>
    %196 = math.exp %195 : vector<16x10xf32>
    %cst_82 = arith.constant 1.000000e+00 : f32
    %197 = vector.broadcast %cst_82 : f32 to vector<16x10xf32>
    %198 = arith.subf %196, %197 : vector<16x10xf32>
    %199 = arith.select %193, %191, %198 : vector<16x10xi1>, vector<16x10xf32>
    %cst_83 = arith.constant dense<0.000000e+00> : vector<16x32xf32>
    %200 = tpu.matmul %199, %71, %cst_83 {dimension_numbers = #tpu.dot_dimension_numbers<[1], [0], [0], [1], [0, 0, 1, 1], [], []>} : vector<16x10xf32>, vector<10x32xf32>, vector<16x32xf32> -> vector<16x32xf32>
    %201 = vector.broadcast %72 : vector<1x32xf32> to vector<16x32xf32>
    %202 = arith.addf %200, %201 : vector<16x32xf32>
    %cst_84 = arith.constant dense<0.000000e+00> : vector<16x64xf32>
    %203 = tpu.matmul %202, %73, %cst_84 {dimension_numbers = #tpu.dot_dimension_numbers<[1], [0], [0], [1], [0, 0, 1, 1], [], []>} : vector<16x32xf32>, vector<32x64xf32>, vector<16x64xf32> -> vector<16x64xf32>
    %204 = vector.broadcast %74 : vector<1x64xf32> to vector<16x64xf32>
    %205 = arith.addf %203, %204 : vector<16x64xf32>
    %206 = vector.extract_strided_slice %205 {offsets = [0, 0], sizes = [16, 32], strides = [1, 1]} : vector<16x64xf32> to vector<16x32xf32>
    %cst_85 = arith.constant 0.000000e+00 : f32
    %207 = vector.broadcast %cst_85 : f32 to vector<16x32xf32>
    %208 = arith.subf %207, %206 : vector<16x32xf32>
    %209 = math.exp %208 : vector<16x32xf32>
    %cst_86 = arith.constant 1.000000e+00 : f32
    %210 = vector.broadcast %cst_86 : f32 to vector<16x32xf32>
    %211 = arith.addf %210, %209 : vector<16x32xf32>
    %cst_87 = arith.constant 1.000000e+00 : f32
    %212 = vector.broadcast %cst_87 : f32 to vector<16x32xf32>
    %213 = arith.divf %212, %211 : vector<16x32xf32>
    %214 = vector.extract_strided_slice %205 {offsets = [0, 32], sizes = [16, 32], strides = [1, 1]} : vector<16x64xf32> to vector<16x32xf32>
    %215 = arith.mulf %213, %214 : vector<16x32xf32>
    %216 = arith.addf %188, %215 : vector<16x32xf32>
    %cst_88 = arith.constant dense<0.000000e+00> : vector<16xf32>
    %217 = vector.multi_reduction <add>, %216, %cst_88 [1] : vector<16x32xf32> to vector<16xf32>
    %218 = vector.shape_cast %217 : vector<16xf32> to vector<16x1xf32>
    %cst_89 = arith.constant 3.200000e+01 : f32
    %219 = vector.broadcast %cst_89 : f32 to vector<16x1xf32>
    %220 = arith.divf %218, %219 : vector<16x1xf32>
    %221 = vector.broadcast %220 : vector<16x1xf32> to vector<16x32xf32>
    %222 = arith.subf %216, %221 : vector<16x32xf32>
    %223 = arith.mulf %222, %222 : vector<16x32xf32>
    %cst_90 = arith.constant dense<0.000000e+00> : vector<16xf32>
    %224 = vector.multi_reduction <add>, %223, %cst_90 [1] : vector<16x32xf32> to vector<16xf32>
    %225 = vector.shape_cast %224 : vector<16xf32> to vector<16x1xf32>
    %cst_91 = arith.constant 3.200000e+01 : f32
    %226 = vector.broadcast %cst_91 : f32 to vector<16x1xf32>
    %227 = arith.divf %225, %226 : vector<16x1xf32>
    %cst_92 = arith.constant 9.99999974E-6 : f32
    %228 = vector.broadcast %cst_92 : f32 to vector<16x1xf32>
    %229 = arith.addf %227, %228 : vector<16x1xf32>
    %230 = math.rsqrt %229 : vector<16x1xf32>
    %231 = vector.broadcast %230 : vector<16x1xf32> to vector<16x32xf32>
    %232 = arith.mulf %222, %231 : vector<16x32xf32>
    %233 = vector.broadcast %75 : vector<1x32xf32> to vector<16x32xf32>
    %234 = arith.mulf %232, %233 : vector<16x32xf32>
    %235 = vector.broadcast %76 : vector<1x32xf32> to vector<16x32xf32>
    %236 = arith.addf %234, %235 : vector<16x32xf32>
    %c0_93 = arith.constant 0 : index
    %c34 = arith.constant 34 : index
    %237 = vector.load %arg4[%c0_93, %c34] : memref<16x37xf32, #tpu.memory_space<vmem>>, vector<16x1xf32>
    %238 = vector.broadcast %237 : vector<16x1xf32> to vector<16x32xf32>
    %239 = arith.mulf %238, %236 : vector<16x32xf32>
    %240 = arith.addf %185, %239 : vector<16x32xf32>
    %c168 = arith.constant 168 : index
    %c0_94 = arith.constant 0 : index
    %241 = vector.load %arg2[%c168, %c0_94] : memref<200x64xf32, #tpu.memory_space<vmem>>, vector<16x32xf32>
    %c0_95 = arith.constant 0 : index
    %c0_96 = arith.constant 0 : index
    %242 = vector.load %arg1[%c0_95, %c0_96] : memref<16x16xf32, #tpu.memory_space<vmem>>, vector<16x16xf32>
    %cst_97 = arith.constant dense<0.000000e+00> : vector<16x32xf32>
    %243 = tpu.matmul %242, %241, %cst_97 {dimension_numbers = #tpu.dot_dimension_numbers<[1], [0], [0], [1], [0, 0, 1, 1], [], []>} : vector<16x16xf32>, vector<16x32xf32>, vector<16x32xf32> -> vector<16x32xf32>
    %cst_98 = arith.constant dense<0.000000e+00> : vector<16x10xf32>
    %244 = tpu.matmul %243, %69, %cst_98 {dimension_numbers = #tpu.dot_dimension_numbers<[1], [0], [0], [1], [0, 0, 1, 1], [], []>} : vector<16x32xf32>, vector<32x10xf32>, vector<16x10xf32> -> vector<16x10xf32>
    %245 = vector.broadcast %70 : vector<1x10xf32> to vector<16x10xf32>
    %246 = arith.addf %244, %245 : vector<16x10xf32>
    %cst_99 = arith.constant 0.000000e+00 : f32
    %247 = vector.broadcast %cst_99 : f32 to vector<16x10xf32>
    %248 = arith.cmpf ogt, %246, %247 : vector<16x10xf32>
    %cst_100 = arith.constant 0.000000e+00 : f32
    %249 = vector.broadcast %cst_100 : f32 to vector<16x10xf32>
    %250 = arith.minimumf %246, %249 : vector<16x10xf32>
    %251 = math.exp %250 : vector<16x10xf32>
    %cst_101 = arith.constant 1.000000e+00 : f32
    %252 = vector.broadcast %cst_101 : f32 to vector<16x10xf32>
    %253 = arith.subf %251, %252 : vector<16x10xf32>
    %254 = arith.select %248, %246, %253 : vector<16x10xi1>, vector<16x10xf32>
    %cst_102 = arith.constant dense<0.000000e+00> : vector<16x32xf32>
    %255 = tpu.matmul %254, %71, %cst_102 {dimension_numbers = #tpu.dot_dimension_numbers<[1], [0], [0], [1], [0, 0, 1, 1], [], []>} : vector<16x10xf32>, vector<10x32xf32>, vector<16x32xf32> -> vector<16x32xf32>
    %256 = vector.broadcast %72 : vector<1x32xf32> to vector<16x32xf32>
    %257 = arith.addf %255, %256 : vector<16x32xf32>
    %cst_103 = arith.constant dense<0.000000e+00> : vector<16x64xf32>
    %258 = tpu.matmul %257, %73, %cst_103 {dimension_numbers = #tpu.dot_dimension_numbers<[1], [0], [0], [1], [0, 0, 1, 1], [], []>} : vector<16x32xf32>, vector<32x64xf32>, vector<16x64xf32> -> vector<16x64xf32>
    %259 = vector.broadcast %74 : vector<1x64xf32> to vector<16x64xf32>
    %260 = arith.addf %258, %259 : vector<16x64xf32>
    %261 = vector.extract_strided_slice %260 {offsets = [0, 0], sizes = [16, 32], strides = [1, 1]} : vector<16x64xf32> to vector<16x32xf32>
    %cst_104 = arith.constant 0.000000e+00 : f32
    %262 = vector.broadcast %cst_104 : f32 to vector<16x32xf32>
    %263 = arith.subf %262, %261 : vector<16x32xf32>
    %264 = math.exp %263 : vector<16x32xf32>
    %cst_105 = arith.constant 1.000000e+00 : f32
    %265 = vector.broadcast %cst_105 : f32 to vector<16x32xf32>
    %266 = arith.addf %265, %264 : vector<16x32xf32>
    %cst_106 = arith.constant 1.000000e+00 : f32
    %267 = vector.broadcast %cst_106 : f32 to vector<16x32xf32>
    %268 = arith.divf %267, %266 : vector<16x32xf32>
    %269 = vector.extract_strided_slice %260 {offsets = [0, 32], sizes = [16, 32], strides = [1, 1]} : vector<16x64xf32> to vector<16x32xf32>
    %270 = arith.mulf %268, %269 : vector<16x32xf32>
    %271 = arith.addf %243, %270 : vector<16x32xf32>
    %cst_107 = arith.constant dense<0.000000e+00> : vector<16xf32>
    %272 = vector.multi_reduction <add>, %271, %cst_107 [1] : vector<16x32xf32> to vector<16xf32>
    %273 = vector.shape_cast %272 : vector<16xf32> to vector<16x1xf32>
    %cst_108 = arith.constant 3.200000e+01 : f32
    %274 = vector.broadcast %cst_108 : f32 to vector<16x1xf32>
    %275 = arith.divf %273, %274 : vector<16x1xf32>
    %276 = vector.broadcast %275 : vector<16x1xf32> to vector<16x32xf32>
    %277 = arith.subf %271, %276 : vector<16x32xf32>
    %278 = arith.mulf %277, %277 : vector<16x32xf32>
    %cst_109 = arith.constant dense<0.000000e+00> : vector<16xf32>
    %279 = vector.multi_reduction <add>, %278, %cst_109 [1] : vector<16x32xf32> to vector<16xf32>
    %280 = vector.shape_cast %279 : vector<16xf32> to vector<16x1xf32>
    %cst_110 = arith.constant 3.200000e+01 : f32
    %281 = vector.broadcast %cst_110 : f32 to vector<16x1xf32>
    %282 = arith.divf %280, %281 : vector<16x1xf32>
    %cst_111 = arith.constant 9.99999974E-6 : f32
    %283 = vector.broadcast %cst_111 : f32 to vector<16x1xf32>
    %284 = arith.addf %282, %283 : vector<16x1xf32>
    %285 = math.rsqrt %284 : vector<16x1xf32>
    %286 = vector.broadcast %285 : vector<16x1xf32> to vector<16x32xf32>
    %287 = arith.mulf %277, %286 : vector<16x32xf32>
    %288 = vector.broadcast %75 : vector<1x32xf32> to vector<16x32xf32>
    %289 = arith.mulf %287, %288 : vector<16x32xf32>
    %290 = vector.broadcast %76 : vector<1x32xf32> to vector<16x32xf32>
    %291 = arith.addf %289, %290 : vector<16x32xf32>
    %c0_112 = arith.constant 0 : index
    %c35 = arith.constant 35 : index
    %292 = vector.load %arg4[%c0_112, %c35] : memref<16x37xf32, #tpu.memory_space<vmem>>, vector<16x1xf32>
    %293 = vector.broadcast %292 : vector<16x1xf32> to vector<16x32xf32>
    %294 = arith.mulf %293, %291 : vector<16x32xf32>
    %295 = arith.addf %240, %294 : vector<16x32xf32>
    %c184 = arith.constant 184 : index
    %c0_113 = arith.constant 0 : index
    %296 = vector.load %arg2[%c184, %c0_113] : memref<200x64xf32, #tpu.memory_space<vmem>>, vector<16x32xf32>
    %c0_114 = arith.constant 0 : index
    %c0_115 = arith.constant 0 : index
    %297 = vector.load %arg1[%c0_114, %c0_115] : memref<16x16xf32, #tpu.memory_space<vmem>>, vector<16x16xf32>
    %cst_116 = arith.constant dense<0.000000e+00> : vector<16x32xf32>
    %298 = tpu.matmul %297, %296, %cst_116 {dimension_numbers = #tpu.dot_dimension_numbers<[1], [0], [0], [1], [0, 0, 1, 1], [], []>} : vector<16x16xf32>, vector<16x32xf32>, vector<16x32xf32> -> vector<16x32xf32>
    %cst_117 = arith.constant dense<0.000000e+00> : vector<16x10xf32>
    %299 = tpu.matmul %298, %69, %cst_117 {dimension_numbers = #tpu.dot_dimension_numbers<[1], [0], [0], [1], [0, 0, 1, 1], [], []>} : vector<16x32xf32>, vector<32x10xf32>, vector<16x10xf32> -> vector<16x10xf32>
    %300 = vector.broadcast %70 : vector<1x10xf32> to vector<16x10xf32>
    %301 = arith.addf %299, %300 : vector<16x10xf32>
    %cst_118 = arith.constant 0.000000e+00 : f32
    %302 = vector.broadcast %cst_118 : f32 to vector<16x10xf32>
    %303 = arith.cmpf ogt, %301, %302 : vector<16x10xf32>
    %cst_119 = arith.constant 0.000000e+00 : f32
    %304 = vector.broadcast %cst_119 : f32 to vector<16x10xf32>
    %305 = arith.minimumf %301, %304 : vector<16x10xf32>
    %306 = math.exp %305 : vector<16x10xf32>
    %cst_120 = arith.constant 1.000000e+00 : f32
    %307 = vector.broadcast %cst_120 : f32 to vector<16x10xf32>
    %308 = arith.subf %306, %307 : vector<16x10xf32>
    %309 = arith.select %303, %301, %308 : vector<16x10xi1>, vector<16x10xf32>
    %cst_121 = arith.constant dense<0.000000e+00> : vector<16x32xf32>
    %310 = tpu.matmul %309, %71, %cst_121 {dimension_numbers = #tpu.dot_dimension_numbers<[1], [0], [0], [1], [0, 0, 1, 1], [], []>} : vector<16x10xf32>, vector<10x32xf32>, vector<16x32xf32> -> vector<16x32xf32>
    %311 = vector.broadcast %72 : vector<1x32xf32> to vector<16x32xf32>
    %312 = arith.addf %310, %311 : vector<16x32xf32>
    %cst_122 = arith.constant dense<0.000000e+00> : vector<16x64xf32>
    %313 = tpu.matmul %312, %73, %cst_122 {dimension_numbers = #tpu.dot_dimension_numbers<[1], [0], [0], [1], [0, 0, 1, 1], [], []>} : vector<16x32xf32>, vector<32x64xf32>, vector<16x64xf32> -> vector<16x64xf32>
    %314 = vector.broadcast %74 : vector<1x64xf32> to vector<16x64xf32>
    %315 = arith.addf %313, %314 : vector<16x64xf32>
    %316 = vector.extract_strided_slice %315 {offsets = [0, 0], sizes = [16, 32], strides = [1, 1]} : vector<16x64xf32> to vector<16x32xf32>
    %cst_123 = arith.constant 0.000000e+00 : f32
    %317 = vector.broadcast %cst_123 : f32 to vector<16x32xf32>
    %318 = arith.subf %317, %316 : vector<16x32xf32>
    %319 = math.exp %318 : vector<16x32xf32>
    %cst_124 = arith.constant 1.000000e+00 : f32
    %320 = vector.broadcast %cst_124 : f32 to vector<16x32xf32>
    %321 = arith.addf %320, %319 : vector<16x32xf32>
    %cst_125 = arith.constant 1.000000e+00 : f32
    %322 = vector.broadcast %cst_125 : f32 to vector<16x32xf32>
    %323 = arith.divf %322, %321 : vector<16x32xf32>
    %324 = vector.extract_strided_slice %315 {offsets = [0, 32], sizes = [16, 32], strides = [1, 1]} : vector<16x64xf32> to vector<16x32xf32>
    %325 = arith.mulf %323, %324 : vector<16x32xf32>
    %326 = arith.addf %298, %325 : vector<16x32xf32>
    %cst_126 = arith.constant dense<0.000000e+00> : vector<16xf32>
    %327 = vector.multi_reduction <add>, %326, %cst_126 [1] : vector<16x32xf32> to vector<16xf32>
    %328 = vector.shape_cast %327 : vector<16xf32> to vector<16x1xf32>
    %cst_127 = arith.constant 3.200000e+01 : f32
    %329 = vector.broadcast %cst_127 : f32 to vector<16x1xf32>
    %330 = arith.divf %328, %329 : vector<16x1xf32>
    %331 = vector.broadcast %330 : vector<16x1xf32> to vector<16x32xf32>
    %332 = arith.subf %326, %331 : vector<16x32xf32>
    %333 = arith.mulf %332, %332 : vector<16x32xf32>
    %cst_128 = arith.constant dense<0.000000e+00> : vector<16xf32>
    %334 = vector.multi_reduction <add>, %333, %cst_128 [1] : vector<16x32xf32> to vector<16xf32>
    %335 = vector.shape_cast %334 : vector<16xf32> to vector<16x1xf32>
    %cst_129 = arith.constant 3.200000e+01 : f32
    %336 = vector.broadcast %cst_129 : f32 to vector<16x1xf32>
    %337 = arith.divf %335, %336 : vector<16x1xf32>
    %cst_130 = arith.constant 9.99999974E-6 : f32
    %338 = vector.broadcast %cst_130 : f32 to vector<16x1xf32>
    %339 = arith.addf %337, %338 : vector<16x1xf32>
    %340 = math.rsqrt %339 : vector<16x1xf32>
    %341 = vector.broadcast %340 : vector<16x1xf32> to vector<16x32xf32>
    %342 = arith.mulf %332, %341 : vector<16x32xf32>
    %343 = vector.broadcast %75 : vector<1x32xf32> to vector<16x32xf32>
    %344 = arith.mulf %342, %343 : vector<16x32xf32>
    %345 = vector.broadcast %76 : vector<1x32xf32> to vector<16x32xf32>
    %346 = arith.addf %344, %345 : vector<16x32xf32>
    %c0_131 = arith.constant 0 : index
    %c36 = arith.constant 36 : index
    %347 = vector.load %arg4[%c0_131, %c36] : memref<16x37xf32, #tpu.memory_space<vmem>>, vector<16x1xf32>
    %348 = vector.broadcast %347 : vector<16x1xf32> to vector<16x32xf32>
    %349 = arith.mulf %348, %346 : vector<16x32xf32>
    %350 = arith.addf %295, %349 : vector<16x32xf32>
    %c0_132 = arith.constant 0 : index
    %c0_133 = arith.constant 0 : index
    %351 = vector.load %arg4[%c0_132, %c0_133] : memref<16x37xf32, #tpu.memory_space<vmem>>, vector<16x32xf32>
    tpu.vector_store %arg4[%c0_132, %c0_133], %350 {strides = array<i32>} : memref<16x37xf32, #tpu.memory_space<vmem>>, vector<16x32xf32>,
    return
  }
  func.func @transform_0(%arg0: i32) -> (i32, i32) {
    %c0_i32 = arith.constant 0 : i32
    %c0_i32_0 = arith.constant 0 : i32
    return %arg0, %c0_i32 : i32, i32
  }
  func.func @transform_1(%arg0: i32) -> (i32, i32) {
    %c0_i32 = arith.constant 0 : i32
    %c0_i32_0 = arith.constant 0 : i32
    %c0_i32_1 = arith.constant 0 : i32
    return %c0_i32, %c0_i32_0 : i32, i32
  }
  func.func @transform_2(%arg0: i32) -> (i32, i32) {
    %c0_i32 = arith.constant 0 : i32
    %c0_i32_0 = arith.constant 0 : i32
    %c0_i32_1 = arith.constant 0 : i32
    return %c0_i32, %c0_i32_0 : i32, i32
  }
  func.func @transform_3(%arg0: i32) -> (i32, i32) {
    %c0_i32 = arith.constant 0 : i32
    %c0_i32_0 = arith.constant 0 : i32
    return %arg0, %c0_i32 : i32, i32
  }
}

</mosaic_0001>

<llo_original>
// kernel: tpu_custom_call.1
$region0: #{tpu_custom_call.1}
  #allocation0 [shape = 'u32[]', space=smem, size = 0x4, offset = 0x4, fixed_abs, tag = 'smem constant byte address 0x4 - core index']
  #allocation1 [shape = 'u32[144,128]{1,0:T(1,128)}', space=vmem, size = 0x12000, scoped, tag = 'internal scratch']
  %s0 = inlined_call_operand.vmem [shape: f32[16,16], index: 0, kind: input, shape index: {}]
  %s1 = inlined_call_operand.vmem [shape: f32[200,64], index: 1, kind: input, shape index: {}]
  %s2 = inlined_call_operand.vmem [shape: f32[16,64], index: 2, kind: input, shape index: {}]
  %s3 = inlined_call_operand.hbm [shape: f32[16,37], index: 3, kind: output, shape index: {}]
  %s4 = sld [smem:[#allocation0]]
  $region22: #{tpu_custom_call.1} parent=0
    _
  %s6 = ssub.s32 1, %s4
  %s7 = scalar_select 0, %s6, %s4
  $region1: #{tpu_custom_call.1} parent=0
    #allocation2 [shape = 'u8[8192]{0}', space=vmem, size = 0x2000, scoped, tag = 'output window, operand 0, single buffered']
    #allocation3 [shape = 's32[1]{0}', space=sflag, size = 0x4, scoped, tag = 'scoped memory for tpu_custom_call.1']
    %8 = vsyncpa [#allocation3], 0
    // Predicated region
    $region2: #{tpu_custom_call.1} parent=1 // pred_check
      _
    $region3: #{tpu_custom_call.1} parent=1 // pred_check_branch
      %10 = sbr.rel (0) target = $region5
    $region4: #{tpu_custom_call.1} parent=1 // pred_region
      _
    $region5: #{tpu_custom_call.1} parent=1 // pred_fallthru
      _
    // Predicated region
    $region6: #{tpu_custom_call.1} parent=1 // pred_check
      _
    $region7: #{tpu_custom_call.1} parent=1 // pred_check_branch
      %12 = sbr.rel (0) target = $region9
    $region8: #{tpu_custom_call.1} parent=1 // pred_region
      _
    $region9: #{tpu_custom_call.1} parent=1 // pred_fallthru
      _
    // Predicated region
    $region10: #{tpu_custom_call.1} parent=1 // pred_check
      _
    $region11: #{tpu_custom_call.1} parent=1 // pred_check_branch
      %14 = sbr.rel (0) target = $region13
    $region12: #{tpu_custom_call.1} parent=1 // pred_region
      _
    $region13: #{tpu_custom_call.1} parent=1 // pred_fallthru
      _
    %v15 = vld [vmem:[%s0] sm:$0xff]
    %v16 = vld [vmem:[%s0 + $0x8] sm:$0xff]
    %v17 = vld [vmem:[%s1] sm:$0xff]
    %v18 = vld [vmem:[%s1 + $0x8] sm:$0xff]
    %v19 = vld [vmem:[%s2] sm:$0x1]
    %v20 = vlaneseq
    %v21 = vshrl.u32 %v20, 7
    %v22 = vsub.s32 0, %v21
    %v23 = vrot.slane %v19, %v22
    %vm24 = vcmask 130048
    %v26 = vsel %vm24, %v15, 0
    %v29 = vsel %vm24, %v16, 0
    %31 = vmatprep.subr.mxu0 0.0
    %32 = vmatpush1.msra.mxu0 %v17
    %33 = vmatprep.subr.mxu0 0.0
    %34 = vmatpush1.msra.mxu0 %v18
    %35 = vmatprep.subr.mxu0 0.0
    %36 = vmatpush1.msra.mxu0 0.0
    %37 = vmatprep.subr.mxu0 0.0
    %38 = vmatpush1.msra.mxu0 0.0
    %39 = vmatprep.subr.mxu0 0.0
    %40 = vmatpush1.msra.mxu0 0.0
    %41 = vmatprep.subr.mxu0 0.0
    %42 = vmatpush1.msra.mxu0 0.0
    %43 = vmatprep.subr.mxu0 0.0
    %44 = vmatpush1.msra.mxu0 0.0
    %45 = vmatprep.subr.mxu0 0.0
    %46 = vmatpush1.msra.mxu0 0.0
    %47 = vmatprep.subr.mxu0 0.0
    %48 = vmatpush1.msra.mxu0 0.0
    %49 = vmatprep.subr.mxu0 0.0
    %50 = vmatpush1.msra.mxu0 0.0
    %51 = vmatprep.subr.mxu0 0.0
    %52 = vmatpush1.msra.mxu0 0.0
    %53 = vmatprep.subr.mxu0 0.0
    %54 = vmatpush1.msra.mxu0 0.0
    %55 = vmatprep.subr.mxu0 0.0
    %56 = vmatpush1.msra.mxu0 0.0
    %57 = vmatprep.subr.mxu0 0.0
    %58 = vmatpush1.msra.mxu0 0.0
    %59 = vmatprep.subr.mxu0 0.0
    %60 = vmatpush1.msra.mxu0 0.0
    %61 = vmatprep.subr.mxu0 0.0
    %62 = vmatpush1.msra.mxu0 0.0
    %63 = vmatprep.subr.mxu0 0.0
    %64 = vmatpush1.msra.mxu0 0.0
    %65 = vmatprep.subr.mxu0 0.0
    %66 = vmatpush1.msra.mxu0 0.0
    %67 = vmatprep.subr.mxu0 0.0
    %68 = vmatpush1.msra.mxu0 0.0
    %69 = vmatprep.subr.mxu0 0.0
    %70 = vmatpush1.msra.mxu0 0.0
    %71 = vmatprep.subr.mxu0 0.0
    %72 = vmatpush1.msra.mxu0 0.0
    %73 = vmatprep.subr.mxu0 0.0
    %74 = vmatpush1.msra.mxu0 0.0
    %75 = vmatprep.subr.mxu0 0.0
    %76 = vmatpush1.msra.mxu0 0.0
    %77 = vmatprep.subr.mxu0 0.0
    %78 = vmatpush1.msra.mxu0 0.0
    %79 = vmatprep.subr.mxu0 0.0
    %80 = vmatpush1.msra.mxu0 0.0
    %81 = vmatprep.subr.mxu0 0.0
    %82 = vmatpush1.msra.mxu0 0.0
    %83 = vmatprep.subr.mxu0 0.0
    %84 = vmatpush1.msra.mxu0 0.0
    %85 = vmatprep.subr.mxu0 0.0
    %86 = vmatpush1.msra.mxu0 0.0
    %87 = vmatprep.subr.mxu0 0.0
    %88 = vmatpush1.msra.mxu0 0.0
    %89 = vmatprep.subr.mxu0 0.0
    %90 = vmatpush1.msra.mxu0 0.0
    %91 = vmatprep.subr.mxu0 0.0
    %92 = vmatpush1.msra.mxu0 0.0
    %93 = vmatprep.subr.mxu0 0.0
    %94 = vmatpush1.msra.mxu0 0.0
    %95 = vmatprep.mubr.f32.mxu0 0.0
    %96 = vmatmul.mubr.f32.gmra.mrb[0].mxu0 %v26
    %v97 = vpop.f32.mrb[0].mxu0
    %v98 = vadd.f32 %v23, %v97
    %v99 = vpop.f32.mrb[0].mxu0
    %100 = vmatprep.mubr.f32.mxu0 0.0
    %101 = vmatmul.mubr.f32.gmra.mrb[0].mxu0 %v29
    %v102 = vpop.f32.mrb[0].mxu0
    %v103 = vadd.f32 %v23, %v102
    %v104 = vpop.f32.mrb[0].mxu0
    %105 = vdwg.mxu0
    %vm106 = vcmp.gt.f32.partialorder %v98, 0.0
    %vm107 = vcmp.gt.f32.partialorder %v103, 0.0
    %v108 = vmin.f32 %v98, 0.0
    %v109 = vmin.f32 %v103, 0.0
    %v110 = vmul.f32 %v108, 1.442695
    %v111 = vpow.pop %v110
    %v112 = vmul.f32 %v109, 1.442695
    %v113 = vpow.pop %v112
    %v114 = vsub.f32 %v111, 1.0
    %v115 = vsub.f32 %v113, 1.0
    %v116 = vsel %vm106, %v98, %v114
    %v117 = vsel %vm107, %v103, %v115
    %v118 = vld [vmem:[%s1 + $0x10] sm:$0xff]
    %v119 = vld [vmem:[%s1 + $0x18] sm:$0x3]
    %v120 = vld [vmem:[%s2 + $0x1] sm:$0x1]
    %v121 = vlaneseq
    %v122 = vshrl.u32 %v121, 7
    %v123 = vsub.s32 0, %v122
    %v124 = vrot.slane %v120, %v123
    %vm125 = vcmask 80896
    %v127 = vsel %vm125, %v116, 0
    %v130 = vsel %vm125, %v117, 0
    %vm132 = vcmask 1041408
    %v134 = vsel %vm132, %v119, 0
    %136 = vmatprep.subr.mxu0 0.0
    %137 = vmatpush1.msra.mxu0 %v118
    %138 = vmatprep.subr.mxu0 0.0
    %139 = vmatpush1.msra.mxu0 %v134
    %140 = vmatprep.subr.mxu0 0.0
    %141 = vmatpush1.msra.mxu0 0.0
    %142 = vmatprep.subr.mxu0 0.0
    %143 = vmatpush1.msra.mxu0 0.0
    %144 = vmatprep.subr.mxu0 0.0
    %145 = vmatpush1.msra.mxu0 0.0
    %146 = vmatprep.subr.mxu0 0.0
    %147 = vmatpush1.msra.mxu0 0.0
    %148 = vmatprep.subr.mxu0 0.0
    %149 = vmatpush1.msra.mxu0 0.0
    %150 = vmatprep.subr.mxu0 0.0
    %151 = vmatpush1.msra.mxu0 0.0
    %152 = vmatprep.subr.mxu0 0.0
    %153 = vmatpush1.msra.mxu0 0.0
    %154 = vmatprep.subr.mxu0 0.0
    %155 = vmatpush1.msra.mxu0 0.0
    %156 = vmatprep.subr.mxu0 0.0
    %157 = vmatpush1.msra.mxu0 0.0
    %158 = vmatprep.subr.mxu0 0.0
    %159 = vmatpush1.msra.mxu0 0.0
    %160 = vmatprep.subr.mxu0 0.0
    %161 = vmatpush1.msra.mxu0 0.0
    %162 = vmatprep.subr.mxu0 0.0
    %163 = vmatpush1.msra.mxu0 0.0
    %164 = vmatprep.subr.mxu0 0.0
    %165 = vmatpush1.msra.mxu0 0.0
    %166 = vmatprep.subr.mxu0 0.0
    %167 = vmatpush1.msra.mxu0 0.0
    %168 = vmatprep.subr.mxu0 0.0
    %169 = vmatpush1.msra.mxu0 0.0
    %170 = vmatprep.subr.mxu0 0.0
    %171 = vmatpush1.msra.mxu0 0.0
    %172 = vmatprep.subr.mxu0 0.0
    %173 = vmatpush1.msra.mxu0 0.0
    %174 = vmatprep.subr.mxu0 0.0
    %175 = vmatpush1.msra.mxu0 0.0
    %176 = vmatprep.subr.mxu0 0.0
    %177 = vmatpush1.msra.mxu0 0.0
    %178 = vmatprep.subr.mxu0 0.0
    %179 = vmatpush1.msra.mxu0 0.0
    %180 = vmatprep.subr.mxu0 0.0
    %181 = vmatpush1.msra.mxu0 0.0
    %182 = vmatprep.subr.mxu0 0.0
    %183 = vmatpush1.msra.mxu0 0.0
    %184 = vmatprep.subr.mxu0 0.0
    %185 = vmatpush1.msra.mxu0 0.0
    %186 = vmatprep.subr.mxu0 0.0
    %187 = vmatpush1.msra.mxu0 0.0
    %188 = vmatprep.subr.mxu0 0.0
    %189 = vmatpush1.msra.mxu0 0.0
    %190 = vmatprep.subr.mxu0 0.0
    %191 = vmatpush1.msra.mxu0 0.0
    %192 = vmatprep.subr.mxu0 0.0
    %193 = vmatpush1.msra.mxu0 0.0
    %194 = vmatprep.subr.mxu0 0.0
    %195 = vmatpush1.msra.mxu0 0.0
    %196 = vmatprep.subr.mxu0 0.0
    %197 = vmatpush1.msra.mxu0 0.0
    %198 = vmatprep.subr.mxu0 0.0
    %199 = vmatpush1.msra.mxu0 0.0
    %200 = vmatprep.mubr.f32.mxu0 0.0
    %201 = vmatmul.mubr.f32.gmra.mrb[0].mxu0 %v127
    %v202 = vpop.f32.mrb[0].mxu0
    %v203 = vadd.f32 %v124, %v202
    %v204 = vpop.f32.mrb[0].mxu0
    %205 = vmatprep.mubr.f32.mxu0 0.0
    %206 = vmatmul.mubr.f32.gmra.mrb[0].mxu0 %v130
    %v207 = vpop.f32.mrb[0].mxu0
    %v208 = vadd.f32 %v124, %v207
    %v209 = vpop.f32.mrb[0].mxu0
    %210 = vdwg.mxu0
    %v211 = vld [vmem:[%s1 + $0x20] sm:$0x1f]
    %v212 = vld [vmem:[%s2 + $0x2] sm:$0x1]
    %v213 = vlaneseq
    %v214 = vshrl.u32 %v213, 7
    %v215 = vsub.s32 0, %v214
    %v216 = vrot.slane %v212, %v215
    %vm217 = vcmask 39936
    %v219 = vsel %vm217, %v203, 0
    %v222 = vsel %vm217, %v208, 0
    %vm224 = vcmask 1044480
    %v226 = vsel %vm224, %v211, 0
    %228 = vmatprep.subr.mxu0 0.0
    %229 = vmatpush1.msra.mxu0 %v226
    %230 = vmatprep.subr.mxu0 0.0
    %231 = vmatpush1.msra.mxu0 0.0
    %232 = vmatprep.subr.mxu0 0.0
    %233 = vmatpush1.msra.mxu0 0.0
    %234 = vmatprep.subr.mxu0 0.0
    %235 = vmatpush1.msra.mxu0 0.0
    %236 = vmatprep.subr.mxu0 0.0
    %237 = vmatpush1.msra.mxu0 0.0
    %238 = vmatprep.subr.mxu0 0.0
    %239 = vmatpush1.msra.mxu0 0.0
    %240 = vmatprep.subr.mxu0 0.0
    %241 = vmatpush1.msra.mxu0 0.0
    %242 = vmatprep.subr.mxu0 0.0
    %243 = vmatpush1.msra.mxu0 0.0
    %244 = vmatprep.subr.mxu0 0.0
    %245 = vmatpush1.msra.mxu0 0.0
    %246 = vmatprep.subr.mxu0 0.0
    %247 = vmatpush1.msra.mxu0 0.0
    %248 = vmatprep.subr.mxu0 0.0
    %249 = vmatpush1.msra.mxu0 0.0
    %250 = vmatprep.subr.mxu0 0.0
    %251 = vmatpush1.msra.mxu0 0.0
    %252 = vmatprep.subr.mxu0 0.0
    %253 = vmatpush1.msra.mxu0 0.0
    %254 = vmatprep.subr.mxu0 0.0
    %255 = vmatpush1.msra.mxu0 0.0
    %256 = vmatprep.subr.mxu0 0.0
    %257 = vmatpush1.msra.mxu0 0.0
    %258 = vmatprep.subr.mxu0 0.0
    %259 = vmatpush1.msra.mxu0 0.0
    %260 = vmatprep.subr.mxu0 0.0
    %261 = vmatpush1.msra.mxu0 0.0
    %262 = vmatprep.subr.mxu0 0.0
    %263 = vmatpush1.msra.mxu0 0.0
    %264 = vmatprep.subr.mxu0 0.0
    %265 = vmatpush1.msra.mxu0 0.0
    %266 = vmatprep.subr.mxu0 0.0
    %267 = vmatpush1.msra.mxu0 0.0
    %268 = vmatprep.subr.mxu0 0.0
    %269 = vmatpush1.msra.mxu0 0.0
    %270 = vmatprep.subr.mxu0 0.0
    %271 = vmatpush1.msra.mxu0 0.0
    %272 = vmatprep.subr.mxu0 0.0
    %273 = vmatpush1.msra.mxu0 0.0
    %274 = vmatprep.subr.mxu0 0.0
    %275 = vmatpush1.msra.mxu0 0.0
    %276 = vmatprep.subr.mxu0 0.0
    %277 = vmatpush1.msra.mxu0 0.0
    %278 = vmatprep.subr.mxu0 0.0
    %279 = vmatpush1.msra.mxu0 0.0
    %280 = vmatprep.subr.mxu0 0.0
    %281 = vmatpush1.msra.mxu0 0.0
    %282 = vmatprep.subr.mxu0 0.0
    %283 = vmatpush1.msra.mxu0 0.0
    %284 = vmatprep.subr.mxu0 0.0
    %285 = vmatpush1.msra.mxu0 0.0
    %286 = vmatprep.subr.mxu0 0.0
    %287 = vmatpush1.msra.mxu0 0.0
    %288 = vmatprep.subr.mxu0 0.0
    %289 = vmatpush1.msra.mxu0 0.0
    %290 = vmatprep.subr.mxu0 0.0
    %291 = vmatpush1.msra.mxu0 0.0
    %292 = vmatprep.mubr.f32.mxu0 0.0
    %293 = vmatmul.mubr.f32.gmra.mrb[0].mxu0 %v219
    %v294 = vpop.f32.mrb[0].mxu0
    %v295 = vadd.f32 %v216, %v294
    %v296 = vpop.f32.mrb[0].mxu0
    %297 = vmatprep.mubr.f32.mxu0 0.0
    %298 = vmatmul.mubr.f32.gmra.mrb[0].mxu0 %v222
    %v299 = vpop.f32.mrb[0].mxu0
    %v300 = vadd.f32 %v216, %v299
    %v301 = vpop.f32.mrb[0].mxu0
    %302 = vdwg.mxu0
    %v303 = vsub.f32 0.0, %v295
    %v304 = vsub.f32 0.0, %v300
    %v305 = vmul.f32 %v303, 1.442695
    %v306 = vpow.pop %v305
    %v307 = vmul.f32 %v304, 1.442695
    %v308 = vpow.pop %v307
    %v309 = vadd.f32 %v306, 1.0
    %v310 = vadd.f32 %v308, 1.0
    %v311 = vrcp.pop %v309
    %v312 = vmul.f32 1.0, %v311
    %v313 = vrcp.pop %v310
    %v314 = vmul.f32 1.0, %v313
    %317 = vrot.lane.b32.xlu0 %v295, 123
    %v318 = vpop.permute.xlu0 %317
    %319 = vrot.lane.b32.xlu0 %v300, 123
    %v320 = vpop.permute.xlu0 %319
    %v323 = vmul.f32 %v312, %v318
    %v324 = vmul.f32 %v314, %v320
    %327 = vrot.lane.b32.xlu0 %v323, 10
    %v328 = vpop.permute.xlu0 %327
    %329 = vrot.lane.b32.xlu0 %v324, 10
    %v330 = vpop.permute.xlu0 %329
    %v333 = vadd.f32 %v98, %v328
    %v334 = vadd.f32 %v103, %v330
    %v335 = vld [vmem:[%s2 + $0x3] sm:$0x1]
    %v336 = vld [vmem:[%s2 + $0x4] sm:$0x1]
    %339 = vrot.lane.b32.xlu0 %v333, 118
    %v340 = vpop.permute.xlu0 %339
    %341 = vrot.lane.b32.xlu0 %v334, 118
    %v342 = vpop.permute.xlu0 %341
    %v345 = vsel %vm217, %v340, 0.0
    %346 = vadd.xlane.f32.xlu0 %v345
    %v347 = vpop.xlane.xlu0 %346
    %v348 = vsel %vm217, %v342, 0.0
    %349 = vadd.xlane.f32.xlu0 %v348
    %v350 = vpop.xlane.xlu0 %349
    %v351 = vrcp.pop 5.0
    %v352 = vmul.f32 %v347, %v351
    %v353 = vmul.f32 %v350, %v351
    %v354 = vsub.f32 %v333, %v352
    %v355 = vsub.f32 %v334, %v353
    %v356 = vmul.f32 %v354, %v354
    %v357 = vmul.f32 %v355, %v355
    %360 = vrot.lane.b32.xlu0 %v356, 118
    %v361 = vpop.permute.xlu0 %360
    %362 = vrot.lane.b32.xlu0 %v357, 118
    %v363 = vpop.permute.xlu0 %362
    %v366 = vsel %vm217, %v361, 0.0
    %367 = vadd.xlane.f32.xlu0 %v366
    %v368 = vpop.xlane.xlu0 %367
    %v369 = vsel %vm217, %v363, 0.0
    %370 = vadd.xlane.f32.xlu0 %v369
    %v371 = vpop.xlane.xlu0 %370
    %v372 = vmul.f32 %v368, %v351
    %v373 = vmul.f32 %v371, %v351
    %v374 = vadd.f32 %v372, 1e-05
    %v375 = vadd.f32 %v373, 1e-05
    %v376 = vrsqrt.pop %v374
    %v377 = vrsqrt.pop %v375
    %v378 = vmul.f32 %v354, %v376
    %v379 = vmul.f32 %v355, %v377
    %v380 = vlaneseq
    %v381 = vshrl.u32 %v380, 7
    %v382 = vsub.s32 0, %v381
    %v383 = vrot.slane %v335, %v382
    %385 = vrot.lane.b32.xlu0 %v383, 10
    %v386 = vpop.permute.xlu0 %385
    %v388 = vmul.f32 %v378, %v386
    %v389 = vmul.f32 %v379, %v386
    %v390 = vlaneseq
    %v391 = vshrl.u32 %v390, 7
    %v392 = vsub.s32 0, %v391
    %v393 = vrot.slane %v336, %v392
    %395 = vrot.lane.b32.xlu0 %v393, 10
    %v396 = vpop.permute.xlu0 %395
    %v398 = vadd.f32 %v388, %v396
    %v399 = vadd.f32 %v389, %v396
    %vm400 = vcmask 121936
    %v401 = vsel %vm400, %v398, -inf
    %402 = vmax.xlane.f32.xlu0 %v401
    %v403 = vpop.xlane.xlu0 %402
    %v404 = vsel %vm400, %v399, -inf
    %405 = vmax.xlane.f32.xlu0 %v404
    %v406 = vpop.xlane.xlu0 %405
    %v407 = vsub.f32 %v398, %v403
    %v408 = vsub.f32 %v399, %v406
    %v409 = vmul.f32 %v407, 1.442695
    %v410 = vpow.pop %v409
    %v411 = vmul.f32 %v408, 1.442695
    %v412 = vpow.pop %v411
    %415 = vrot.lane.b32.xlu0 %v410, 118
    %v416 = vpop.permute.xlu0 %415
    %417 = vrot.lane.b32.xlu0 %v412, 118
    %v418 = vpop.permute.xlu0 %417
    %v421 = vsel %vm217, %v416, 0.0
    %422 = vadd.xlane.f32.xlu0 %v421
    %v423 = vpop.xlane.xlu0 %422
    %v424 = vsel %vm217, %v418, 0.0
    %425 = vadd.xlane.f32.xlu0 %v424
    %v426 = vpop.xlane.xlu0 %425
    %v427 = vrcp.pop %v423
    %v428 = vmul.f32 %v410, %v427
    %v429 = vrcp.pop %v426
    %v430 = vmul.f32 %v412, %v429
    %433 = vrot.lane.b32.xlu0 %v428, 22
    %v434 = vpop.permute.xlu0 %433
    %435 = vrot.lane.b32.xlu0 %v430, 22
    %v436 = vpop.permute.xlu0 %435
    %vm439 = vcmask 302336
    %440 = vst.msk [vmem:[#allocation2] sm:$0xff] %vm439, %v434
    %441 = vst.msk [vmem:[#allocation2 + $0x8] sm:$0xff] %vm439, %v436
    %v442 = vld [vmem:[%s1 + $0x28] sm:$0xff]
    %v443 = vld [vmem:[%s1 + $0x30] sm:$0xff]
    %v444 = vld [vmem:[%s1 + $0x38] sm:$0xff]
    %v445 = vld [vmem:[%s1 + $0x40] sm:$0xff]
    %v446 = vld [vmem:[%s2 + $0x5] sm:$0x1]
    %v447 = vld [vmem:[%s1 + $0x48] sm:$0xff]
    %v448 = vld [vmem:[%s1 + $0x50] sm:$0x3]
    %v449 = vld [vmem:[%s2 + $0x6] sm:$0x1]
    %v450 = vld [vmem:[%s1 + $0x58] sm:$0xff]
    %v451 = vld [vmem:[%s1 + $0x60] sm:$0xff]
    %v452 = vld [vmem:[%s1 + $0x68] sm:$0xff]
    %v453 = vld [vmem:[%s1 + $0x70] sm:$0xff]
    %v454 = vld [vmem:[%s2 + $0x7] sm:$0x1]
    %v455 = vld [vmem:[%s2 + $0x8] sm:$0x1]
    %v456 = vld [vmem:[%s2 + $0x9] sm:$0x1]
    %v457 = vld [vmem:[%s1 + $0x78] sm:$0xff]
    %v458 = vld [vmem:[%s1 + $0x80] sm:$0xff]
    %v459 = vld [vmem:[%s0] sm:$0xff]
    %v460 = vld [vmem:[%s0 + $0x8] sm:$0xff]
    %v462 = vsel %vm24, %v459, 0
    %v465 = vsel %vm24, %v460, 0
    %467 = vmatprep.subr.mxu0 0.0
    %468 = vmatpush1.msra.mxu0 %v457
    %469 = vmatprep.subr.mxu0 0.0
    %470 = vmatpush1.msra.mxu0 %v458
    %471 = vmatprep.subr.mxu0 0.0
    %472 = vmatpush1.msra.mxu0 0.0
    %473 = vmatprep.subr.mxu0 0.0
    %474 = vmatpush1.msra.mxu0 0.0
    %475 = vmatprep.subr.mxu0 0.0
    %476 = vmatpush1.msra.mxu0 0.0
    %477 = vmatprep.subr.mxu0 0.0
    %478 = vmatpush1.msra.mxu0 0.0
    %479 = vmatprep.subr.mxu0 0.0
    %480 = vmatpush1.msra.mxu0 0.0
    %481 = vmatprep.subr.mxu0 0.0
    %482 = vmatpush1.msra.mxu0 0.0
    %483 = vmatprep.subr.mxu0 0.0
    %484 = vmatpush1.msra.mxu0 0.0
    %485 = vmatprep.subr.mxu0 0.0
    %486 = vmatpush1.msra.mxu0 0.0
    %487 = vmatprep.subr.mxu0 0.0
    %488 = vmatpush1.msra.mxu0 0.0
    %489 = vmatprep.subr.mxu0 0.0
    %490 = vmatpush1.msra.mxu0 0.0
    %491 = vmatprep.subr.mxu0 0.0
    %492 = vmatpush1.msra.mxu0 0.0
    %493 = vmatprep.subr.mxu0 0.0
    %494 = vmatpush1.msra.mxu0 0.0
    %495 = vmatprep.subr.mxu0 0.0
    %496 = vmatpush1.msra.mxu0 0.0
    %497 = vmatprep.subr.mxu0 0.0
    %498 = vmatpush1.msra.mxu0 0.0
    %499 = vmatprep.subr.mxu0 0.0
    %500 = vmatpush1.msra.mxu0 0.0
    %501 = vmatprep.subr.mxu0 0.0
    %502 = vmatpush1.msra.mxu0 0.0
    %503 = vmatprep.subr.mxu0 0.0
    %504 = vmatpush1.msra.mxu0 0.0
    %505 = vmatprep.subr.mxu0 0.0
    %506 = vmatpush1.msra.mxu0 0.0
    %507 = vmatprep.subr.mxu0 0.0
    %508 = vmatpush1.msra.mxu0 0.0
    %509 = vmatprep.subr.mxu0 0.0
    %510 = vmatpush1.msra.mxu0 0.0
    %511 = vmatprep.subr.mxu0 0.0
    %512 = vmatpush1.msra.mxu0 0.0
    %513 = vmatprep.subr.mxu0 0.0
    %514 = vmatpush1.msra.mxu0 0.0
    %515 = vmatprep.subr.mxu0 0.0
    %516 = vmatpush1.msra.mxu0 0.0
    %517 = vmatprep.subr.mxu0 0.0
    %518 = vmatpush1.msra.mxu0 0.0
    %519 = vmatprep.subr.mxu0 0.0
    %520 = vmatpush1.msra.mxu0 0.0
    %521 = vmatprep.subr.mxu0 0.0
    %522 = vmatpush1.msra.mxu0 0.0
    %523 = vmatprep.subr.mxu0 0.0
    %524 = vmatpush1.msra.mxu0 0.0
    %525 = vmatprep.subr.mxu0 0.0
    %526 = vmatpush1.msra.mxu0 0.0
    %527 = vmatprep.subr.mxu0 0.0
    %528 = vmatpush1.msra.mxu0 0.0
    %529 = vmatprep.subr.mxu0 0.0
    %530 = vmatpush1.msra.mxu0 0.0
    %531 = vmatprep.mubr.f32.mxu0 0.0
    %532 = vmatmul.mubr.f32.gmra.mrb[0].mxu0 %v462
    %v533 = vpop.f32.mrb[0].mxu0
    %v534 = vadd.f32 0.0, %v533
    %v535 = vpop.f32.mrb[0].mxu0
    %536 = vmatprep.mubr.f32.mxu0 0.0
    %537 = vmatmul.mubr.f32.gmra.mrb[0].mxu0 %v465
    %v538 = vpop.f32.mrb[0].mxu0
    %v539 = vadd.f32 0.0, %v538
    %v540 = vpop.f32.mrb[0].mxu0
    %541 = vdwg.mxu0
    %v542 = vlaneseq
    %v543 = vshrl.u32 %v542, 7
    %v544 = vsub.s32 0, %v543
    %v545 = vrot.slane %v446, %v544
    %vm546 = vcmask 261120
    %v548 = vsel %vm546, %v534, 0
    %v551 = vsel %vm546, %v539, 0
    %553 = vmatprep.subr.mxu0 0.0
    %554 = vmatpush1.msra.mxu0 %v442
    %555 = vmatprep.subr.mxu0 0.0
    %556 = vmatpush1.msra.mxu0 %v443
    %557 = vmatprep.subr.mxu0 0.0
    %558 = vmatpush1.msra.mxu0 %v444
    %559 = vmatprep.subr.mxu0 0.0
    %560 = vmatpush1.msra.mxu0 %v445
    %561 = vmatprep.subr.mxu0 0.0
    %562 = vmatpush1.msra.mxu0 0.0
    %563 = vmatprep.subr.mxu0 0.0
    %564 = vmatpush1.msra.mxu0 0.0
    %565 = vmatprep.subr.mxu0 0.0
    %566 = vmatpush1.msra.mxu0 0.0
    %567 = vmatprep.subr.mxu0 0.0
    %568 = vmatpush1.msra.mxu0 0.0
    %569 = vmatprep.subr.mxu0 0.0
    %570 = vmatpush1.msra.mxu0 0.0
    %571 = vmatprep.subr.mxu0 0.0
    %572 = vmatpush1.msra.mxu0 0.0
    %573 = vmatprep.subr.mxu0 0.0
    %574 = vmatpush1.msra.mxu0 0.0
    %575 = vmatprep.subr.mxu0 0.0
    %576 = vmatpush1.msra.mxu0 0.0
    %577 = vmatprep.subr.mxu0 0.0
    %578 = vmatpush1.msra.mxu0 0.0
    %579 = vmatprep.subr.mxu0 0.0
    %580 = vmatpush1.msra.mxu0 0.0
    %581 = vmatprep.subr.mxu0 0.0
    %582 = vmatpush1.msra.mxu0 0.0
    %583 = vmatprep.subr.mxu0 0.0
    %584 = vmatpush1.msra.mxu0 0.0
    %585 = vmatprep.subr.mxu0 0.0
    %586 = vmatpush1.msra.mxu0 0.0
    %587 = vmatprep.subr.mxu0 0.0
    %588 = vmatpush1.msra.mxu0 0.0
    %589 = vmatprep.subr.mxu0 0.0
    %590 = vmatpush1.msra.mxu0 0.0
    %591 = vmatprep.subr.mxu0 0.0
    %592 = vmatpush1.msra.mxu0 0.0
    %593 = vmatprep.subr.mxu0 0.0
    %594 = vmatpush1.msra.mxu0 0.0
    %595 = vmatprep.subr.mxu0 0.0
    %596 = vmatpush1.msra.mxu0 0.0
    %597 = vmatprep.subr.mxu0 0.0
    %598 = vmatpush1.msra.mxu0 0.0
    %599 = vmatprep.subr.mxu0 0.0
    %600 = vmatpush1.msra.mxu0 0.0
    %601 = vmatprep.subr.mxu0 0.0
    %602 = vmatpush1.msra.mxu0 0.0
    %603 = vmatprep.subr.mxu0 0.0
    %604 = vmatpush1.msra.mxu0 0.0
    %605 = vmatprep.subr.mxu0 0.0
    %606 = vmatpush1.msra.mxu0 0.0
    %607 = vmatprep.subr.mxu0 0.0
    %608 = vmatpush1.msra.mxu0 0.0
    %609 = vmatprep.subr.mxu0 0.0
    %610 = vmatpush1.msra.mxu0 0.0
    %611 = vmatprep.subr.mxu0 0.0
    %612 = vmatpush1.msra.mxu0 0.0
    %613 = vmatprep.subr.mxu0 0.0
    %614 = vmatpush1.msra.mxu0 0.0
    %615 = vmatprep.subr.mxu0 0.0
    %616 = vmatpush1.msra.mxu0 0.0
    %617 = vmatprep.mubr.f32.mxu0 0.0
    %618 = vmatmul.mubr.f32.gmra.mrb[0].mxu0 %v548
    %v619 = vpop.f32.mrb[0].mxu0
    %v620 = vadd.f32 %v545, %v619
    %v621 = vpop.f32.mrb[0].mxu0
    %622 = vmatprep.mubr.f32.mxu0 0.0
    %623 = vmatmul.mubr.f32.gmra.mrb[0].mxu0 %v551
    %v624 = vpop.f32.mrb[0].mxu0
    %v625 = vadd.f32 %v545, %v624
    %v626 = vpop.f32.mrb[0].mxu0
    %627 = vdwg.mxu0
    %vm628 = vcmp.gt.f32.partialorder %v620, 0.0
    %vm629 = vcmp.gt.f32.partialorder %v625, 0.0
    %v630 = vmin.f32 %v620, 0.0
    %v631 = vmin.f32 %v625, 0.0
    %v632 = vmul.f32 %v630, 1.442695
    %v633 = vpow.pop %v632
    %v634 = vmul.f32 %v631, 1.442695
    %v635 = vpow.pop %v634
    %v636 = vsub.f32 %v633, 1.0
    %v637 = vsub.f32 %v635, 1.0
    %v638 = vsel %vm628, %v620, %v636
    %v639 = vsel %vm629, %v625, %v637
    %v640 = vlaneseq
    %v641 = vshrl.u32 %v640, 7
    %v642 = vsub.s32 0, %v641
    %v643 = vrot.slane %v449, %v642
    %v645 = vsel %vm125, %v638, 0
    %v648 = vsel %vm125, %v639, 0
    %v651 = vsel %vm132, %v448, 0
    %653 = vmatprep.subr.mxu0 0.0
    %654 = vmatpush1.msra.mxu0 %v447
    %655 = vmatprep.subr.mxu0 0.0
    %656 = vmatpush1.msra.mxu0 %v651
    %657 = vmatprep.subr.mxu0 0.0
    %658 = vmatpush1.msra.mxu0 0.0
    %659 = vmatprep.subr.mxu0 0.0
    %660 = vmatpush1.msra.mxu0 0.0
    %661 = vmatprep.subr.mxu0 0.0
    %662 = vmatpush1.msra.mxu0 0.0
    %663 = vmatprep.subr.mxu0 0.0
    %664 = vmatpush1.msra.mxu0 0.0
    %665 = vmatprep.subr.mxu0 0.0
    %666 = vmatpush1.msra.mxu0 0.0
    %667 = vmatprep.subr.mxu0 0.0
    %668 = vmatpush1.msra.mxu0 0.0
    %669 = vmatprep.subr.mxu0 0.0
    %670 = vmatpush1.msra.mxu0 0.0
    %671 = vmatprep.subr.mxu0 0.0
    %672 = vmatpush1.msra.mxu0 0.0
    %673 = vmatprep.subr.mxu0 0.0
    %674 = vmatpush1.msra.mxu0 0.0
    %675 = vmatprep.subr.mxu0 0.0
    %676 = vmatpush1.msra.mxu0 0.0
    %677 = vmatprep.subr.mxu0 0.0
    %678 = vmatpush1.msra.mxu0 0.0
    %679 = vmatprep.subr.mxu0 0.0
    %680 = vmatpush1.msra.mxu0 0.0
    %681 = vmatprep.subr.mxu0 0.0
    %682 = vmatpush1.msra.mxu0 0.0
    %683 = vmatprep.subr.mxu0 0.0
    %684 = vmatpush1.msra.mxu0 0.0
    %685 = vmatprep.subr.mxu0 0.0
    %686 = vmatpush1.msra.mxu0 0.0
    %687 = vmatprep.subr.mxu0 0.0
    %688 = vmatpush1.msra.mxu0 0.0
    %689 = vmatprep.subr.mxu0 0.0
    %690 = vmatpush1.msra.mxu0 0.0
    %691 = vmatprep.subr.mxu0 0.0
    %692 = vmatpush1.msra.mxu0 0.0
    %693 = vmatprep.subr.mxu0 0.0
    %694 = vmatpush1.msra.mxu0 0.0
    %695 = vmatprep.subr.mxu0 0.0
    %696 = vmatpush1.msra.mxu0 0.0
    %697 = vmatprep.subr.mxu0 0.0
    %698 = vmatpush1.msra.mxu0 0.0
    %699 = vmatprep.subr.mxu0 0.0
    %700 = vmatpush1.msra.mxu0 0.0
    %701 = vmatprep.subr.mxu0 0.0
    %702 = vmatpush1.msra.mxu0 0.0
    %703 = vmatprep.subr.mxu0 0.0
    %704 = vmatpush1.msra.mxu0 0.0
    %705 = vmatprep.subr.mxu0 0.0
    %706 = vmatpush1.msra.mxu0 0.0
    %707 = vmatprep.subr.mxu0 0.0
    %708 = vmatpush1.msra.mxu0 0.0
    %709 = vmatprep.subr.mxu0 0.0
    %710 = vmatpush1.msra.mxu0 0.0
    %711 = vmatprep.subr.mxu0 0.0
    %712 = vmatpush1.msra.mxu0 0.0
    %713 = vmatprep.subr.mxu0 0.0
    %714 = vmatpush1.msra.mxu0 0.0
    %715 = vmatprep.subr.mxu0 0.0
    %716 = vmatpush1.msra.mxu0 0.0
    %717 = vmatprep.mubr.f32.mxu0 0.0
    %718 = vmatmul.mubr.f32.gmra.mrb[0].mxu0 %v645
    %v719 = vpop.f32.mrb[0].mxu0
    %v720 = vadd.f32 %v643, %v719
    %v721 = vpop.f32.mrb[0].mxu0
    %722 = vmatprep.mubr.f32.mxu0 0.0
    %723 = vmatmul.mubr.f32.gmra.mrb[0].mxu0 %v648
    %v724 = vpop.f32.mrb[0].mxu0
    %v725 = vadd.f32 %v643, %v724
    %v726 = vpop.f32.mrb[0].mxu0
    %727 = vdwg.mxu0
    %v728 = vlaneseq
    %v729 = vshrl.u32 %v728, 7
    %v730 = vsub.s32 0, %v729
    %v731 = vrot.slane %v454, %v730
    %v733 = vsel %vm546, %v720, 0
    %v736 = vsel %vm546, %v725, 0
    %738 = vmatprep.subr.mxu0 0.0
    %739 = vmatpush1.msra.mxu0 %v450
    %740 = vmatprep.subr.mxu0 0.0
    %741 = vmatpush1.msra.mxu0 %v451
    %742 = vmatprep.subr.mxu0 0.0
    %743 = vmatpush1.msra.mxu0 %v452
    %744 = vmatprep.subr.mxu0 0.0
    %745 = vmatpush1.msra.mxu0 %v453
    %746 = vmatprep.subr.mxu0 0.0
    %747 = vmatpush1.msra.mxu0 0.0
    %748 = vmatprep.subr.mxu0 0.0
    %749 = vmatpush1.msra.mxu0 0.0
    %750 = vmatprep.subr.mxu0 0.0
    %751 = vmatpush1.msra.mxu0 0.0
    %752 = vmatprep.subr.mxu0 0.0
    %753 = vmatpush1.msra.mxu0 0.0
    %754 = vmatprep.subr.mxu0 0.0
    %755 = vmatpush1.msra.mxu0 0.0
    %756 = vmatprep.subr.mxu0 0.0
    %757 = vmatpush1.msra.mxu0 0.0
    %758 = vmatprep.subr.mxu0 0.0
    %759 = vmatpush1.msra.mxu0 0.0
    %760 = vmatprep.subr.mxu0 0.0
    %761 = vmatpush1.msra.mxu0 0.0
    %762 = vmatprep.subr.mxu0 0.0
    %763 = vmatpush1.msra.mxu0 0.0
    %764 = vmatprep.subr.mxu0 0.0
    %765 = vmatpush1.msra.mxu0 0.0
    %766 = vmatprep.subr.mxu0 0.0
    %767 = vmatpush1.msra.mxu0 0.0
    %768 = vmatprep.subr.mxu0 0.0
    %769 = vmatpush1.msra.mxu0 0.0
    %770 = vmatprep.subr.mxu0 0.0
    %771 = vmatpush1.msra.mxu0 0.0
    %772 = vmatprep.subr.mxu0 0.0
    %773 = vmatpush1.msra.mxu0 0.0
    %774 = vmatprep.subr.mxu0 0.0
    %775 = vmatpush1.msra.mxu0 0.0
    %776 = vmatprep.subr.mxu0 0.0
    %777 = vmatpush1.msra.mxu0 0.0
    %778 = vmatprep.subr.mxu0 0.0
    %779 = vmatpush1.msra.mxu0 0.0
    %780 = vmatprep.subr.mxu0 0.0
    %781 = vmatpush1.msra.mxu0 0.0
    %782 = vmatprep.subr.mxu0 0.0
    %783 = vmatpush1.msra.mxu0 0.0
    %784 = vmatprep.subr.mxu0 0.0
    %785 = vmatpush1.msra.mxu0 0.0
    %786 = vmatprep.subr.mxu0 0.0
    %787 = vmatpush1.msra.mxu0 0.0
    %788 = vmatprep.subr.mxu0 0.0
    %789 = vmatpush1.msra.mxu0 0.0
    %790 = vmatprep.subr.mxu0 0.0
    %791 = vmatpush1.msra.mxu0 0.0
    %792 = vmatprep.subr.mxu0 0.0
    %793 = vmatpush1.msra.mxu0 0.0
    %794 = vmatprep.subr.mxu0 0.0
    %795 = vmatpush1.msra.mxu0 0.0
    %796 = vmatprep.subr.mxu0 0.0
    %797 = vmatpush1.msra.mxu0 0.0
    %798 = vmatprep.subr.mxu0 0.0
    %799 = vmatpush1.msra.mxu0 0.0
    %800 = vmatprep.subr.mxu0 0.0
    %801 = vmatpush1.msra.mxu0 0.0
    %802 = vmatprep.mubr.f32.mxu0 0.0
    %803 = vmatmul.mubr.f32.gmra.mrb[0].mxu0 %v733
    %v804 = vpop.f32.mrb[0].mxu0
    %v805 = vadd.f32 %v731, %v804
    %v806 = vpop.f32.mrb[0].mxu0
    %807 = vmatprep.mubr.f32.mxu0 0.0
    %808 = vmatmul.mubr.f32.gmra.mrb[0].mxu0 %v736
    %v809 = vpop.f32.mrb[0].mxu0
    %v810 = vadd.f32 %v731, %v809
    %v811 = vpop.f32.mrb[0].mxu0
    %812 = vdwg.mxu0
    %v813 = vsub.f32 0.0, %v805
    %v814 = vsub.f32 0.0, %v810
    %v815 = vmul.f32 %v813, 1.442695
    %v816 = vpow.pop %v815
    %v817 = vmul.f32 %v814, 1.442695
    %v818 = vpow.pop %v817
    %v819 = vadd.f32 %v816, 1.0
    %v820 = vadd.f32 %v818, 1.0
    %v821 = vrcp.pop %v819
    %v822 = vmul.f32 1.0, %v821
    %v823 = vrcp.pop %v820
    %v824 = vmul.f32 1.0, %v823
    %827 = vrot.lane.b32.xlu0 %v805, 96
    %v828 = vpop.permute.xlu0 %827
    %829 = vrot.lane.b32.xlu0 %v810, 96
    %v830 = vpop.permute.xlu0 %829
    %v833 = vmul.f32 %v822, %v828
    %v834 = vmul.f32 %v824, %v830
    %v835 = vadd.f32 %v534, %v833
    %v836 = vadd.f32 %v539, %v834
    %v837 = vsel %vm546, %v835, 0.0
    %838 = vadd.xlane.f32.xlu0 %v837
    %v839 = vpop.xlane.xlu0 %838
    %v840 = vsel %vm546, %v836, 0.0
    %841 = vadd.xlane.f32.xlu0 %v840
    %v842 = vpop.xlane.xlu0 %841
    %v843 = vrcp.pop 32.0
    %v844 = vmul.f32 %v839, %v843
    %v845 = vmul.f32 %v842, %v843
    %v846 = vsub.f32 %v835, %v844
    %v847 = vsub.f32 %v836, %v845
    %v848 = vmul.f32 %v846, %v846
    %v849 = vmul.f32 %v847, %v847
    %v850 = vsel %vm546, %v848, 0.0
    %851 = vadd.xlane.f32.xlu0 %v850
    %v852 = vpop.xlane.xlu0 %851
    %v853 = vsel %vm546, %v849, 0.0
    %854 = vadd.xlane.f32.xlu0 %v853
    %v855 = vpop.xlane.xlu0 %854
    %v856 = vmul.f32 %v852, %v843
    %v857 = vmul.f32 %v855, %v843
    %v858 = vadd.f32 %v856, 1e-05
    %v859 = vadd.f32 %v857, 1e-05
    %v860 = vrsqrt.pop %v858
    %v861 = vrsqrt.pop %v859
    %v862 = vmul.f32 %v846, %v860
    %v863 = vmul.f32 %v847, %v861
    %v864 = vlaneseq
    %v865 = vshrl.u32 %v864, 7
    %v866 = vsub.s32 0, %v865
    %v867 = vrot.slane %v455, %v866
    %v868 = vmul.f32 %v862, %v867
    %v869 = vmul.f32 %v863, %v867
    %v870 = vlaneseq
    %v871 = vshrl.u32 %v870, 7
    %v872 = vsub.s32 0, %v871
    %v873 = vrot.slane %v456, %v872
    %v874 = vadd.f32 %v868, %v873
    %v875 = vadd.f32 %v869, %v873
    %v876 = vld [vmem:[#allocation2] sm:$0xff]
    %v877 = vld [vmem:[#allocation2 + $0x8] sm:$0xff]
    %879 = vset.pattern.permute.xlu0 32
    %880 = vperm.xlu0 %879, %v876
    %v881 = vpop.permute.xlu0 %880
    %884 = vset.pattern.permute.xlu0 32
    %885 = vperm.xlu0 %884, %v877
    %v886 = vpop.permute.xlu0 %885
    %v888 = vmul.f32 %v881, %v874
    %v889 = vmul.f32 %v886, %v875
    %v890 = vld [vmem:[%s1 + $0x88] sm:$0xff]
    %v891 = vld [vmem:[%s1 + $0x90] sm:$0xff]
    %892 = vmatprep.subr.mxu0 0.0
    %893 = vmatpush1.msra.mxu0 %v890
    %894 = vmatprep.subr.mxu0 0.0
    %895 = vmatpush1.msra.mxu0 %v891
    %896 = vmatprep.subr.mxu0 0.0
    %897 = vmatpush1.msra.mxu0 0.0
    %898 = vmatprep.subr.mxu0 0.0
    %899 = vmatpush1.msra.mxu0 0.0
    %900 = vmatprep.subr.mxu0 0.0
    %901 = vmatpush1.msra.mxu0 0.0
    %902 = vmatprep.subr.mxu0 0.0
    %903 = vmatpush1.msra.mxu0 0.0
    %904 = vmatprep.subr.mxu0 0.0
    %905 = vmatpush1.msra.mxu0 0.0
    %906 = vmatprep.subr.mxu0 0.0
    %907 = vmatpush1.msra.mxu0 0.0
    %908 = vmatprep.subr.mxu0 0.0
    %909 = vmatpush1.msra.mxu0 0.0
    %910 = vmatprep.subr.mxu0 0.0
    %911 = vmatpush1.msra.mxu0 0.0
    %912 = vmatprep.subr.mxu0 0.0
    %913 = vmatpush1.msra.mxu0 0.0
    %914 = vmatprep.subr.mxu0 0.0
    %915 = vmatpush1.msra.mxu0 0.0
    %916 = vmatprep.subr.mxu0 0.0
    %917 = vmatpush1.msra.mxu0 0.0
    %918 = vmatprep.subr.mxu0 0.0
    %919 = vmatpush1.msra.mxu0 0.0
    %920 = vmatprep.subr.mxu0 0.0
    %921 = vmatpush1.msra.mxu0 0.0
    %922 = vmatprep.subr.mxu0 0.0
    %923 = vmatpush1.msra.mxu0 0.0
    %924 = vmatprep.subr.mxu0 0.0
    %925 = vmatpush1.msra.mxu0 0.0
    %926 = vmatprep.subr.mxu0 0.0
    %927 = vmatpush1.msra.mxu0 0.0
    %928 = vmatprep.subr.mxu0 0.0
    %929 = vmatpush1.msra.mxu0 0.0
    %930 = vmatprep.subr.mxu0 0.0
    %931 = vmatpush1.msra.mxu0 0.0
    %932 = vmatprep.subr.mxu0 0.0
    %933 = vmatpush1.msra.mxu0 0.0
    %934 = vmatprep.subr.mxu0 0.0
    %935 = vmatpush1.msra.mxu0 0.0
    %936 = vmatprep.subr.mxu0 0.0
    %937 = vmatpush1.msra.mxu0 0.0
    %938 = vmatprep.subr.mxu0 0.0
    %939 = vmatpush1.msra.mxu0 0.0
    %940 = vmatprep.subr.mxu0 0.0
    %941 = vmatpush1.msra.mxu0 0.0
    %942 = vmatprep.subr.mxu0 0.0
    %943 = vmatpush1.msra.mxu0 0.0
    %944 = vmatprep.subr.mxu0 0.0
    %945 = vmatpush1.msra.mxu0 0.0
    %946 = vmatprep.subr.mxu0 0.0
    %947 = vmatpush1.msra.mxu0 0.0
    %948 = vmatprep.subr.mxu0 0.0
    %949 = vmatpush1.msra.mxu0 0.0
    %950 = vmatprep.subr.mxu0 0.0
    %951 = vmatpush1.msra.mxu0 0.0
    %952 = vmatprep.subr.mxu0 0.0
    %953 = vmatpush1.msra.mxu0 0.0
    %954 = vmatprep.subr.mxu0 0.0
    %955 = vmatpush1.msra.mxu0 0.0
    %956 = vmatprep.mubr.f32.mxu0 0.0
    %957 = vmatmul.mubr.f32.gmra.mrb[0].mxu0 %v462
    %v958 = vpop.f32.mrb[0].mxu0
    %v959 = vadd.f32 0.0, %v958
    %v960 = vpop.f32.mrb[0].mxu0
    %961 = vmatprep.mubr.f32.mxu0 0.0
    %962 = vmatmul.mubr.f32.gmra.mrb[0].mxu0 %v465
    %v963 = vpop.f32.mrb[0].mxu0
    %v964 = vadd.f32 0.0, %v963
    %v965 = vpop.f32.mrb[0].mxu0
    %966 = vdwg.mxu0
    %v968 = vsel %vm546, %v959, 0
    %v971 = vsel %vm546, %v964, 0
    %973 = vmatprep.subr.mxu0 0.0
    %974 = vmatpush1.msra.mxu0 %v442
    %975 = vmatprep.subr.mxu0 0.0
    %976 = vmatpush1.msra.mxu0 %v443
    %977 = vmatprep.subr.mxu0 0.0
    %978 = vmatpush1.msra.mxu0 %v444
    %979 = vmatprep.subr.mxu0 0.0
    %980 = vmatpush1.msra.mxu0 %v445
    %981 = vmatprep.subr.mxu0 0.0
    %982 = vmatpush1.msra.mxu0 0.0
    %983 = vmatprep.subr.mxu0 0.0
    %984 = vmatpush1.msra.mxu0 0.0
    %985 = vmatprep.subr.mxu0 0.0
    %986 = vmatpush1.msra.mxu0 0.0
    %987 = vmatprep.subr.mxu0 0.0
    %988 = vmatpush1.msra.mxu0 0.0
    %989 = vmatprep.subr.mxu0 0.0
    %990 = vmatpush1.msra.mxu0 0.0
    %991 = vmatprep.subr.mxu0 0.0
    %992 = vmatpush1.msra.mxu0 0.0
    %993 = vmatprep.subr.mxu0 0.0
    %994 = vmatpush1.msra.mxu0 0.0
    %995 = vmatprep.subr.mxu0 0.0
    %996 = vmatpush1.msra.mxu0 0.0
    %997 = vmatprep.subr.mxu0 0.0
    %998 = vmatpush1.msra.mxu0 0.0
    %999 = vmatprep.subr.mxu0 0.0
    %1000 = vmatpush1.msra.mxu0 0.0
    %1001 = vmatprep.subr.mxu0 0.0
    %1002 = vmatpush1.msra.mxu0 0.0
    %1003 = vmatprep.subr.mxu0 0.0
    %1004 = vmatpush1.msra.mxu0 0.0
    %1005 = vmatprep.subr.mxu0 0.0
    %1006 = vmatpush1.msra.mxu0 0.0
    %1007 = vmatprep.subr.mxu0 0.0
    %1008 = vmatpush1.msra.mxu0 0.0
    %1009 = vmatprep.subr.mxu0 0.0
    %1010 = vmatpush1.msra.mxu0 0.0
    %1011 = vmatprep.subr.mxu0 0.0
    %1012 = vmatpush1.msra.mxu0 0.0
    %1013 = vmatprep.subr.mxu0 0.0
    %1014 = vmatpush1.msra.mxu0 0.0
    %1015 = vmatprep.subr.mxu0 0.0
    %1016 = vmatpush1.msra.mxu0 0.0
    %1017 = vmatprep.subr.mxu0 0.0
    %1018 = vmatpush1.msra.mxu0 0.0
    %1019 = vmatprep.subr.mxu0 0.0
    %1020 = vmatpush1.msra.mxu0 0.0
    %1021 = vmatprep.subr.mxu0 0.0
    %1022 = vmatpush1.msra.mxu0 0.0
    %1023 = vmatprep.subr.mxu0 0.0
    %1024 = vmatpush1.msra.mxu0 0.0
    %1025 = vmatprep.subr.mxu0 0.0
    %1026 = vmatpush1.msra.mxu0 0.0
    %1027 = vmatprep.subr.mxu0 0.0
    %1028 = vmatpush1.msra.mxu0 0.0
    %1029 = vmatprep.subr.mxu0 0.0
    %1030 = vmatpush1.msra.mxu0 0.0
    %1031 = vmatprep.subr.mxu0 0.0
    %1032 = vmatpush1.msra.mxu0 0.0
    %1033 = vmatprep.subr.mxu0 0.0
    %1034 = vmatpush1.msra.mxu0 0.0
    %1035 = vmatprep.subr.mxu0 0.0
    %1036 = vmatpush1.msra.mxu0 0.0
    %1037 = vmatprep.mubr.f32.mxu0 0.0
    %1038 = vmatmul.mubr.f32.gmra.mrb[0].mxu0 %v968
    %v1039 = vpop.f32.mrb[0].mxu0
    %v1040 = vadd.f32 %v545, %v1039
    %v1041 = vpop.f32.mrb[0].mxu0
    %1042 = vmatprep.mubr.f32.mxu0 0.0
    %1043 = vmatmul.mubr.f32.gmra.mrb[0].mxu0 %v971
    %v1044 = vpop.f32.mrb[0].mxu0
    %v1045 = vadd.f32 %v545, %v1044
    %v1046 = vpop.f32.mrb[0].mxu0
    %1047 = vdwg.mxu0
    %vm1048 = vcmp.gt.f32.partialorder %v1040, 0.0
    %vm1049 = vcmp.gt.f32.partialorder %v1045, 0.0
    %v1050 = vmin.f32 %v1040, 0.0
    %v1051 = vmin.f32 %v1045, 0.0
    %v1052 = vmul.f32 %v1050, 1.442695
    %v1053 = vpow.pop %v1052
    %v1054 = vmul.f32 %v1051, 1.442695
    %v1055 = vpow.pop %v1054
    %v1056 = vsub.f32 %v1053, 1.0
    %v1057 = vsub.f32 %v1055, 1.0
    %v1058 = vsel %vm1048, %v1040, %v1056
    %v1059 = vsel %vm1049, %v1045, %v1057
    %v1061 = vsel %vm125, %v1058, 0
    %v1064 = vsel %vm125, %v1059, 0
    %1066 = vmatprep.subr.mxu0 0.0
    %1067 = vmatpush1.msra.mxu0 %v447
    %1068 = vmatprep.subr.mxu0 0.0
    %1069 = vmatpush1.msra.mxu0 %v651
    %1070 = vmatprep.subr.mxu0 0.0
    %1071 = vmatpush1.msra.mxu0 0.0
    %1072 = vmatprep.subr.mxu0 0.0
    %1073 = vmatpush1.msra.mxu0 0.0
    %1074 = vmatprep.subr.mxu0 0.0
    %1075 = vmatpush1.msra.mxu0 0.0
    %1076 = vmatprep.subr.mxu0 0.0
    %1077 = vmatpush1.msra.mxu0 0.0
    %1078 = vmatprep.subr.mxu0 0.0
    %1079 = vmatpush1.msra.mxu0 0.0
    %1080 = vmatprep.subr.mxu0 0.0
    %1081 = vmatpush1.msra.mxu0 0.0
    %1082 = vmatprep.subr.mxu0 0.0
    %1083 = vmatpush1.msra.mxu0 0.0
    %1084 = vmatprep.subr.mxu0 0.0
    %1085 = vmatpush1.msra.mxu0 0.0
    %1086 = vmatprep.subr.mxu0 0.0
    %1087 = vmatpush1.msra.mxu0 0.0
    %1088 = vmatprep.subr.mxu0 0.0
    %1089 = vmatpush1.msra.mxu0 0.0
    %1090 = vmatprep.subr.mxu0 0.0
    %1091 = vmatpush1.msra.mxu0 0.0
    %1092 = vmatprep.subr.mxu0 0.0
    %1093 = vmatpush1.msra.mxu0 0.0
    %1094 = vmatprep.subr.mxu0 0.0
    %1095 = vmatpush1.msra.mxu0 0.0
    %1096 = vmatprep.subr.mxu0 0.0
    %1097 = vmatpush1.msra.mxu0 0.0
    %1098 = vmatprep.subr.mxu0 0.0
    %1099 = vmatpush1.msra.mxu0 0.0
    %1100 = vmatprep.subr.mxu0 0.0
    %1101 = vmatpush1.msra.mxu0 0.0
    %1102 = vmatprep.subr.mxu0 0.0
    %1103 = vmatpush1.msra.mxu0 0.0
    %1104 = vmatprep.subr.mxu0 0.0
    %1105 = vmatpush1.msra.mxu0 0.0
    %1106 = vmatprep.subr.mxu0 0.0
    %1107 = vmatpush1.msra.mxu0 0.0
    %1108 = vmatprep.subr.mxu0 0.0
    %1109 = vmatpush1.msra.mxu0 0.0
    %1110 = vmatprep.subr.mxu0 0.0
    %1111 = vmatpush1.msra.mxu0 0.0
    %1112 = vmatprep.subr.mxu0 0.0
    %1113 = vmatpush1.msra.mxu0 0.0
    %1114 = vmatprep.subr.mxu0 0.0
    %1115 = vmatpush1.msra.mxu0 0.0
    %1116 = vmatprep.subr.mxu0 0.0
    %1117 = vmatpush1.msra.mxu0 0.0
    %1118 = vmatprep.subr.mxu0 0.0
    %1119 = vmatpush1.msra.mxu0 0.0
    %1120 = vmatprep.subr.mxu0 0.0
    %1121 = vmatpush1.msra.mxu0 0.0
    %1122 = vmatprep.subr.mxu0 0.0
    %1123 = vmatpush1.msra.mxu0 0.0
    %1124 = vmatprep.subr.mxu0 0.0
    %1125 = vmatpush1.msra.mxu0 0.0
    %1126 = vmatprep.subr.mxu0 0.0
    %1127 = vmatpush1.msra.mxu0 0.0
    %1128 = vmatprep.subr.mxu0 0.0
    %1129 = vmatpush1.msra.mxu0 0.0
    %1130 = vmatprep.mubr.f32.mxu0 0.0
    %1131 = vmatmul.mubr.f32.gmra.mrb[0].mxu0 %v1061
    %v1132 = vpop.f32.mrb[0].mxu0
    %v1133 = vadd.f32 %v643, %v1132
    %v1134 = vpop.f32.mrb[0].mxu0
    %1135 = vmatprep.mubr.f32.mxu0 0.0
    %1136 = vmatmul.mubr.f32.gmra.mrb[0].mxu0 %v1064
    %v1137 = vpop.f32.mrb[0].mxu0
    %v1138 = vadd.f32 %v643, %v1137
    %v1139 = vpop.f32.mrb[0].mxu0
    %1140 = vdwg.mxu0
    %v1142 = vsel %vm546, %v1133, 0
    %v1145 = vsel %vm546, %v1138, 0
    %1147 = vmatprep.subr.mxu0 0.0
    %1148 = vmatpush1.msra.mxu0 %v450
    %1149 = vmatprep.subr.mxu0 0.0
    %1150 = vmatpush1.msra.mxu0 %v451
    %1151 = vmatprep.subr.mxu0 0.0
    %1152 = vmatpush1.msra.mxu0 %v452
    %1153 = vmatprep.subr.mxu0 0.0
    %1154 = vmatpush1.msra.mxu0 %v453
    %1155 = vmatprep.subr.mxu0 0.0
    %1156 = vmatpush1.msra.mxu0 0.0
    %1157 = vmatprep.subr.mxu0 0.0
    %1158 = vmatpush1.msra.mxu0 0.0
    %1159 = vmatprep.subr.mxu0 0.0
    %1160 = vmatpush1.msra.mxu0 0.0
    %1161 = vmatprep.subr.mxu0 0.0
    %1162 = vmatpush1.msra.mxu0 0.0
    %1163 = vmatprep.subr.mxu0 0.0
    %1164 = vmatpush1.msra.mxu0 0.0
    %1165 = vmatprep.subr.mxu0 0.0
    %1166 = vmatpush1.msra.mxu0 0.0
    %1167 = vmatprep.subr.mxu0 0.0
    %1168 = vmatpush1.msra.mxu0 0.0
    %1169 = vmatprep.subr.mxu0 0.0
    %1170 = vmatpush1.msra.mxu0 0.0
    %1171 = vmatprep.subr.mxu0 0.0
    %1172 = vmatpush1.msra.mxu0 0.0
    %1173 = vmatprep.subr.mxu0 0.0
    %1174 = vmatpush1.msra.mxu0 0.0
    %1175 = vmatprep.subr.mxu0 0.0
    %1176 = vmatpush1.msra.mxu0 0.0
    %1177 = vmatprep.subr.mxu0 0.0
    %1178 = vmatpush1.msra.mxu0 0.0
    %1179 = vmatprep.subr.mxu0 0.0
    %1180 = vmatpush1.msra.mxu0 0.0
    %1181 = vmatprep.subr.mxu0 0.0
    %1182 = vmatpush1.msra.mxu0 0.0
    %1183 = vmatprep.subr.mxu0 0.0
    %1184 = vmatpush1.msra.mxu0 0.0
    %1185 = vmatprep.subr.mxu0 0.0
    %1186 = vmatpush1.msra.mxu0 0.0
    %1187 = vmatprep.subr.mxu0 0.0
    %1188 = vmatpush1.msra.mxu0 0.0
    %1189 = vmatprep.subr.mxu0 0.0
    %1190 = vmatpush1.msra.mxu0 0.0
    %1191 = vmatprep.subr.mxu0 0.0
    %1192 = vmatpush1.msra.mxu0 0.0
    %1193 = vmatprep.subr.mxu0 0.0
    %1194 = vmatpush1.msra.mxu0 0.0
    %1195 = vmatprep.subr.mxu0 0.0
    %1196 = vmatpush1.msra.mxu0 0.0
    %1197 = vmatprep.subr.mxu0 0.0
    %1198 = vmatpush1.msra.mxu0 0.0
    %1199 = vmatprep.subr.mxu0 0.0
    %1200 = vmatpush1.msra.mxu0 0.0
    %1201 = vmatprep.subr.mxu0 0.0
    %1202 = vmatpush1.msra.mxu0 0.0
    %1203 = vmatprep.subr.mxu0 0.0
    %1204 = vmatpush1.msra.mxu0 0.0
    %1205 = vmatprep.subr.mxu0 0.0
    %1206 = vmatpush1.msra.mxu0 0.0
    %1207 = vmatprep.subr.mxu0 0.0
    %1208 = vmatpush1.msra.mxu0 0.0
    %1209 = vmatprep.subr.mxu0 0.0
    %1210 = vmatpush1.msra.mxu0 0.0
    %1211 = vmatprep.mubr.f32.mxu0 0.0
    %1212 = vmatmul.mubr.f32.gmra.mrb[0].mxu0 %v1142
    %v1213 = vpop.f32.mrb[0].mxu0
    %v1214 = vadd.f32 %v731, %v1213
    %v1215 = vpop.f32.mrb[0].mxu0
    %1216 = vmatprep.mubr.f32.mxu0 0.0
    %1217 = vmatmul.mubr.f32.gmra.mrb[0].mxu0 %v1145
    %v1218 = vpop.f32.mrb[0].mxu0
    %v1219 = vadd.f32 %v731, %v1218
    %v1220 = vpop.f32.mrb[0].mxu0
    %1221 = vdwg.mxu0
    %v1222 = vsub.f32 0.0, %v1214
    %v1223 = vsub.f32 0.0, %v1219
    %v1224 = vmul.f32 %v1222, 1.442695
    %v1225 = vpow.pop %v1224
    %v1226 = vmul.f32 %v1223, 1.442695
    %v1227 = vpow.pop %v1226
    %v1228 = vadd.f32 %v1225, 1.0
    %v1229 = vadd.f32 %v1227, 1.0
    %v1230 = vrcp.pop %v1228
    %v1231 = vmul.f32 1.0, %v1230
    %v1232 = vrcp.pop %v1229
    %v1233 = vmul.f32 1.0, %v1232
    %1236 = vrot.lane.b32.xlu0 %v1214, 96
    %v1237 = vpop.permute.xlu0 %1236
    %1238 = vrot.lane.b32.xlu0 %v1219, 96
    %v1239 = vpop.permute.xlu0 %1238
    %v1242 = vmul.f32 %v1231, %v1237
    %v1243 = vmul.f32 %v1233, %v1239
    %v1244 = vadd.f32 %v959, %v1242
    %v1245 = vadd.f32 %v964, %v1243
    %v1246 = vsel %vm546, %v1244, 0.0
    %1247 = vadd.xlane.f32.xlu0 %v1246
    %v1248 = vpop.xlane.xlu0 %1247
    %v1249 = vsel %vm546, %v1245, 0.0
    %1250 = vadd.xlane.f32.xlu0 %v1249
    %v1251 = vpop.xlane.xlu0 %1250
    %v1252 = vmul.f32 %v1248, %v843
    %v1253 = vmul.f32 %v1251, %v843
    %v1254 = vsub.f32 %v1244, %v1252
    %v1255 = vsub.f32 %v1245, %v1253
    %v1256 = vmul.f32 %v1254, %v1254
    %v1257 = vmul.f32 %v1255, %v1255
    %v1258 = vsel %vm546, %v1256, 0.0
    %1259 = vadd.xlane.f32.xlu0 %v1258
    %v1260 = vpop.xlane.xlu0 %1259
    %v1261 = vsel %vm546, %v1257, 0.0
    %1262 = vadd.xlane.f32.xlu0 %v1261
    %v1263 = vpop.xlane.xlu0 %1262
    %v1264 = vmul.f32 %v1260, %v843
    %v1265 = vmul.f32 %v1263, %v843
    %v1266 = vadd.f32 %v1264, 1e-05
    %v1267 = vadd.f32 %v1265, 1e-05
    %v1268 = vrsqrt.pop %v1266
    %v1269 = vrsqrt.pop %v1267
    %v1270 = vmul.f32 %v1254, %v1268
    %v1271 = vmul.f32 %v1255, %v1269
    %v1272 = vmul.f32 %v1270, %v867
    %v1273 = vmul.f32 %v1271, %v867
    %v1274 = vadd.f32 %v1272, %v873
    %v1275 = vadd.f32 %v1273, %v873
    %1276 = vset.pattern.permute.xlu0 33
    %1277 = vperm.xlu0 %1276, %v876
    %v1278 = vpop.permute.xlu0 %1277
    %1280 = vset.pattern.permute.xlu0 33
    %1281 = vperm.xlu0 %1280, %v877
    %v1282 = vpop.permute.xlu0 %1281
    %v1284 = vmul.f32 %v1278, %v1274
    %v1285 = vmul.f32 %v1282, %v1275
    %v1286 = vadd.f32 %v888, %v1284
    %v1287 = vadd.f32 %v889, %v1285
    %v1288 = vld [vmem:[%s1 + $0x98] sm:$0xff]
    %v1289 = vld [vmem:[%s1 + $0xa0] sm:$0xff]
    %1290 = vmatprep.subr.mxu0 0.0
    %1291 = vmatpush1.msra.mxu0 %v1288
    %1292 = vmatprep.subr.mxu0 0.0
    %1293 = vmatpush1.msra.mxu0 %v1289
    %1294 = vmatprep.subr.mxu0 0.0
    %1295 = vmatpush1.msra.mxu0 0.0
    %1296 = vmatprep.subr.mxu0 0.0
    %1297 = vmatpush1.msra.mxu0 0.0
    %1298 = vmatprep.subr.mxu0 0.0
    %1299 = vmatpush1.msra.mxu0 0.0
    %1300 = vmatprep.subr.mxu0 0.0
    %1301 = vmatpush1.msra.mxu0 0.0
    %1302 = vmatprep.subr.mxu0 0.0
    %1303 = vmatpush1.msra.mxu0 0.0
    %1304 = vmatprep.subr.mxu0 0.0
    %1305 = vmatpush1.msra.mxu0 0.0
    %1306 = vmatprep.subr.mxu0 0.0
    %1307 = vmatpush1.msra.mxu0 0.0
    %1308 = vmatprep.subr.mxu0 0.0
    %1309 = vmatpush1.msra.mxu0 0.0
    %1310 = vmatprep.subr.mxu0 0.0
    %1311 = vmatpush1.msra.mxu0 0.0
    %1312 = vmatprep.subr.mxu0 0.0
    %1313 = vmatpush1.msra.mxu0 0.0
    %1314 = vmatprep.subr.mxu0 0.0
    %1315 = vmatpush1.msra.mxu0 0.0
    %1316 = vmatprep.subr.mxu0 0.0
    %1317 = vmatpush1.msra.mxu0 0.0
    %1318 = vmatprep.subr.mxu0 0.0
    %1319 = vmatpush1.msra.mxu0 0.0
    %1320 = vmatprep.subr.mxu0 0.0
    %1321 = vmatpush1.msra.mxu0 0.0
    %1322 = vmatprep.subr.mxu0 0.0
    %1323 = vmatpush1.msra.mxu0 0.0
    %1324 = vmatprep.subr.mxu0 0.0
    %1325 = vmatpush1.msra.mxu0 0.0
    %1326 = vmatprep.subr.mxu0 0.0
    %1327 = vmatpush1.msra.mxu0 0.0
    %1328 = vmatprep.subr.mxu0 0.0
    %1329 = vmatpush1.msra.mxu0 0.0
    %1330 = vmatprep.subr.mxu0 0.0
    %1331 = vmatpush1.msra.mxu0 0.0
    %1332 = vmatprep.subr.mxu0 0.0
    %1333 = vmatpush1.msra.mxu0 0.0
    %1334 = vmatprep.subr.mxu0 0.0
    %1335 = vmatpush1.msra.mxu0 0.0
    %1336 = vmatprep.subr.mxu0 0.0
    %1337 = vmatpush1.msra.mxu0 0.0
    %1338 = vmatprep.subr.mxu0 0.0
    %1339 = vmatpush1.msra.mxu0 0.0
    %1340 = vmatprep.subr.mxu0 0.0
    %1341 = vmatpush1.msra.mxu0 0.0
    %1342 = vmatprep.subr.mxu0 0.0
    %1343 = vmatpush1.msra.mxu0 0.0
    %1344 = vmatprep.subr.mxu0 0.0
    %1345 = vmatpush1.msra.mxu0 0.0
    %1346 = vmatprep.subr.mxu0 0.0
    %1347 = vmatpush1.msra.mxu0 0.0
    %1348 = vmatprep.subr.mxu0 0.0
    %1349 = vmatpush1.msra.mxu0 0.0
    %1350 = vmatprep.subr.mxu0 0.0
    %1351 = vmatpush1.msra.mxu0 0.0
    %1352 = vmatprep.subr.mxu0 0.0
    %1353 = vmatpush1.msra.mxu0 0.0
    %1354 = vmatprep.mubr.f32.mxu0 0.0
    %1355 = vmatmul.mubr.f32.gmra.mrb[0].mxu0 %v462
    %v1356 = vpop.f32.mrb[0].mxu0
    %v1357 = vadd.f32 0.0, %v1356
    %v1358 = vpop.f32.mrb[0].mxu0
    %1359 = vmatprep.mubr.f32.mxu0 0.0
    %1360 = vmatmul.mubr.f32.gmra.mrb[0].mxu0 %v465
    %v1361 = vpop.f32.mrb[0].mxu0
    %v1362 = vadd.f32 0.0, %v1361
    %v1363 = vpop.f32.mrb[0].mxu0
    %1364 = vdwg.mxu0
    %v1366 = vsel %vm546, %v1357, 0
    %v1369 = vsel %vm546, %v1362, 0
    %1371 = vmatprep.subr.mxu0 0.0
    %1372 = vmatpush1.msra.mxu0 %v442
    %1373 = vmatprep.subr.mxu0 0.0
    %1374 = vmatpush1.msra.mxu0 %v443
    %1375 = vmatprep.subr.mxu0 0.0
    %1376 = vmatpush1.msra.mxu0 %v444
    %1377 = vmatprep.subr.mxu0 0.0
    %1378 = vmatpush1.msra.mxu0 %v445
    %1379 = vmatprep.subr.mxu0 0.0
    %1380 = vmatpush1.msra.mxu0 0.0
    %1381 = vmatprep.subr.mxu0 0.0
    %1382 = vmatpush1.msra.mxu0 0.0
    %1383 = vmatprep.subr.mxu0 0.0
    %1384 = vmatpush1.msra.mxu0 0.0
    %1385 = vmatprep.subr.mxu0 0.0
    %1386 = vmatpush1.msra.mxu0 0.0
    %1387 = vmatprep.subr.mxu0 0.0
    %1388 = vmatpush1.msra.mxu0 0.0
    %1389 = vmatprep.subr.mxu0 0.0
    %1390 = vmatpush1.msra.mxu0 0.0
    %1391 = vmatprep.subr.mxu0 0.0
    %1392 = vmatpush1.msra.mxu0 0.0
    %1393 = vmatprep.subr.mxu0 0.0
    %1394 = vmatpush1.msra.mxu0 0.0
    %1395 = vmatprep.subr.mxu0 0.0
    %1396 = vmatpush1.msra.mxu0 0.0
    %1397 = vmatprep.subr.mxu0 0.0
    %1398 = vmatpush1.msra.mxu0 0.0
    %1399 = vmatprep.subr.mxu0 0.0
    %1400 = vmatpush1.msra.mxu0 0.0
    %1401 = vmatprep.subr.mxu0 0.0
    %1402 = vmatpush1.msra.mxu0 0.0
    %1403 = vmatprep.subr.mxu0 0.0
    %1404 = vmatpush1.msra.mxu0 0.0
    %1405 = vmatprep.subr.mxu0 0.0
    %1406 = vmatpush1.msra.mxu0 0.0
    %1407 = vmatprep.subr.mxu0 0.0
    %1408 = vmatpush1.msra.mxu0 0.0
    %1409 = vmatprep.subr.mxu0 0.0
    %1410 = vmatpush1.msra.mxu0 0.0
    %1411 = vmatprep.subr.mxu0 0.0
    %1412 = vmatpush1.msra.mxu0 0.0
    %1413 = vmatprep.subr.mxu0 0.0
    %1414 = vmatpush1.msra.mxu0 0.0
    %1415 = vmatprep.subr.mxu0 0.0
    %1416 = vmatpush1.msra.mxu0 0.0
    %1417 = vmatprep.subr.mxu0 0.0
    %1418 = vmatpush1.msra.mxu0 0.0
    %1419 = vmatprep.subr.mxu0 0.0
    %1420 = vmatpush1.msra.mxu0 0.0
    %1421 = vmatprep.subr.mxu0 0.0
    %1422 = vmatpush1.msra.mxu0 0.0
    %1423 = vmatprep.subr.mxu0 0.0
    %1424 = vmatpush1.msra.mxu0 0.0
    %1425 = vmatprep.subr.mxu0 0.0
    %1426 = vmatpush1.msra.mxu0 0.0
    %1427 = vmatprep.subr.mxu0 0.0
    %1428 = vmatpush1.msra.mxu0 0.0
    %1429 = vmatprep.subr.mxu0 0.0
    %1430 = vmatpush1.msra.mxu0 0.0
    %1431 = vmatprep.subr.mxu0 0.0
    %1432 = vmatpush1.msra.mxu0 0.0
    %1433 = vmatprep.subr.mxu0 0.0
    %1434 = vmatpush1.msra.mxu0 0.0
    %1435 = vmatprep.mubr.f32.mxu0 0.0
    %1436 = vmatmul.mubr.f32.gmra.mrb[0].mxu0 %v1366
    %v1437 = vpop.f32.mrb[0].mxu0
    %v1438 = vadd.f32 %v545, %v1437
    %v1439 = vpop.f32.mrb[0].mxu0
    %1440 = vmatprep.mubr.f32.mxu0 0.0
    %1441 = vmatmul.mubr.f32.gmra.mrb[0].mxu0 %v1369
    %v1442 = vpop.f32.mrb[0].mxu0
    %v1443 = vadd.f32 %v545, %v1442
    %v1444 = vpop.f32.mrb[0].mxu0
    %1445 = vdwg.mxu0
    %vm1446 = vcmp.gt.f32.partialorder %v1438, 0.0
    %vm1447 = vcmp.gt.f32.partialorder %v1443, 0.0
    %v1448 = vmin.f32 %v1438, 0.0
    %v1449 = vmin.f32 %v1443, 0.0
    %v1450 = vmul.f32 %v1448, 1.442695
    %v1451 = vpow.pop %v1450
    %v1452 = vmul.f32 %v1449, 1.442695
    %v1453 = vpow.pop %v1452
    %v1454 = vsub.f32 %v1451, 1.0
    %v1455 = vsub.f32 %v1453, 1.0
    %v1456 = vsel %vm1446, %v1438, %v1454
    %v1457 = vsel %vm1447, %v1443, %v1455
    %v1459 = vsel %vm125, %v1456, 0
    %v1462 = vsel %vm125, %v1457, 0
    %1464 = vmatprep.subr.mxu0 0.0
    %1465 = vmatpush1.msra.mxu0 %v447
    %1466 = vmatprep.subr.mxu0 0.0
    %1467 = vmatpush1.msra.mxu0 %v651
    %1468 = vmatprep.subr.mxu0 0.0
    %1469 = vmatpush1.msra.mxu0 0.0
    %1470 = vmatprep.subr.mxu0 0.0
    %1471 = vmatpush1.msra.mxu0 0.0
    %1472 = vmatprep.subr.mxu0 0.0
    %1473 = vmatpush1.msra.mxu0 0.0
    %1474 = vmatprep.subr.mxu0 0.0
    %1475 = vmatpush1.msra.mxu0 0.0
    %1476 = vmatprep.subr.mxu0 0.0
    %1477 = vmatpush1.msra.mxu0 0.0
    %1478 = vmatprep.subr.mxu0 0.0
    %1479 = vmatpush1.msra.mxu0 0.0
    %1480 = vmatprep.subr.mxu0 0.0
    %1481 = vmatpush1.msra.mxu0 0.0
    %1482 = vmatprep.subr.mxu0 0.0
    %1483 = vmatpush1.msra.mxu0 0.0
    %1484 = vmatprep.subr.mxu0 0.0
    %1485 = vmatpush1.msra.mxu0 0.0
    %1486 = vmatprep.subr.mxu0 0.0
    %1487 = vmatpush1.msra.mxu0 0.0
    %1488 = vmatprep.subr.mxu0 0.0
    %1489 = vmatpush1.msra.mxu0 0.0
    %1490 = vmatprep.subr.mxu0 0.0
    %1491 = vmatpush1.msra.mxu0 0.0
    %1492 = vmatprep.subr.mxu0 0.0
    %1493 = vmatpush1.msra.mxu0 0.0
    %1494 = vmatprep.subr.mxu0 0.0
    %1495 = vmatpush1.msra.mxu0 0.0
    %1496 = vmatprep.subr.mxu0 0.0
    %1497 = vmatpush1.msra.mxu0 0.0
    %1498 = vmatprep.subr.mxu0 0.0
    %1499 = vmatpush1.msra.mxu0 0.0
    %1500 = vmatprep.subr.mxu0 0.0
    %1501 = vmatpush1.msra.mxu0 0.0
    %1502 = vmatprep.subr.mxu0 0.0
    %1503 = vmatpush1.msra.mxu0 0.0
    %1504 = vmatprep.subr.mxu0 0.0
    %1505 = vmatpush1.msra.mxu0 0.0
    %1506 = vmatprep.subr.mxu0 0.0
    %1507 = vmatpush1.msra.mxu0 0.0
    %1508 = vmatprep.subr.mxu0 0.0
    %1509 = vmatpush1.msra.mxu0 0.0
    %1510 = vmatprep.subr.mxu0 0.0
    %1511 = vmatpush1.msra.mxu0 0.0
    %1512 = vmatprep.subr.mxu0 0.0
    %1513 = vmatpush1.msra.mxu0 0.0
    %1514 = vmatprep.subr.mxu0 0.0
    %1515 = vmatpush1.msra.mxu0 0.0
    %1516 = vmatprep.subr.mxu0 0.0
    %1517 = vmatpush1.msra.mxu0 0.0
    %1518 = vmatprep.subr.mxu0 0.0
    %1519 = vmatpush1.msra.mxu0 0.0
    %1520 = vmatprep.subr.mxu0 0.0
    %1521 = vmatpush1.msra.mxu0 0.0
    %1522 = vmatprep.subr.mxu0 0.0
    %1523 = vmatpush1.msra.mxu0 0.0
    %1524 = vmatprep.subr.mxu0 0.0
    %1525 = vmatpush1.msra.mxu0 0.0
    %1526 = vmatprep.subr.mxu0 0.0
    %1527 = vmatpush1.msra.mxu0 0.0
    %1528 = vmatprep.mubr.f32.mxu0 0.0
    %1529 = vmatmul.mubr.f32.gmra.mrb[0].mxu0 %v1459
    %v1530 = vpop.f32.mrb[0].mxu0
    %v1531 = vadd.f32 %v643, %v1530
    %v1532 = vpop.f32.mrb[0].mxu0
    %1533 = vmatprep.mubr.f32.mxu0 0.0
    %1534 = vmatmul.mubr.f32.gmra.mrb[0].mxu0 %v1462
    %v1535 = vpop.f32.mrb[0].mxu0
    %v1536 = vadd.f32 %v643, %v1535
    %v1537 = vpop.f32.mrb[0].mxu0
    %1538 = vdwg.mxu0
    %v1540 = vsel %vm546, %v1531, 0
    %v1543 = vsel %vm546, %v1536, 0
    %1545 = vmatprep.subr.mxu0 0.0
    %1546 = vmatpush1.msra.mxu0 %v450
    %1547 = vmatprep.subr.mxu0 0.0
    %1548 = vmatpush1.msra.mxu0 %v451
    %1549 = vmatprep.subr.mxu0 0.0
    %1550 = vmatpush1.msra.mxu0 %v452
    %1551 = vmatprep.subr.mxu0 0.0
    %1552 = vmatpush1.msra.mxu0 %v453
    %1553 = vmatprep.subr.mxu0 0.0
    %1554 = vmatpush1.msra.mxu0 0.0
    %1555 = vmatprep.subr.mxu0 0.0
    %1556 = vmatpush1.msra.mxu0 0.0
    %1557 = vmatprep.subr.mxu0 0.0
    %1558 = vmatpush1.msra.mxu0 0.0
    %1559 = vmatprep.subr.mxu0 0.0
    %1560 = vmatpush1.msra.mxu0 0.0
    %1561 = vmatprep.subr.mxu0 0.0
    %1562 = vmatpush1.msra.mxu0 0.0
    %1563 = vmatprep.subr.mxu0 0.0
    %1564 = vmatpush1.msra.mxu0 0.0
    %1565 = vmatprep.subr.mxu0 0.0
    %1566 = vmatpush1.msra.mxu0 0.0
    %1567 = vmatprep.subr.mxu0 0.0
    %1568 = vmatpush1.msra.mxu0 0.0
    %1569 = vmatprep.subr.mxu0 0.0
    %1570 = vmatpush1.msra.mxu0 0.0
    %1571 = vmatprep.subr.mxu0 0.0
    %1572 = vmatpush1.msra.mxu0 0.0
    %1573 = vmatprep.subr.mxu0 0.0
    %1574 = vmatpush1.msra.mxu0 0.0
    %1575 = vmatprep.subr.mxu0 0.0
    %1576 = vmatpush1.msra.mxu0 0.0
    %1577 = vmatprep.subr.mxu0 0.0
    %1578 = vmatpush1.msra.mxu0 0.0
    %1579 = vmatprep.subr.mxu0 0.0
    %1580 = vmatpush1.msra.mxu0 0.0
    %1581 = vmatprep.subr.mxu0 0.0
    %1582 = vmatpush1.msra.mxu0 0.0
    %1583 = vmatprep.subr.mxu0 0.0
    %1584 = vmatpush1.msra.mxu0 0.0
    %1585 = vmatprep.subr.mxu0 0.0
    %1586 = vmatpush1.msra.mxu0 0.0
    %1587 = vmatprep.subr.mxu0 0.0
    %1588 = vmatpush1.msra.mxu0 0.0
    %1589 = vmatprep.subr.mxu0 0.0
    %1590 = vmatpush1.msra.mxu0 0.0
    %1591 = vmatprep.subr.mxu0 0.0
    %1592 = vmatpush1.msra.mxu0 0.0
    %1593 = vmatprep.subr.mxu0 0.0
    %1594 = vmatpush1.msra.mxu0 0.0
    %1595 = vmatprep.subr.mxu0 0.0
    %1596 = vmatpush1.msra.mxu0 0.0
    %1597 = vmatprep.subr.mxu0 0.0
    %1598 = vmatpush1.msra.mxu0 0.0
    %1599 = vmatprep.subr.mxu0 0.0
    %1600 = vmatpush1.msra.mxu0 0.0
    %1601 = vmatprep.subr.mxu0 0.0
    %1602 = vmatpush1.msra.mxu0 0.0
    %1603 = vmatprep.subr.mxu0 0.0
    %1604 = vmatpush1.msra.mxu0 0.0
    %1605 = vmatprep.subr.mxu0 0.0
    %1606 = vmatpush1.msra.mxu0 0.0
    %1607 = vmatprep.subr.mxu0 0.0
    %1608 = vmatpush1.msra.mxu0 0.0
    %1609 = vmatprep.mubr.f32.mxu0 0.0
    %1610 = vmatmul.mubr.f32.gmra.mrb[0].mxu0 %v1540
    %v1611 = vpop.f32.mrb[0].mxu0
    %v1612 = vadd.f32 %v731, %v1611
    %v1613 = vpop.f32.mrb[0].mxu0
    %1614 = vmatprep.mubr.f32.mxu0 0.0
    %1615 = vmatmul.mubr.f32.gmra.mrb[0].mxu0 %v1543
    %v1616 = vpop.f32.mrb[0].mxu0
    %v1617 = vadd.f32 %v731, %v1616
    %v1618 = vpop.f32.mrb[0].mxu0
    %1619 = vdwg.mxu0
    %v1620 = vsub.f32 0.0, %v1612
    %v1621 = vsub.f32 0.0, %v1617
    %v1622 = vmul.f32 %v1620, 1.442695
    %v1623 = vpow.pop %v1622
    %v1624 = vmul.f32 %v1621, 1.442695
    %v1625 = vpow.pop %v1624
    %v1626 = vadd.f32 %v1623, 1.0
    %v1627 = vadd.f32 %v1625, 1.0
    %v1628 = vrcp.pop %v1626
    %v1629 = vmul.f32 1.0, %v1628
    %v1630 = vrcp.pop %v1627
    %v1631 = vmul.f32 1.0, %v1630
    %1634 = vrot.lane.b32.xlu0 %v1612, 96
    %v1635 = vpop.permute.xlu0 %1634
    %1636 = vrot.lane.b32.xlu0 %v1617, 96
    %v1637 = vpop.permute.xlu0 %1636
    %v1640 = vmul.f32 %v1629, %v1635
    %v1641 = vmul.f32 %v1631, %v1637
    %v1642 = vadd.f32 %v1357, %v1640
    %v1643 = vadd.f32 %v1362, %v1641
    %v1644 = vsel %vm546, %v1642, 0.0
    %1645 = vadd.xlane.f32.xlu0 %v1644
    %v1646 = vpop.xlane.xlu0 %1645
    %v1647 = vsel %vm546, %v1643, 0.0
    %1648 = vadd.xlane.f32.xlu0 %v1647
    %v1649 = vpop.xlane.xlu0 %1648
    %v1650 = vmul.f32 %v1646, %v843
    %v1651 = vmul.f32 %v1649, %v843
    %v1652 = vsub.f32 %v1642, %v1650
    %v1653 = vsub.f32 %v1643, %v1651
    %v1654 = vmul.f32 %v1652, %v1652
    %v1655 = vmul.f32 %v1653, %v1653
    %v1656 = vsel %vm546, %v1654, 0.0
    %1657 = vadd.xlane.f32.xlu0 %v1656
    %v1658 = vpop.xlane.xlu0 %1657
    %v1659 = vsel %vm546, %v1655, 0.0
    %1660 = vadd.xlane.f32.xlu0 %v1659
    %v1661 = vpop.xlane.xlu0 %1660
    %v1662 = vmul.f32 %v1658, %v843
    %v1663 = vmul.f32 %v1661, %v843
    %v1664 = vadd.f32 %v1662, 1e-05
    %v1665 = vadd.f32 %v1663, 1e-05
    %v1666 = vrsqrt.pop %v1664
    %v1667 = vrsqrt.pop %v1665
    %v1668 = vmul.f32 %v1652, %v1666
    %v1669 = vmul.f32 %v1653, %v1667
    %v1670 = vmul.f32 %v1668, %v867
    %v1671 = vmul.f32 %v1669, %v867
    %v1672 = vadd.f32 %v1670, %v873
    %v1673 = vadd.f32 %v1671, %v873
    %1674 = vset.pattern.permute.xlu0 34
    %1675 = vperm.xlu0 %1674, %v876
    %v1676 = vpop.permute.xlu0 %1675
    %1678 = vset.pattern.permute.xlu0 34
    %1679 = vperm.xlu0 %1678, %v877
    %v1680 = vpop.permute.xlu0 %1679
    %v1682 = vmul.f32 %v1676, %v1672
    %v1683 = vmul.f32 %v1680, %v1673
    %v1684 = vadd.f32 %v1286, %v1682
    %v1685 = vadd.f32 %v1287, %v1683
    %v1686 = vld [vmem:[%s1 + $0xa8] sm:$0xff]
    %v1687 = vld [vmem:[%s1 + $0xb0] sm:$0xff]
    %1688 = vmatprep.subr.mxu0 0.0
    %1689 = vmatpush1.msra.mxu0 %v1686
    %1690 = vmatprep.subr.mxu0 0.0
    %1691 = vmatpush1.msra.mxu0 %v1687
    %1692 = vmatprep.subr.mxu0 0.0
    %1693 = vmatpush1.msra.mxu0 0.0
    %1694 = vmatprep.subr.mxu0 0.0
    %1695 = vmatpush1.msra.mxu0 0.0
    %1696 = vmatprep.subr.mxu0 0.0
    %1697 = vmatpush1.msra.mxu0 0.0
    %1698 = vmatprep.subr.mxu0 0.0
    %1699 = vmatpush1.msra.mxu0 0.0
    %1700 = vmatprep.subr.mxu0 0.0
    %1701 = vmatpush1.msra.mxu0 0.0
    %1702 = vmatprep.subr.mxu0 0.0
    %1703 = vmatpush1.msra.mxu0 0.0
    %1704 = vmatprep.subr.mxu0 0.0
    %1705 = vmatpush1.msra.mxu0 0.0
    %1706 = vmatprep.subr.mxu0 0.0
    %1707 = vmatpush1.msra.mxu0 0.0
    %1708 = vmatprep.subr.mxu0 0.0
    %1709 = vmatpush1.msra.mxu0 0.0
    %1710 = vmatprep.subr.mxu0 0.0
    %1711 = vmatpush1.msra.mxu0 0.0
    %1712 = vmatprep.subr.mxu0 0.0
    %1713 = vmatpush1.msra.mxu0 0.0
    %1714 = vmatprep.subr.mxu0 0.0
    %1715 = vmatpush1.msra.mxu0 0.0
    %1716 = vmatprep.subr.mxu0 0.0
    %1717 = vmatpush1.msra.mxu0 0.0
    %1718 = vmatprep.subr.mxu0 0.0
    %1719 = vmatpush1.msra.mxu0 0.0
    %1720 = vmatprep.subr.mxu0 0.0
    %1721 = vmatpush1.msra.mxu0 0.0
    %1722 = vmatprep.subr.mxu0 0.0
    %1723 = vmatpush1.msra.mxu0 0.0
    %1724 = vmatprep.subr.mxu0 0.0
    %1725 = vmatpush1.msra.mxu0 0.0
    %1726 = vmatprep.subr.mxu0 0.0
    %1727 = vmatpush1.msra.mxu0 0.0
    %1728 = vmatprep.subr.mxu0 0.0
    %1729 = vmatpush1.msra.mxu0 0.0
    %1730 = vmatprep.subr.mxu0 0.0
    %1731 = vmatpush1.msra.mxu0 0.0
    %1732 = vmatprep.subr.mxu0 0.0
    %1733 = vmatpush1.msra.mxu0 0.0
    %1734 = vmatprep.subr.mxu0 0.0
    %1735 = vmatpush1.msra.mxu0 0.0
    %1736 = vmatprep.subr.mxu0 0.0
    %1737 = vmatpush1.msra.mxu0 0.0
    %1738 = vmatprep.subr.mxu0 0.0
    %1739 = vmatpush1.msra.mxu0 0.0
    %1740 = vmatprep.subr.mxu0 0.0
    %1741 = vmatpush1.msra.mxu0 0.0
    %1742 = vmatprep.subr.mxu0 0.0
    %1743 = vmatpush1.msra.mxu0 0.0
    %1744 = vmatprep.subr.mxu0 0.0
    %1745 = vmatpush1.msra.mxu0 0.0
    %1746 = vmatprep.subr.mxu0 0.0
    %1747 = vmatpush1.msra.mxu0 0.0
    %1748 = vmatprep.subr.mxu0 0.0
    %1749 = vmatpush1.msra.mxu0 0.0
    %1750 = vmatprep.subr.mxu0 0.0
    %1751 = vmatpush1.msra.mxu0 0.0
    %1752 = vmatprep.mubr.f32.mxu0 0.0
    %1753 = vmatmul.mubr.f32.gmra.mrb[0].mxu0 %v462
    %v1754 = vpop.f32.mrb[0].mxu0
    %v1755 = vadd.f32 0.0, %v1754
    %v1756 = vpop.f32.mrb[0].mxu0
    %1757 = vmatprep.mubr.f32.mxu0 0.0
    %1758 = vmatmul.mubr.f32.gmra.mrb[0].mxu0 %v465
    %v1759 = vpop.f32.mrb[0].mxu0
    %v1760 = vadd.f32 0.0, %v1759
    %v1761 = vpop.f32.mrb[0].mxu0
    %1762 = vdwg.mxu0
    %v1764 = vsel %vm546, %v1755, 0
    %v1767 = vsel %vm546, %v1760, 0
    %1769 = vmatprep.subr.mxu0 0.0
    %1770 = vmatpush1.msra.mxu0 %v442
    %1771 = vmatprep.subr.mxu0 0.0
    %1772 = vmatpush1.msra.mxu0 %v443
    %1773 = vmatprep.subr.mxu0 0.0
    %1774 = vmatpush1.msra.mxu0 %v444
    %1775 = vmatprep.subr.mxu0 0.0
    %1776 = vmatpush1.msra.mxu0 %v445
    %1777 = vmatprep.subr.mxu0 0.0
    %1778 = vmatpush1.msra.mxu0 0.0
    %1779 = vmatprep.subr.mxu0 0.0
    %1780 = vmatpush1.msra.mxu0 0.0
    %1781 = vmatprep.subr.mxu0 0.0
    %1782 = vmatpush1.msra.mxu0 0.0
    %1783 = vmatprep.subr.mxu0 0.0
    %1784 = vmatpush1.msra.mxu0 0.0
    %1785 = vmatprep.subr.mxu0 0.0
    %1786 = vmatpush1.msra.mxu0 0.0
    %1787 = vmatprep.subr.mxu0 0.0
    %1788 = vmatpush1.msra.mxu0 0.0
    %1789 = vmatprep.subr.mxu0 0.0
    %1790 = vmatpush1.msra.mxu0 0.0
    %1791 = vmatprep.subr.mxu0 0.0
    %1792 = vmatpush1.msra.mxu0 0.0
    %1793 = vmatprep.subr.mxu0 0.0
    %1794 = vmatpush1.msra.mxu0 0.0
    %1795 = vmatprep.subr.mxu0 0.0
    %1796 = vmatpush1.msra.mxu0 0.0
    %1797 = vmatprep.subr.mxu0 0.0
    %1798 = vmatpush1.msra.mxu0 0.0
    %1799 = vmatprep.subr.mxu0 0.0
    %1800 = vmatpush1.msra.mxu0 0.0
    %1801 = vmatprep.subr.mxu0 0.0
    %1802 = vmatpush1.msra.mxu0 0.0
    %1803 = vmatprep.subr.mxu0 0.0
    %1804 = vmatpush1.msra.mxu0 0.0
    %1805 = vmatprep.subr.mxu0 0.0
    %1806 = vmatpush1.msra.mxu0 0.0
    %1807 = vmatprep.subr.mxu0 0.0
    %1808 = vmatpush1.msra.mxu0 0.0
    %1809 = vmatprep.subr.mxu0 0.0
    %1810 = vmatpush1.msra.mxu0 0.0
    %1811 = vmatprep.subr.mxu0 0.0
    %1812 = vmatpush1.msra.mxu0 0.0
    %1813 = vmatprep.subr.mxu0 0.0
    %1814 = vmatpush1.msra.mxu0 0.0
    %1815 = vmatprep.subr.mxu0 0.0
    %1816 = vmatpush1.msra.mxu0 0.0
    %1817 = vmatprep.subr.mxu0 0.0
    %1818 = vmatpush1.msra.mxu0 0.0
    %1819 = vmatprep.subr.mxu0 0.0
    %1820 = vmatpush1.msra.mxu0 0.0
    %1821 = vmatprep.subr.mxu0 0.0
    %1822 = vmatpush1.msra.mxu0 0.0
    %1823 = vmatprep.subr.mxu0 0.0
    %1824 = vmatpush1.msra.mxu0 0.0
    %1825 = vmatprep.subr.mxu0 0.0
    %1826 = vmatpush1.msra.mxu0 0.0
    %1827 = vmatprep.subr.mxu0 0.0
    %1828 = vmatpush1.msra.mxu0 0.0
    %1829 = vmatprep.subr.mxu0 0.0
    %1830 = vmatpush1.msra.mxu0 0.0
    %1831 = vmatprep.subr.mxu0 0.0
    %1832 = vmatpush1.msra.mxu0 0.0
    %1833 = vmatprep.mubr.f32.mxu0 0.0
    %1834 = vmatmul.mubr.f32.gmra.mrb[0].mxu0 %v1764
    %v1835 = vpop.f32.mrb[0].mxu0
    %v1836 = vadd.f32 %v545, %v1835
    %v1837 = vpop.f32.mrb[0].mxu0
    %1838 = vmatprep.mubr.f32.mxu0 0.0
    %1839 = vmatmul.mubr.f32.gmra.mrb[0].mxu0 %v1767
    %v1840 = vpop.f32.mrb[0].mxu0
    %v1841 = vadd.f32 %v545, %v1840
    %v1842 = vpop.f32.mrb[0].mxu0
    %1843 = vdwg.mxu0
    %vm1844 = vcmp.gt.f32.partialorder %v1836, 0.0
    %vm1845 = vcmp.gt.f32.partialorder %v1841, 0.0
    %v1846 = vmin.f32 %v1836, 0.0
    %v1847 = vmin.f32 %v1841, 0.0
    %v1848 = vmul.f32 %v1846, 1.442695
    %v1849 = vpow.pop %v1848
    %v1850 = vmul.f32 %v1847, 1.442695
    %v1851 = vpow.pop %v1850
    %v1852 = vsub.f32 %v1849, 1.0
    %v1853 = vsub.f32 %v1851, 1.0
    %v1854 = vsel %vm1844, %v1836, %v1852
    %v1855 = vsel %vm1845, %v1841, %v1853
    %v1857 = vsel %vm125, %v1854, 0
    %v1860 = vsel %vm125, %v1855, 0
    %1862 = vmatprep.subr.mxu0 0.0
    %1863 = vmatpush1.msra.mxu0 %v447
    %1864 = vmatprep.subr.mxu0 0.0
    %1865 = vmatpush1.msra.mxu0 %v651
    %1866 = vmatprep.subr.mxu0 0.0
    %1867 = vmatpush1.msra.mxu0 0.0
    %1868 = vmatprep.subr.mxu0 0.0
    %1869 = vmatpush1.msra.mxu0 0.0
    %1870 = vmatprep.subr.mxu0 0.0
    %1871 = vmatpush1.msra.mxu0 0.0
    %1872 = vmatprep.subr.mxu0 0.0
    %1873 = vmatpush1.msra.mxu0 0.0
    %1874 = vmatprep.subr.mxu0 0.0
    %1875 = vmatpush1.msra.mxu0 0.0
    %1876 = vmatprep.subr.mxu0 0.0
    %1877 = vmatpush1.msra.mxu0 0.0
    %1878 = vmatprep.subr.mxu0 0.0
    %1879 = vmatpush1.msra.mxu0 0.0
    %1880 = vmatprep.subr.mxu0 0.0
    %1881 = vmatpush1.msra.mxu0 0.0
    %1882 = vmatprep.subr.mxu0 0.0
    %1883 = vmatpush1.msra.mxu0 0.0
    %1884 = vmatprep.subr.mxu0 0.0
    %1885 = vmatpush1.msra.mxu0 0.0
    %1886 = vmatprep.subr.mxu0 0.0
    %1887 = vmatpush1.msra.mxu0 0.0
    %1888 = vmatprep.subr.mxu0 0.0
    %1889 = vmatpush1.msra.mxu0 0.0
    %1890 = vmatprep.subr.mxu0 0.0
    %1891 = vmatpush1.msra.mxu0 0.0
    %1892 = vmatprep.subr.mxu0 0.0
    %1893 = vmatpush1.msra.mxu0 0.0
    %1894 = vmatprep.subr.mxu0 0.0
    %1895 = vmatpush1.msra.mxu0 0.0
    %1896 = vmatprep.subr.mxu0 0.0
    %1897 = vmatpush1.msra.mxu0 0.0
    %1898 = vmatprep.subr.mxu0 0.0
    %1899 = vmatpush1.msra.mxu0 0.0
    %1900 = vmatprep.subr.mxu0 0.0
    %1901 = vmatpush1.msra.mxu0 0.0
    %1902 = vmatprep.subr.mxu0 0.0
    %1903 = vmatpush1.msra.mxu0 0.0
    %1904 = vmatprep.subr.mxu0 0.0
    %1905 = vmatpush1.msra.mxu0 0.0
    %1906 = vmatprep.subr.mxu0 0.0
    %1907 = vmatpush1.msra.mxu0 0.0
    %1908 = vmatprep.subr.mxu0 0.0
    %1909 = vmatpush1.msra.mxu0 0.0
    %1910 = vmatprep.subr.mxu0 0.0
    %1911 = vmatpush1.msra.mxu0 0.0
    %1912 = vmatprep.subr.mxu0 0.0
    %1913 = vmatpush1.msra.mxu0 0.0
    %1914 = vmatprep.subr.mxu0 0.0
    %1915 = vmatpush1.msra.mxu0 0.0
    %1916 = vmatprep.subr.mxu0 0.0
    %1917 = vmatpush1.msra.mxu0 0.0
    %1918 = vmatprep.subr.mxu0 0.0
    %1919 = vmatpush1.msra.mxu0 0.0
    %1920 = vmatprep.subr.mxu0 0.0
    %1921 = vmatpush1.msra.mxu0 0.0
    %1922 = vmatprep.subr.mxu0 0.0
    %1923 = vmatpush1.msra.mxu0 0.0
    %1924 = vmatprep.subr.mxu0 0.0
    %1925 = vmatpush1.msra.mxu0 0.0
    %1926 = vmatprep.mubr.f32.mxu0 0.0
    %1927 = vmatmul.mubr.f32.gmra.mrb[0].mxu0 %v1857
    %v1928 = vpop.f32.mrb[0].mxu0
    %v1929 = vadd.f32 %v643, %v1928
    %v1930 = vpop.f32.mrb[0].mxu0
    %1931 = vmatprep.mubr.f32.mxu0 0.0
    %1932 = vmatmul.mubr.f32.gmra.mrb[0].mxu0 %v1860
    %v1933 = vpop.f32.mrb[0].mxu0
    %v1934 = vadd.f32 %v643, %v1933
    %v1935 = vpop.f32.mrb[0].mxu0
    %1936 = vdwg.mxu0
    %v1938 = vsel %vm546, %v1929, 0
    %v1941 = vsel %vm546, %v1934, 0
    %1943 = vmatprep.subr.mxu0 0.0
    %1944 = vmatpush1.msra.mxu0 %v450
    %1945 = vmatprep.subr.mxu0 0.0
    %1946 = vmatpush1.msra.mxu0 %v451
    %1947 = vmatprep.subr.mxu0 0.0
    %1948 = vmatpush1.msra.mxu0 %v452
    %1949 = vmatprep.subr.mxu0 0.0
    %1950 = vmatpush1.msra.mxu0 %v453
    %1951 = vmatprep.subr.mxu0 0.0
    %1952 = vmatpush1.msra.mxu0 0.0
    %1953 = vmatprep.subr.mxu0 0.0
    %1954 = vmatpush1.msra.mxu0 0.0
    %1955 = vmatprep.subr.mxu0 0.0
    %1956 = vmatpush1.msra.mxu0 0.0
    %1957 = vmatprep.subr.mxu0 0.0
    %1958 = vmatpush1.msra.mxu0 0.0
    %1959 = vmatprep.subr.mxu0 0.0
    %1960 = vmatpush1.msra.mxu0 0.0
    %1961 = vmatprep.subr.mxu0 0.0
    %1962 = vmatpush1.msra.mxu0 0.0
    %1963 = vmatprep.subr.mxu0 0.0
    %1964 = vmatpush1.msra.mxu0 0.0
    %1965 = vmatprep.subr.mxu0 0.0
    %1966 = vmatpush1.msra.mxu0 0.0
    %1967 = vmatprep.subr.mxu0 0.0
    %1968 = vmatpush1.msra.mxu0 0.0
    %1969 = vmatprep.subr.mxu0 0.0
    %1970 = vmatpush1.msra.mxu0 0.0
    %1971 = vmatprep.subr.mxu0 0.0
    %1972 = vmatpush1.msra.mxu0 0.0
    %1973 = vmatprep.subr.mxu0 0.0
    %1974 = vmatpush1.msra.mxu0 0.0
    %1975 = vmatprep.subr.mxu0 0.0
    %1976 = vmatpush1.msra.mxu0 0.0
    %1977 = vmatprep.subr.mxu0 0.0
    %1978 = vmatpush1.msra.mxu0 0.0
    %1979 = vmatprep.subr.mxu0 0.0
    %1980 = vmatpush1.msra.mxu0 0.0
    %1981 = vmatprep.subr.mxu0 0.0
    %1982 = vmatpush1.msra.mxu0 0.0
    %1983 = vmatprep.subr.mxu0 0.0
    %1984 = vmatpush1.msra.mxu0 0.0
    %1985 = vmatprep.subr.mxu0 0.0
    %1986 = vmatpush1.msra.mxu0 0.0
    %1987 = vmatprep.subr.mxu0 0.0
    %1988 = vmatpush1.msra.mxu0 0.0
    %1989 = vmatprep.subr.mxu0 0.0
    %1990 = vmatpush1.msra.mxu0 0.0
    %1991 = vmatprep.subr.mxu0 0.0
    %1992 = vmatpush1.msra.mxu0 0.0
    %1993 = vmatprep.subr.mxu0 0.0
    %1994 = vmatpush1.msra.mxu0 0.0
    %1995 = vmatprep.subr.mxu0 0.0
    %1996 = vmatpush1.msra.mxu0 0.0
    %1997 = vmatprep.subr.mxu0 0.0
    %1998 = vmatpush1.msra.mxu0 0.0
    %1999 = vmatprep.subr.mxu0 0.0
    %2000 = vmatpush1.msra.mxu0 0.0
    %2001 = vmatprep.subr.mxu0 0.0
    %2002 = vmatpush1.msra.mxu0 0.0
    %2003 = vmatprep.subr.mxu0 0.0
    %2004 = vmatpush1.msra.mxu0 0.0
    %2005 = vmatprep.subr.mxu0 0.0
    %2006 = vmatpush1.msra.mxu0 0.0
    %2007 = vmatprep.mubr.f32.mxu0 0.0
    %2008 = vmatmul.mubr.f32.gmra.mrb[0].mxu0 %v1938
    %v2009 = vpop.f32.mrb[0].mxu0
    %v2010 = vadd.f32 %v731, %v2009
    %v2011 = vpop.f32.mrb[0].mxu0
    %2012 = vmatprep.mubr.f32.mxu0 0.0
    %2013 = vmatmul.mubr.f32.gmra.mrb[0].mxu0 %v1941
    %v2014 = vpop.f32.mrb[0].mxu0
    %v2015 = vadd.f32 %v731, %v2014
    %v2016 = vpop.f32.mrb[0].mxu0
    %2017 = vdwg.mxu0
    %v2018 = vsub.f32 0.0, %v2010
    %v2019 = vsub.f32 0.0, %v2015
    %v2020 = vmul.f32 %v2018, 1.442695
    %v2021 = vpow.pop %v2020
    %v2022 = vmul.f32 %v2019, 1.442695
    %v2023 = vpow.pop %v2022
    %v2024 = vadd.f32 %v2021, 1.0
    %v2025 = vadd.f32 %v2023, 1.0
    %v2026 = vrcp.pop %v2024
    %v2027 = vmul.f32 1.0, %v2026
    %v2028 = vrcp.pop %v2025
    %v2029 = vmul.f32 1.0, %v2028
    %2032 = vrot.lane.b32.xlu0 %v2010, 96
    %v2033 = vpop.permute.xlu0 %2032
    %2034 = vrot.lane.b32.xlu0 %v2015, 96
    %v2035 = vpop.permute.xlu0 %2034
    %v2038 = vmul.f32 %v2027, %v2033
    %v2039 = vmul.f32 %v2029, %v2035
    %v2040 = vadd.f32 %v1755, %v2038
    %v2041 = vadd.f32 %v1760, %v2039
    %v2042 = vsel %vm546, %v2040, 0.0
    %2043 = vadd.xlane.f32.xlu0 %v2042
    %v2044 = vpop.xlane.xlu0 %2043
    %v2045 = vsel %vm546, %v2041, 0.0
    %2046 = vadd.xlane.f32.xlu0 %v2045
    %v2047 = vpop.xlane.xlu0 %2046
    %v2048 = vmul.f32 %v2044, %v843
    %v2049 = vmul.f32 %v2047, %v843
    %v2050 = vsub.f32 %v2040, %v2048
    %v2051 = vsub.f32 %v2041, %v2049
    %v2052 = vmul.f32 %v2050, %v2050
    %v2053 = vmul.f32 %v2051, %v2051
    %v2054 = vsel %vm546, %v2052, 0.0
    %2055 = vadd.xlane.f32.xlu0 %v2054
    %v2056 = vpop.xlane.xlu0 %2055
    %v2057 = vsel %vm546, %v2053, 0.0
    %2058 = vadd.xlane.f32.xlu0 %v2057
    %v2059 = vpop.xlane.xlu0 %2058
    %v2060 = vmul.f32 %v2056, %v843
    %v2061 = vmul.f32 %v2059, %v843
    %v2062 = vadd.f32 %v2060, 1e-05
    %v2063 = vadd.f32 %v2061, 1e-05
    %v2064 = vrsqrt.pop %v2062
    %v2065 = vrsqrt.pop %v2063
    %v2066 = vmul.f32 %v2050, %v2064
    %v2067 = vmul.f32 %v2051, %v2065
    %v2068 = vmul.f32 %v2066, %v867
    %v2069 = vmul.f32 %v2067, %v867
    %v2070 = vadd.f32 %v2068, %v873
    %v2071 = vadd.f32 %v2069, %v873
    %2072 = vset.pattern.permute.xlu0 35
    %2073 = vperm.xlu0 %2072, %v876
    %v2074 = vpop.permute.xlu0 %2073
    %2076 = vset.pattern.permute.xlu0 35
    %2077 = vperm.xlu0 %2076, %v877
    %v2078 = vpop.permute.xlu0 %2077
    %v2080 = vmul.f32 %v2074, %v2070
    %v2081 = vmul.f32 %v2078, %v2071
    %v2082 = vadd.f32 %v1684, %v2080
    %v2083 = vadd.f32 %v1685, %v2081
    %v2084 = vld [vmem:[%s1 + $0xb8] sm:$0xff]
    %v2085 = vld [vmem:[%s1 + $0xc0] sm:$0xff]
    %2086 = vmatprep.subr.mxu0 0.0
    %2087 = vmatpush1.msra.mxu0 %v2084
    %2088 = vmatprep.subr.mxu0 0.0
    %2089 = vmatpush1.msra.mxu0 %v2085
    %2090 = vmatprep.subr.mxu0 0.0
    %2091 = vmatpush1.msra.mxu0 0.0
    %2092 = vmatprep.subr.mxu0 0.0
    %2093 = vmatpush1.msra.mxu0 0.0
    %2094 = vmatprep.subr.mxu0 0.0
    %2095 = vmatpush1.msra.mxu0 0.0
    %2096 = vmatprep.subr.mxu0 0.0
    %2097 = vmatpush1.msra.mxu0 0.0
    %2098 = vmatprep.subr.mxu0 0.0
    %2099 = vmatpush1.msra.mxu0 0.0
    %2100 = vmatprep.subr.mxu0 0.0
    %2101 = vmatpush1.msra.mxu0 0.0
    %2102 = vmatprep.subr.mxu0 0.0
    %2103 = vmatpush1.msra.mxu0 0.0
    %2104 = vmatprep.subr.mxu0 0.0
    %2105 = vmatpush1.msra.mxu0 0.0
    %2106 = vmatprep.subr.mxu0 0.0
    %2107 = vmatpush1.msra.mxu0 0.0
    %2108 = vmatprep.subr.mxu0 0.0
    %2109 = vmatpush1.msra.mxu0 0.0
    %2110 = vmatprep.subr.mxu0 0.0
    %2111 = vmatpush1.msra.mxu0 0.0
    %2112 = vmatprep.subr.mxu0 0.0
    %2113 = vmatpush1.msra.mxu0 0.0
    %2114 = vmatprep.subr.mxu0 0.0
    %2115 = vmatpush1.msra.mxu0 0.0
    %2116 = vmatprep.subr.mxu0 0.0
    %2117 = vmatpush1.msra.mxu0 0.0
    %2118 = vmatprep.subr.mxu0 0.0
    %2119 = vmatpush1.msra.mxu0 0.0
    %2120 = vmatprep.subr.mxu0 0.0
    %2121 = vmatpush1.msra.mxu0 0.0
    %2122 = vmatprep.subr.mxu0 0.0
    %2123 = vmatpush1.msra.mxu0 0.0
    %2124 = vmatprep.subr.mxu0 0.0
    %2125 = vmatpush1.msra.mxu0 0.0
    %2126 = vmatprep.subr.mxu0 0.0
    %2127 = vmatpush1.msra.mxu0 0.0
    %2128 = vmatprep.subr.mxu0 0.0
    %2129 = vmatpush1.msra.mxu0 0.0
    %2130 = vmatprep.subr.mxu0 0.0
    %2131 = vmatpush1.msra.mxu0 0.0
    %2132 = vmatprep.subr.mxu0 0.0
    %2133 = vmatpush1.msra.mxu0 0.0
    %2134 = vmatprep.subr.mxu0 0.0
    %2135 = vmatpush1.msra.mxu0 0.0
    %2136 = vmatprep.subr.mxu0 0.0
    %2137 = vmatpush1.msra.mxu0 0.0
    %2138 = vmatprep.subr.mxu0 0.0
    %2139 = vmatpush1.msra.mxu0 0.0
    %2140 = vmatprep.subr.mxu0 0.0
    %2141 = vmatpush1.msra.mxu0 0.0
    %2142 = vmatprep.subr.mxu0 0.0
    %2143 = vmatpush1.msra.mxu0 0.0
    %2144 = vmatprep.subr.mxu0 0.0
    %2145 = vmatpush1.msra.mxu0 0.0
    %2146 = vmatprep.subr.mxu0 0.0
    %2147 = vmatpush1.msra.mxu0 0.0
    %2148 = vmatprep.subr.mxu0 0.0
    %2149 = vmatpush1.msra.mxu0 0.0
    %2150 = vmatprep.mubr.f32.mxu0 0.0
    %2151 = vmatmul.mubr.f32.gmra.mrb[0].mxu0 %v462
    %v2152 = vpop.f32.mrb[0].mxu0
    %v2153 = vadd.f32 0.0, %v2152
    %v2154 = vpop.f32.mrb[0].mxu0
    %2155 = vmatprep.mubr.f32.mxu0 0.0
    %2156 = vmatmul.mubr.f32.gmra.mrb[0].mxu0 %v465
    %v2157 = vpop.f32.mrb[0].mxu0
    %v2158 = vadd.f32 0.0, %v2157
    %v2159 = vpop.f32.mrb[0].mxu0
    %2160 = vdwg.mxu0
    %v2162 = vsel %vm546, %v2153, 0
    %v2165 = vsel %vm546, %v2158, 0
    %2167 = vmatprep.subr.mxu0 0.0
    %2168 = vmatpush1.msra.mxu0 %v442
    %2169 = vmatprep.subr.mxu0 0.0
    %2170 = vmatpush1.msra.mxu0 %v443
    %2171 = vmatprep.subr.mxu0 0.0
    %2172 = vmatpush1.msra.mxu0 %v444
    %2173 = vmatprep.subr.mxu0 0.0
    %2174 = vmatpush1.msra.mxu0 %v445
    %2175 = vmatprep.subr.mxu0 0.0
    %2176 = vmatpush1.msra.mxu0 0.0
    %2177 = vmatprep.subr.mxu0 0.0
    %2178 = vmatpush1.msra.mxu0 0.0
    %2179 = vmatprep.subr.mxu0 0.0
    %2180 = vmatpush1.msra.mxu0 0.0
    %2181 = vmatprep.subr.mxu0 0.0
    %2182 = vmatpush1.msra.mxu0 0.0
    %2183 = vmatprep.subr.mxu0 0.0
    %2184 = vmatpush1.msra.mxu0 0.0
    %2185 = vmatprep.subr.mxu0 0.0
    %2186 = vmatpush1.msra.mxu0 0.0
    %2187 = vmatprep.subr.mxu0 0.0
    %2188 = vmatpush1.msra.mxu0 0.0
    %2189 = vmatprep.subr.mxu0 0.0
    %2190 = vmatpush1.msra.mxu0 0.0
    %2191 = vmatprep.subr.mxu0 0.0
    %2192 = vmatpush1.msra.mxu0 0.0
    %2193 = vmatprep.subr.mxu0 0.0
    %2194 = vmatpush1.msra.mxu0 0.0
    %2195 = vmatprep.subr.mxu0 0.0
    %2196 = vmatpush1.msra.mxu0 0.0
    %2197 = vmatprep.subr.mxu0 0.0
    %2198 = vmatpush1.msra.mxu0 0.0
    %2199 = vmatprep.subr.mxu0 0.0
    %2200 = vmatpush1.msra.mxu0 0.0
    %2201 = vmatprep.subr.mxu0 0.0
    %2202 = vmatpush1.msra.mxu0 0.0
    %2203 = vmatprep.subr.mxu0 0.0
    %2204 = vmatpush1.msra.mxu0 0.0
    %2205 = vmatprep.subr.mxu0 0.0
    %2206 = vmatpush1.msra.mxu0 0.0
    %2207 = vmatprep.subr.mxu0 0.0
    %2208 = vmatpush1.msra.mxu0 0.0
    %2209 = vmatprep.subr.mxu0 0.0
    %2210 = vmatpush1.msra.mxu0 0.0
    %2211 = vmatprep.subr.mxu0 0.0
    %2212 = vmatpush1.msra.mxu0 0.0
    %2213 = vmatprep.subr.mxu0 0.0
    %2214 = vmatpush1.msra.mxu0 0.0
    %2215 = vmatprep.subr.mxu0 0.0
    %2216 = vmatpush1.msra.mxu0 0.0
    %2217 = vmatprep.subr.mxu0 0.0
    %2218 = vmatpush1.msra.mxu0 0.0
    %2219 = vmatprep.subr.mxu0 0.0
    %2220 = vmatpush1.msra.mxu0 0.0
    %2221 = vmatprep.subr.mxu0 0.0
    %2222 = vmatpush1.msra.mxu0 0.0
    %2223 = vmatprep.subr.mxu0 0.0
    %2224 = vmatpush1.msra.mxu0 0.0
    %2225 = vmatprep.subr.mxu0 0.0
    %2226 = vmatpush1.msra.mxu0 0.0
    %2227 = vmatprep.subr.mxu0 0.0
    %2228 = vmatpush1.msra.mxu0 0.0
    %2229 = vmatprep.subr.mxu0 0.0
    %2230 = vmatpush1.msra.mxu0 0.0
    %2231 = vmatprep.mubr.f32.mxu0 0.0
    %2232 = vmatmul.mubr.f32.gmra.mrb[0].mxu0 %v2162
    %v2233 = vpop.f32.mrb[0].mxu0
    %v2234 = vadd.f32 %v545, %v2233
    %v2235 = vpop.f32.mrb[0].mxu0
    %2236 = vmatprep.mubr.f32.mxu0 0.0
    %2237 = vmatmul.mubr.f32.gmra.mrb[0].mxu0 %v2165
    %v2238 = vpop.f32.mrb[0].mxu0
    %v2239 = vadd.f32 %v545, %v2238
    %v2240 = vpop.f32.mrb[0].mxu0
    %2241 = vdwg.mxu0
    %vm2242 = vcmp.gt.f32.partialorder %v2234, 0.0
    %vm2243 = vcmp.gt.f32.partialorder %v2239, 0.0
    %v2244 = vmin.f32 %v2234, 0.0
    %v2245 = vmin.f32 %v2239, 0.0
    %v2246 = vmul.f32 %v2244, 1.442695
    %v2247 = vpow.pop %v2246
    %v2248 = vmul.f32 %v2245, 1.442695
    %v2249 = vpow.pop %v2248
    %v2250 = vsub.f32 %v2247, 1.0
    %v2251 = vsub.f32 %v2249, 1.0
    %v2252 = vsel %vm2242, %v2234, %v2250
    %v2253 = vsel %vm2243, %v2239, %v2251
    %v2255 = vsel %vm125, %v2252, 0
    %v2258 = vsel %vm125, %v2253, 0
    %2260 = vmatprep.subr.mxu0 0.0
    %2261 = vmatpush1.msra.mxu0 %v447
    %2262 = vmatprep.subr.mxu0 0.0
    %2263 = vmatpush1.msra.mxu0 %v651
    %2264 = vmatprep.subr.mxu0 0.0
    %2265 = vmatpush1.msra.mxu0 0.0
    %2266 = vmatprep.subr.mxu0 0.0
    %2267 = vmatpush1.msra.mxu0 0.0
    %2268 = vmatprep.subr.mxu0 0.0
    %2269 = vmatpush1.msra.mxu0 0.0
    %2270 = vmatprep.subr.mxu0 0.0
    %2271 = vmatpush1.msra.mxu0 0.0
    %2272 = vmatprep.subr.mxu0 0.0
    %2273 = vmatpush1.msra.mxu0 0.0
    %2274 = vmatprep.subr.mxu0 0.0
    %2275 = vmatpush1.msra.mxu0 0.0
    %2276 = vmatprep.subr.mxu0 0.0
    %2277 = vmatpush1.msra.mxu0 0.0
    %2278 = vmatprep.subr.mxu0 0.0
    %2279 = vmatpush1.msra.mxu0 0.0
    %2280 = vmatprep.subr.mxu0 0.0
    %2281 = vmatpush1.msra.mxu0 0.0
    %2282 = vmatprep.subr.mxu0 0.0
    %2283 = vmatpush1.msra.mxu0 0.0
    %2284 = vmatprep.subr.mxu0 0.0
    %2285 = vmatpush1.msra.mxu0 0.0
    %2286 = vmatprep.subr.mxu0 0.0
    %2287 = vmatpush1.msra.mxu0 0.0
    %2288 = vmatprep.subr.mxu0 0.0
    %2289 = vmatpush1.msra.mxu0 0.0
    %2290 = vmatprep.subr.mxu0 0.0
    %2291 = vmatpush1.msra.mxu0 0.0
    %2292 = vmatprep.subr.mxu0 0.0
    %2293 = vmatpush1.msra.mxu0 0.0
    %2294 = vmatprep.subr.mxu0 0.0
    %2295 = vmatpush1.msra.mxu0 0.0
    %2296 = vmatprep.subr.mxu0 0.0
    %2297 = vmatpush1.msra.mxu0 0.0
    %2298 = vmatprep.subr.mxu0 0.0
    %2299 = vmatpush1.msra.mxu0 0.0
    %2300 = vmatprep.subr.mxu0 0.0
    %2301 = vmatpush1.msra.mxu0 0.0
    %2302 = vmatprep.subr.mxu0 0.0
    %2303 = vmatpush1.msra.mxu0 0.0
    %2304 = vmatprep.subr.mxu0 0.0
    %2305 = vmatpush1.msra.mxu0 0.0
    %2306 = vmatprep.subr.mxu0 0.0
    %2307 = vmatpush1.msra.mxu0 0.0
    %2308 = vmatprep.subr.mxu0 0.0
    %2309 = vmatpush1.msra.mxu0 0.0
    %2310 = vmatprep.subr.mxu0 0.0
    %2311 = vmatpush1.msra.mxu0 0.0
    %2312 = vmatprep.subr.mxu0 0.0
    %2313 = vmatpush1.msra.mxu0 0.0
    %2314 = vmatprep.subr.mxu0 0.0
    %2315 = vmatpush1.msra.mxu0 0.0
    %2316 = vmatprep.subr.mxu0 0.0
    %2317 = vmatpush1.msra.mxu0 0.0
    %2318 = vmatprep.subr.mxu0 0.0
    %2319 = vmatpush1.msra.mxu0 0.0
    %2320 = vmatprep.subr.mxu0 0.0
    %2321 = vmatpush1.msra.mxu0 0.0
    %2322 = vmatprep.subr.mxu0 0.0
    %2323 = vmatpush1.msra.mxu0 0.0
    %2324 = vmatprep.mubr.f32.mxu0 0.0
    %2325 = vmatmul.mubr.f32.gmra.mrb[0].mxu0 %v2255
    %v2326 = vpop.f32.mrb[0].mxu0
    %v2327 = vadd.f32 %v643, %v2326
    %v2328 = vpop.f32.mrb[0].mxu0
    %2329 = vmatprep.mubr.f32.mxu0 0.0
    %2330 = vmatmul.mubr.f32.gmra.mrb[0].mxu0 %v2258
    %v2331 = vpop.f32.mrb[0].mxu0
    %v2332 = vadd.f32 %v643, %v2331
    %v2333 = vpop.f32.mrb[0].mxu0
    %2334 = vdwg.mxu0
    %v2336 = vsel %vm546, %v2327, 0
    %v2339 = vsel %vm546, %v2332, 0
    %2341 = vmatprep.subr.mxu0 0.0
    %2342 = vmatpush1.msra.mxu0 %v450
    %2343 = vmatprep.subr.mxu0 0.0
    %2344 = vmatpush1.msra.mxu0 %v451
    %2345 = vmatprep.subr.mxu0 0.0
    %2346 = vmatpush1.msra.mxu0 %v452
    %2347 = vmatprep.subr.mxu0 0.0
    %2348 = vmatpush1.msra.mxu0 %v453
    %2349 = vmatprep.subr.mxu0 0.0
    %2350 = vmatpush1.msra.mxu0 0.0
    %2351 = vmatprep.subr.mxu0 0.0
    %2352 = vmatpush1.msra.mxu0 0.0
    %2353 = vmatprep.subr.mxu0 0.0
    %2354 = vmatpush1.msra.mxu0 0.0
    %2355 = vmatprep.subr.mxu0 0.0
    %2356 = vmatpush1.msra.mxu0 0.0
    %2357 = vmatprep.subr.mxu0 0.0
    %2358 = vmatpush1.msra.mxu0 0.0
    %2359 = vmatprep.subr.mxu0 0.0
    %2360 = vmatpush1.msra.mxu0 0.0
    %2361 = vmatprep.subr.mxu0 0.0
    %2362 = vmatpush1.msra.mxu0 0.0
    %2363 = vmatprep.subr.mxu0 0.0
    %2364 = vmatpush1.msra.mxu0 0.0
    %2365 = vmatprep.subr.mxu0 0.0
    %2366 = vmatpush1.msra.mxu0 0.0
    %2367 = vmatprep.subr.mxu0 0.0
    %2368 = vmatpush1.msra.mxu0 0.0
    %2369 = vmatprep.subr.mxu0 0.0
    %2370 = vmatpush1.msra.mxu0 0.0
    %2371 = vmatprep.subr.mxu0 0.0
    %2372 = vmatpush1.msra.mxu0 0.0
    %2373 = vmatprep.subr.mxu0 0.0
    %2374 = vmatpush1.msra.mxu0 0.0
    %2375 = vmatprep.subr.mxu0 0.0
    %2376 = vmatpush1.msra.mxu0 0.0
    %2377 = vmatprep.subr.mxu0 0.0
    %2378 = vmatpush1.msra.mxu0 0.0
    %2379 = vmatprep.subr.mxu0 0.0
    %2380 = vmatpush1.msra.mxu0 0.0
    %2381 = vmatprep.subr.mxu0 0.0
    %2382 = vmatpush1.msra.mxu0 0.0
    %2383 = vmatprep.subr.mxu0 0.0
    %2384 = vmatpush1.msra.mxu0 0.0
    %2385 = vmatprep.subr.mxu0 0.0
    %2386 = vmatpush1.msra.mxu0 0.0
    %2387 = vmatprep.subr.mxu0 0.0
    %2388 = vmatpush1.msra.mxu0 0.0
    %2389 = vmatprep.subr.mxu0 0.0
    %2390 = vmatpush1.msra.mxu0 0.0
    %2391 = vmatprep.subr.mxu0 0.0
    %2392 = vmatpush1.msra.mxu0 0.0
    %2393 = vmatprep.subr.mxu0 0.0
    %2394 = vmatpush1.msra.mxu0 0.0
    %2395 = vmatprep.subr.mxu0 0.0
    %2396 = vmatpush1.msra.mxu0 0.0
    %2397 = vmatprep.subr.mxu0 0.0
    %2398 = vmatpush1.msra.mxu0 0.0
    %2399 = vmatprep.subr.mxu0 0.0
    %2400 = vmatpush1.msra.mxu0 0.0
    %2401 = vmatprep.subr.mxu0 0.0
    %2402 = vmatpush1.msra.mxu0 0.0
    %2403 = vmatprep.subr.mxu0 0.0
    %2404 = vmatpush1.msra.mxu0 0.0
    %2405 = vmatprep.mubr.f32.mxu0 0.0
    %2406 = vmatmul.mubr.f32.gmra.mrb[0].mxu0 %v2336
    %v2407 = vpop.f32.mrb[0].mxu0
    %v2408 = vadd.f32 %v731, %v2407
    %v2409 = vpop.f32.mrb[0].mxu0
    %2410 = vmatprep.mubr.f32.mxu0 0.0
    %2411 = vmatmul.mubr.f32.gmra.mrb[0].mxu0 %v2339
    %v2412 = vpop.f32.mrb[0].mxu0
    %v2413 = vadd.f32 %v731, %v2412
    %v2414 = vpop.f32.mrb[0].mxu0
    %2415 = vdwg.mxu0
    %v2416 = vsub.f32 0.0, %v2408
    %v2417 = vsub.f32 0.0, %v2413
    %v2418 = vmul.f32 %v2416, 1.442695
    %v2419 = vpow.pop %v2418
    %v2420 = vmul.f32 %v2417, 1.442695
    %v2421 = vpow.pop %v2420
    %v2422 = vadd.f32 %v2419, 1.0
    %v2423 = vadd.f32 %v2421, 1.0
    %v2424 = vrcp.pop %v2422
    %v2425 = vmul.f32 1.0, %v2424
    %v2426 = vrcp.pop %v2423
    %v2427 = vmul.f32 1.0, %v2426
    %2430 = vrot.lane.b32.xlu0 %v2408, 96
    %v2431 = vpop.permute.xlu0 %2430
    %2432 = vrot.lane.b32.xlu0 %v2413, 96
    %v2433 = vpop.permute.xlu0 %2432
    %v2436 = vmul.f32 %v2425, %v2431
    %v2437 = vmul.f32 %v2427, %v2433
    %v2438 = vadd.f32 %v2153, %v2436
    %v2439 = vadd.f32 %v2158, %v2437
    %v2440 = vsel %vm546, %v2438, 0.0
    %2441 = vadd.xlane.f32.xlu0 %v2440
    %v2442 = vpop.xlane.xlu0 %2441
    %v2443 = vsel %vm546, %v2439, 0.0
    %2444 = vadd.xlane.f32.xlu0 %v2443
    %v2445 = vpop.xlane.xlu0 %2444
    %v2446 = vmul.f32 %v2442, %v843
    %v2447 = vmul.f32 %v2445, %v843
    %v2448 = vsub.f32 %v2438, %v2446
    %v2449 = vsub.f32 %v2439, %v2447
    %v2450 = vmul.f32 %v2448, %v2448
    %v2451 = vmul.f32 %v2449, %v2449
    %v2452 = vsel %vm546, %v2450, 0.0
    %2453 = vadd.xlane.f32.xlu0 %v2452
    %v2454 = vpop.xlane.xlu0 %2453
    %v2455 = vsel %vm546, %v2451, 0.0
    %2456 = vadd.xlane.f32.xlu0 %v2455
    %v2457 = vpop.xlane.xlu0 %2456
    %v2458 = vmul.f32 %v2454, %v843
    %v2459 = vmul.f32 %v2457, %v843
    %v2460 = vadd.f32 %v2458, 1e-05
    %v2461 = vadd.f32 %v2459, 1e-05
    %v2462 = vrsqrt.pop %v2460
    %v2463 = vrsqrt.pop %v2461
    %v2464 = vmul.f32 %v2448, %v2462
    %v2465 = vmul.f32 %v2449, %v2463
    %v2466 = vmul.f32 %v2464, %v867
    %v2467 = vmul.f32 %v2465, %v867
    %v2468 = vadd.f32 %v2466, %v873
    %v2469 = vadd.f32 %v2467, %v873
    %2470 = vset.pattern.permute.xlu0 36
    %2471 = vperm.xlu0 %2470, %v876
    %v2472 = vpop.permute.xlu0 %2471
    %2474 = vset.pattern.permute.xlu0 36
    %2475 = vperm.xlu0 %2474, %v877
    %v2476 = vpop.permute.xlu0 %2475
    %v2478 = vmul.f32 %v2472, %v2468
    %v2479 = vmul.f32 %v2476, %v2469
    %v2480 = vadd.f32 %v2082, %v2478
    %v2481 = vadd.f32 %v2083, %v2479
    %2482 = vst.msk [vmem:[#allocation2] sm:$0xff] %vm546, %v2480
    %2483 = vst.msk [vmem:[#allocation2 + $0x8] sm:$0xff] %vm546, %v2481
    // Predicated region
    $region14: #{tpu_custom_call.1} parent=1 // pred_check
      _
    $region15: #{tpu_custom_call.1} parent=1 // pred_check_branch
      %2485 = sbr.rel (0) target = $region17
    $region16: #{tpu_custom_call.1} parent=1 // pred_region
      %s2487 = ssub.s32 256, 256
      %2488 = vsyncadd [#allocation3], %s2487
      %s2489 = sshll.u32 [#allocation2], 4
      %s2490 = int_to_ptr.vmem [resolvable:$true] %s2489
      %2495 = dma.vmem_to_hbm [thread:$0]  %s2490, 256, %s3, [#allocation3], 128, 128, 8
    $region17: #{tpu_custom_call.1} parent=1 // pred_fallthru
      _
    // Predicated region
    $region18: #{tpu_custom_call.1} parent=1 // pred_check
      _
    $region19: #{tpu_custom_call.1} parent=1 // pred_check_branch
      %2497 = sbr.rel (0) target = $region21
    $region20: #{tpu_custom_call.1} parent=1 // pred_region
      %2498 = dma.done [#allocation3], 256
    $region21: #{tpu_custom_call.1} parent=1 // pred_fallthru
      _
    %2499 = vsyncpa [#allocation3], 1

</llo_original>
